<compile_context>
chip_gen: v7x
topology: tpu7x:2x2x1
jax: 0.10.0
libtpu: 0.0.40
codegen_flags: <defaults>
</compile_context>

<pallas_src>
import functools

import jax
import jax.numpy as jnp
from jax.experimental import pallas as pl
from jax.experimental.pallas import tpu as pltpu


def _round_up(x, m):
    return (x + m - 1) // m * m


def _make_conv_bn_relu_kernel(kh, kw, sh, sw, OH, OW, Cinp):
    """Implicit-GEMM conv + folded-BN bias + ReLU for one image / one Cout tile."""

    def kernel(x_ref, w_ref, b_ref, o_ref):
        # x_ref: (1, Hp, Wp, Cinp)  padded NHWC image
        # w_ref: (kh*kw, Cinp, TN)  BN-scale-folded weights for this Cout tile
        # b_ref: (1, TN)            folded BN bias
        # o_ref: (1, OH, OW, TN)
        x = x_ref[0]                                    # (Hp, Wp, Cinp)
        tn = o_ref.shape[-1]
        acc = None
        for di in range(kh):                            # unrolled k*k shifts
            for dj in range(kw):
                xs = jax.lax.slice(
                    x,
                    (di, dj, 0),
                    (di + sh * (OH - 1) + 1, dj + sw * (OW - 1) + 1, Cinp),
                    (sh, sw, 1))                        # (OH, OW, Cinp)
                xs = xs.reshape(OH * OW, Cinp)          # leading-dim merge (free)
                part = jnp.dot(xs, w_ref[di * kw + dj],
                               preferred_element_type=jnp.float32)
                acc = part if acc is None else acc + part
        y = acc + b_ref[...]                            # (OH*OW, TN)
        o_ref[...] = jnp.maximum(y, 0.0).reshape(1, OH, OW, tn).astype(o_ref.dtype)

    return kernel


@functools.partial(jax.jit,
                   static_argnames=("stride", "padding", "eps", "out_layout"))
def basic_conv2d(x, weight, gamma, beta, running_mean, running_var,
                 *, stride=1, padding=1, eps=1e-3, out_layout="NCHW"):
    """x: (N, Cin, H, W) f32; weight: (Cout, Cin, kh, kw) f32. Eval-mode BN."""
    N, Cin, H, W = x.shape
    Cout, _, kh, kw = weight.shape
    sh = sw = int(stride)
    ph = pw = int(padding)

    OH = (H + 2 * ph - kh) // sh + 1
    OW = (W + 2 * pw - kw) // sw + 1
    Hp, Wp = H + 2 * ph, W + 2 * pw
    kk = kh * kw

    # Channel padding: Cin only to a sublane multiple (8); Cout left (almost)
    # unpadded when small to avoid output write amplification, 128-aligned only
    # when it is already large.
    Cinp = _round_up(Cin, 8)
    Coutp = _round_up(Cout, 8) if Cout < 128 else _round_up(Cout, 128)
    if Coutp % 256 == 0:
        TN = 256                      # match 2x256^2 MXU width (v6e/v7x)
    elif Coutp % 128 == 0:
        TN = 128
    else:
        TN = Coutp

    # ---- glue: fold BN (eval mode) into weights / bias --------------------
    scale = gamma * jax.lax.rsqrt(running_var + eps)          # (Cout,)
    bias = beta - running_mean * scale                        # (Cout,)

    w = jnp.transpose(weight * scale[:, None, None, None], (2, 3, 1, 0))
    w = w.reshape(kk, Cin, Cout)
    w = jnp.pad(w, ((0, 0), (0, Cinp - Cin), (0, Coutp - Cout)))
    b = jnp.pad(bias, (0, Coutp - Cout)).reshape(1, Coutp)

    # Input NCHW -> pad channels+spatial -> NHWC. This is the only full-size
    # intermediate (same order of magnitude as the input, no 9x im2col blowup).
    xp = jnp.pad(x, ((0, 0), (0, Cinp - Cin), (ph, ph), (pw, pw)))
    x_nhwc = jnp.transpose(xp, (0, 2, 3, 1))                  # (N, Hp, Wp, Cinp)

    kernel = _make_conv_bn_relu_kernel(kh, kw, sh, sw, OH, OW, Cinp)

    n_ct = Coutp // TN
    grid = (N, n_ct)

    bytes_f32 = 4
    cost = pl.CostEstimate(
        flops=int(2 * N * OH * OW * kk * Cin * Cout),
        transcendentals=0,
        bytes_accessed=int(bytes_f32 * (x_nhwc.size + w.size + b.size
                                        + N * OH * OW * Coutp)),
    )

    # Explicit VMEM budget: double-buffered input/output blocks + resident
    # weight/bias + headroom; clamped so it also fits v7x's 64 MiB VMEM.
    vmem_need = bytes_f32 * (2 * Hp * Wp * Cinp + 2 * OH * OW * TN
                             + kk * Cinp * TN + 2 * TN) + (4 << 20)
    vmem_limit = int(min(max(vmem_need, 16 << 20), 64 << 20))

    out_nhwc = pl.pallas_call(
        kernel,
        out_shape=jax.ShapeDtypeStruct((N, OH, OW, Coutp), jnp.float32),
        grid_spec=pltpu.PrefetchScalarGridSpec(
            num_scalar_prefetch=0,
            grid=grid,
            in_specs=[
                pl.BlockSpec((1, Hp, Wp, Cinp), lambda n, j: (n, 0, 0, 0)),
                pl.BlockSpec((kk, Cinp, TN), lambda n, j: (0, 0, j)),
                pl.BlockSpec((1, TN), lambda n, j: (0, j)),
            ],
            out_specs=pl.BlockSpec((1, OH, OW, TN), lambda n, j: (n, 0, 0, j)),
        ),
        compiler_params=pltpu.CompilerParams(
            dimension_semantics=("parallel", "parallel"),
            vmem_limit_bytes=vmem_limit),
        cost_estimate=cost,
    )(x_nhwc, w, b)

    out_nhwc = out_nhwc[..., :Cout]
    if out_layout == "NHWC":
        return out_nhwc            # consumers staying in NHWC skip the transpose
    return jnp.transpose(out_nhwc, (0, 3, 1, 2))              # NCHW (module API)


def _reference(x, weight, gamma, beta, running_mean, running_var,
               stride=1, padding=1, eps=1e-3):
    y = jax.lax.conv_general_dilated(
        x, weight, window_strides=(stride, stride),
        padding=[(padding, padding), (padding, padding)],
        dimension_numbers=("NCHW", "OIHW", "NCHW"))
    s = (gamma / jnp.sqrt(running_var + eps)).reshape(1, -1, 1, 1)
    b = (beta - running_mean * gamma / jnp.sqrt(running_var + eps)).reshape(1, -1, 1, 1)
    return jnp.maximum(y * s + b, 0.0)


if __name__ == "__main__":
    key = jax.random.PRNGKey(0)
    k0, k1, k2, k3, k4, k5 = jax.random.split(key, 6)

    N, Cin, H, W = 2, 4, 16, 16
    Cout, ksz = 8, 3

    x = jax.random.normal(k0, (N, Cin, H, W), dtype=jnp.float32)
    weight = jax.random.normal(k1, (Cout, Cin, ksz, ksz), dtype=jnp.float32) * 0.1
    gamma = jax.random.uniform(k2, (Cout,), minval=0.5, maxval=1.5, dtype=jnp.float32)
    beta = jax.random.normal(k3, (Cout,), dtype=jnp.float32) * 0.1
    running_mean = jax.random.normal(k4, (Cout,), dtype=jnp.float32) * 0.1
    running_var = jax.random.uniform(k5, (Cout,), minval=0.5, maxval=1.5,
                                     dtype=jnp.float32)

    out = basic_conv2d(x, weight, gamma, beta, running_mean, running_var,
                       stride=1, padding=1, eps=1e-3)
    out = jax.block_until_ready(out)

    ref = _reference(x, weight, gamma, beta, running_mean, running_var)
    assert out.shape == (N, Cout, H, W), out.shape
    assert jnp.allclose(out, ref, atol=1e-4, rtol=1e-4), \
        float(jnp.max(jnp.abs(out - ref)))

    print("KERNEL_OK")
</pallas_src>

<mosaic_0001>
module attributes {stable_mosaic.version = 11 : i64} {
  func.func @kernel(%arg0: i32, %arg1: i32, %arg2: memref<1x18x18x8xf32, #tpu.memory_space<vmem>>, %arg3: memref<9x8x8xf32, #tpu.memory_space<vmem>>, %arg4: memref<1x8xf32, #tpu.memory_space<vmem>>, %arg5: memref<1x16x16x8xf32, #tpu.memory_space<vmem>>) attributes {dimension_semantics = [#tpu.dimension_semantics<parallel>, #tpu.dimension_semantics<parallel>], iteration_bounds = array<i64: 2, 1>, scalar_prefetch = 0 : i64, scratch_operands = 0 : i64, tpu.core_type = #tpu.core_type<tc>, window_params = [{transform_indices = @transform_0, window_bounds = array<i64: 1, 18, 18, 8>}, {transform_indices = @transform_1, window_bounds = array<i64: 9, 8, 8>}, {transform_indices = @transform_2, window_bounds = array<i64: 1, 8>}, {transform_indices = @transform_3, window_bounds = array<i64: 1, 16, 16, 8>}]} {
    %c0 = arith.constant 0 : index
    %c0_0 = arith.constant 0 : index
    %c0_1 = arith.constant 0 : index
    %c0_2 = arith.constant 0 : index
    %0 = vector.load %arg2[%c0, %c0_0, %c0_1, %c0_2] : memref<1x18x18x8xf32, #tpu.memory_space<vmem>>, vector<1x18x18x8xf32>
    %1 = vector.shape_cast %0 : vector<1x18x18x8xf32> to vector<18x18x8xf32>
    %2 = vector.extract_strided_slice %1 {offsets = [0, 0, 0], sizes = [16, 16, 8], strides = [1, 1, 1]} : vector<18x18x8xf32> to vector<16x16x8xf32>
    %3 = vector.shape_cast %2 : vector<16x16x8xf32> to vector<256x8xf32>
    %c0_3 = arith.constant 0 : index
    %c0_4 = arith.constant 0 : index
    %c0_5 = arith.constant 0 : index
    %4 = vector.load %arg3[%c0_3, %c0_4, %c0_5] : memref<9x8x8xf32, #tpu.memory_space<vmem>>, vector<1x8x8xf32>
    %5 = vector.shape_cast %4 : vector<1x8x8xf32> to vector<8x8xf32>
    %cst = arith.constant dense<0.000000e+00> : vector<256x8xf32>
    %6 = tpu.matmul %3, %5, %cst {dimension_numbers = #tpu.dot_dimension_numbers<[1], [0], [0], [1], [0, 0, 1, 1], [], []>} : vector<256x8xf32>, vector<8x8xf32>, vector<256x8xf32> -> vector<256x8xf32>
    %7 = vector.extract_strided_slice %1 {offsets = [0, 1, 0], sizes = [16, 16, 8], strides = [1, 1, 1]} : vector<18x18x8xf32> to vector<16x16x8xf32>
    %8 = vector.shape_cast %7 : vector<16x16x8xf32> to vector<256x8xf32>
    %c1 = arith.constant 1 : index
    %c0_6 = arith.constant 0 : index
    %c0_7 = arith.constant 0 : index
    %9 = vector.load %arg3[%c1, %c0_6, %c0_7] : memref<9x8x8xf32, #tpu.memory_space<vmem>>, vector<1x8x8xf32>
    %10 = vector.shape_cast %9 : vector<1x8x8xf32> to vector<8x8xf32>
    %cst_8 = arith.constant dense<0.000000e+00> : vector<256x8xf32>
    %11 = tpu.matmul %8, %10, %cst_8 {dimension_numbers = #tpu.dot_dimension_numbers<[1], [0], [0], [1], [0, 0, 1, 1], [], []>} : vector<256x8xf32>, vector<8x8xf32>, vector<256x8xf32> -> vector<256x8xf32>
    %12 = arith.addf %6, %11 : vector<256x8xf32>
    %13 = vector.extract_strided_slice %1 {offsets = [0, 2, 0], sizes = [16, 16, 8], strides = [1, 1, 1]} : vector<18x18x8xf32> to vector<16x16x8xf32>
    %14 = vector.shape_cast %13 : vector<16x16x8xf32> to vector<256x8xf32>
    %c2 = arith.constant 2 : index
    %c0_9 = arith.constant 0 : index
    %c0_10 = arith.constant 0 : index
    %15 = vector.load %arg3[%c2, %c0_9, %c0_10] : memref<9x8x8xf32, #tpu.memory_space<vmem>>, vector<1x8x8xf32>
    %16 = vector.shape_cast %15 : vector<1x8x8xf32> to vector<8x8xf32>
    %cst_11 = arith.constant dense<0.000000e+00> : vector<256x8xf32>
    %17 = tpu.matmul %14, %16, %cst_11 {dimension_numbers = #tpu.dot_dimension_numbers<[1], [0], [0], [1], [0, 0, 1, 1], [], []>} : vector<256x8xf32>, vector<8x8xf32>, vector<256x8xf32> -> vector<256x8xf32>
    %18 = arith.addf %12, %17 : vector<256x8xf32>
    %19 = vector.extract_strided_slice %1 {offsets = [1, 0, 0], sizes = [16, 16, 8], strides = [1, 1, 1]} : vector<18x18x8xf32> to vector<16x16x8xf32>
    %20 = vector.shape_cast %19 : vector<16x16x8xf32> to vector<256x8xf32>
    %c3 = arith.constant 3 : index
    %c0_12 = arith.constant 0 : index
    %c0_13 = arith.constant 0 : index
    %21 = vector.load %arg3[%c3, %c0_12, %c0_13] : memref<9x8x8xf32, #tpu.memory_space<vmem>>, vector<1x8x8xf32>
    %22 = vector.shape_cast %21 : vector<1x8x8xf32> to vector<8x8xf32>
    %cst_14 = arith.constant dense<0.000000e+00> : vector<256x8xf32>
    %23 = tpu.matmul %20, %22, %cst_14 {dimension_numbers = #tpu.dot_dimension_numbers<[1], [0], [0], [1], [0, 0, 1, 1], [], []>} : vector<256x8xf32>, vector<8x8xf32>, vector<256x8xf32> -> vector<256x8xf32>
    %24 = arith.addf %18, %23 : vector<256x8xf32>
    %25 = vector.extract_strided_slice %1 {offsets = [1, 1, 0], sizes = [16, 16, 8], strides = [1, 1, 1]} : vector<18x18x8xf32> to vector<16x16x8xf32>
    %26 = vector.shape_cast %25 : vector<16x16x8xf32> to vector<256x8xf32>
    %c4 = arith.constant 4 : index
    %c0_15 = arith.constant 0 : index
    %c0_16 = arith.constant 0 : index
    %27 = vector.load %arg3[%c4, %c0_15, %c0_16] : memref<9x8x8xf32, #tpu.memory_space<vmem>>, vector<1x8x8xf32>
    %28 = vector.shape_cast %27 : vector<1x8x8xf32> to vector<8x8xf32>
    %cst_17 = arith.constant dense<0.000000e+00> : vector<256x8xf32>
    %29 = tpu.matmul %26, %28, %cst_17 {dimension_numbers = #tpu.dot_dimension_numbers<[1], [0], [0], [1], [0, 0, 1, 1], [], []>} : vector<256x8xf32>, vector<8x8xf32>, vector<256x8xf32> -> vector<256x8xf32>
    %30 = arith.addf %24, %29 : vector<256x8xf32>
    %31 = vector.extract_strided_slice %1 {offsets = [1, 2, 0], sizes = [16, 16, 8], strides = [1, 1, 1]} : vector<18x18x8xf32> to vector<16x16x8xf32>
    %32 = vector.shape_cast %31 : vector<16x16x8xf32> to vector<256x8xf32>
    %c5 = arith.constant 5 : index
    %c0_18 = arith.constant 0 : index
    %c0_19 = arith.constant 0 : index
    %33 = vector.load %arg3[%c5, %c0_18, %c0_19] : memref<9x8x8xf32, #tpu.memory_space<vmem>>, vector<1x8x8xf32>
    %34 = vector.shape_cast %33 : vector<1x8x8xf32> to vector<8x8xf32>
    %cst_20 = arith.constant dense<0.000000e+00> : vector<256x8xf32>
    %35 = tpu.matmul %32, %34, %cst_20 {dimension_numbers = #tpu.dot_dimension_numbers<[1], [0], [0], [1], [0, 0, 1, 1], [], []>} : vector<256x8xf32>, vector<8x8xf32>, vector<256x8xf32> -> vector<256x8xf32>
    %36 = arith.addf %30, %35 : vector<256x8xf32>
    %37 = vector.extract_strided_slice %1 {offsets = [2, 0, 0], sizes = [16, 16, 8], strides = [1, 1, 1]} : vector<18x18x8xf32> to vector<16x16x8xf32>
    %38 = vector.shape_cast %37 : vector<16x16x8xf32> to vector<256x8xf32>
    %c6 = arith.constant 6 : index
    %c0_21 = arith.constant 0 : index
    %c0_22 = arith.constant 0 : index
    %39 = vector.load %arg3[%c6, %c0_21, %c0_22] : memref<9x8x8xf32, #tpu.memory_space<vmem>>, vector<1x8x8xf32>
    %40 = vector.shape_cast %39 : vector<1x8x8xf32> to vector<8x8xf32>
    %cst_23 = arith.constant dense<0.000000e+00> : vector<256x8xf32>
    %41 = tpu.matmul %38, %40, %cst_23 {dimension_numbers = #tpu.dot_dimension_numbers<[1], [0], [0], [1], [0, 0, 1, 1], [], []>} : vector<256x8xf32>, vector<8x8xf32>, vector<256x8xf32> -> vector<256x8xf32>
    %42 = arith.addf %36, %41 : vector<256x8xf32>
    %43 = vector.extract_strided_slice %1 {offsets = [2, 1, 0], sizes = [16, 16, 8], strides = [1, 1, 1]} : vector<18x18x8xf32> to vector<16x16x8xf32>
    %44 = vector.shape_cast %43 : vector<16x16x8xf32> to vector<256x8xf32>
    %c7 = arith.constant 7 : index
    %c0_24 = arith.constant 0 : index
    %c0_25 = arith.constant 0 : index
    %45 = vector.load %arg3[%c7, %c0_24, %c0_25] : memref<9x8x8xf32, #tpu.memory_space<vmem>>, vector<1x8x8xf32>
    %46 = vector.shape_cast %45 : vector<1x8x8xf32> to vector<8x8xf32>
    %cst_26 = arith.constant dense<0.000000e+00> : vector<256x8xf32>
    %47 = tpu.matmul %44, %46, %cst_26 {dimension_numbers = #tpu.dot_dimension_numbers<[1], [0], [0], [1], [0, 0, 1, 1], [], []>} : vector<256x8xf32>, vector<8x8xf32>, vector<256x8xf32> -> vector<256x8xf32>
    %48 = arith.addf %42, %47 : vector<256x8xf32>
    %49 = vector.extract_strided_slice %1 {offsets = [2, 2, 0], sizes = [16, 16, 8], strides = [1, 1, 1]} : vector<18x18x8xf32> to vector<16x16x8xf32>
    %50 = vector.shape_cast %49 : vector<16x16x8xf32> to vector<256x8xf32>
    %c8 = arith.constant 8 : index
    %c0_27 = arith.constant 0 : index
    %c0_28 = arith.constant 0 : index
    %51 = vector.load %arg3[%c8, %c0_27, %c0_28] : memref<9x8x8xf32, #tpu.memory_space<vmem>>, vector<1x8x8xf32>
    %52 = vector.shape_cast %51 : vector<1x8x8xf32> to vector<8x8xf32>
    %cst_29 = arith.constant dense<0.000000e+00> : vector<256x8xf32>
    %53 = tpu.matmul %50, %52, %cst_29 {dimension_numbers = #tpu.dot_dimension_numbers<[1], [0], [0], [1], [0, 0, 1, 1], [], []>} : vector<256x8xf32>, vector<8x8xf32>, vector<256x8xf32> -> vector<256x8xf32>
    %54 = arith.addf %48, %53 : vector<256x8xf32>
    %c0_30 = arith.constant 0 : index
    %c0_31 = arith.constant 0 : index
    %55 = vector.load %arg4[%c0_30, %c0_31] : memref<1x8xf32, #tpu.memory_space<vmem>>, vector<1x8xf32>
    %56 = vector.broadcast %55 : vector<1x8xf32> to vector<256x8xf32>
    %57 = arith.addf %54, %56 : vector<256x8xf32>
    %cst_32 = arith.constant 0.000000e+00 : f32
    %58 = vector.broadcast %cst_32 : f32 to vector<256x8xf32>
    %59 = arith.maximumf %57, %58 : vector<256x8xf32>
    %60 = vector.shape_cast %59 : vector<256x8xf32> to vector<1x16x16x8xf32>
    %c0_33 = arith.constant 0 : index
    %c0_34 = arith.constant 0 : index
    %c0_35 = arith.constant 0 : index
    %c0_36 = arith.constant 0 : index
    %61 = vector.load %arg5[%c0_33, %c0_34, %c0_35, %c0_36] : memref<1x16x16x8xf32, #tpu.memory_space<vmem>>, vector<1x16x16x8xf32>
    tpu.vector_store %arg5[%c0_33, %c0_34, %c0_35, %c0_36], %60 {strides = array<i32>} : memref<1x16x16x8xf32, #tpu.memory_space<vmem>>, vector<1x16x16x8xf32>,
    return
  }
  func.func @transform_0(%arg0: i32, %arg1: i32) -> (i32, i32, i32, i32) {
    %c0_i32 = arith.constant 0 : i32
    %c0_i32_0 = arith.constant 0 : i32
    %c0_i32_1 = arith.constant 0 : i32
    %c0_i32_2 = arith.constant 0 : i32
    return %arg0, %c0_i32, %c0_i32_0, %c0_i32_1 : i32, i32, i32, i32
  }
  func.func @transform_1(%arg0: i32, %arg1: i32) -> (i32, i32, i32) {
    %c0_i32 = arith.constant 0 : i32
    %c0_i32_0 = arith.constant 0 : i32
    %c0_i32_1 = arith.constant 0 : i32
    return %c0_i32, %c0_i32_0, %arg1 : i32, i32, i32
  }
  func.func @transform_2(%arg0: i32, %arg1: i32) -> (i32, i32) {
    %c0_i32 = arith.constant 0 : i32
    %c0_i32_0 = arith.constant 0 : i32
    return %c0_i32, %arg1 : i32, i32
  }
  func.func @transform_3(%arg0: i32, %arg1: i32) -> (i32, i32, i32, i32) {
    %c0_i32 = arith.constant 0 : i32
    %c0_i32_0 = arith.constant 0 : i32
    %c0_i32_1 = arith.constant 0 : i32
    return %arg0, %c0_i32, %c0_i32_0, %arg1 : i32, i32, i32, i32
  }
}

</mosaic_0001>

<llo_original>
// kernel: basic_conv2d.1
$region0: #{basic_conv2d.1}
  #allocation0 [shape = 'u32[]', space=smem, size = 0x4, offset = 0x4, fixed_abs, tag = 'smem constant byte address 0x4 - core index']
  #allocation1 [shape = 'u32[144,128]{1,0:T(1,128)}', space=vmem, size = 0x12000, scoped, tag = 'internal scratch']
  %s0 = inlined_call_operand.vmem [shape: f32[2,18,18,8], index: 0, kind: input, shape index: {}]
  %s1 = inlined_call_operand.vmem [shape: f32[9,8,8], index: 1, kind: input, shape index: {}]
  %s2 = inlined_call_operand.vmem [shape: f32[1,8], index: 2, kind: input, shape index: {}]
  %s3 = inlined_call_operand.vmem [shape: f32[2,16,16,8], index: 3, kind: output, shape index: {}]
  %s4 = sld [smem:[#allocation0]]
  $region45: #{basic_conv2d.1} parent=0
    _
  %s6 = ssub.s32 1, %s4
  %s7 = scalar_select 0, %s6, %s4
  loop: start=0, step=1, limit=4
  $region2: #{basic_conv2d.1} parent=0 // loop_pre_header
    _
  $region3: #{basic_conv2d.1} parent=0 // loop_header
    %s9 = sphi 0, %s13
    %p10 = scmp.ge.s32.totalorder %s9, 4
    %s16 = sphi 0, %s28
    %s17 = sphi 0, %s24
    %s18 = sphi 0, %s16
    %s19 = sphi 0, %s17
    %s20 = sphi 0, %s18
    %s21 = sphi 0, %s19
    %s31 = sphi 0, %s33
    %s34 = sphi 0, %s31
    %s35 = sphi 0, %s34
    %s51 = sphi 0, %s35
    %s57 = sphi 0, %s59
    %s60 = sphi 0, %s57
    %s61 = sphi 0, %s60
    %s77 = sphi 0, %s61
    %s83 = sphi 0, %s85
    %s86 = sphi 0, %s83
    %s87 = sphi 0, %s86
    %s103 = sphi 0, %s87
    %s111 = sphi 0, %s113
    %s114 = sphi 0, %s111
    %s115 = sphi 0, %s114
    %s131 = sphi 0, %s115
  $region4: #{basic_conv2d.1} parent=0 // loop_header_branch
    %12 = sbr.rel (%p10) target = $region8
  $region5: #{basic_conv2d.1} parent=0 // loop_body
    %s14 = ssub.s32 %s9, 1
    %s15 = ssub.s32 %s9, 2
    %s22 = sadd.s32 1, %s17
    %p23 = scmp.ge.s32.totalorder %s22, 1
    %s24 = scalar_select %p23, 0, %s22
    %s25 = sadd.s32 1, %s16
    %s26 = scalar_select %p23, %s25, %s16
    %p27 = scmp.ge.s32.totalorder %s26, 2
    %s28 = scalar_select %p27, 0, %s26
    %s29 = ssub.s32 %s16, %s28
    %p30 = scmp.eq.s32.totalorder %s29, 0
    %s32 = sadd.s32 %s31, 1
    %s33 = scalar_select %p30, %s31, %s32
    %p36 = pneg %p30
    %p37 = scmp.eq.s32.totalorder %s9, 1
    %p38 = por %p36, %p37
    %p39 = scmp.ne.s32.totalorder %s31, %s34
    %p40 = scmp.eq.s32.totalorder %s9, 0
    %p41 = por %p39, %p40
    %p42 = scmp.ne.s32.totalorder %s31, %s34
    %p43 = scmp.eq.s32.totalorder %s14, 1
    %p44 = por %p42, %p43
    %p45 = scmp.ne.s32.totalorder %s34, %s35
    %p46 = scmp.eq.s32.totalorder %s14, 0
    %p47 = por %p45, %p46
    %p48 = scmp.ne.s32.totalorder %s34, %s35
    %p49 = scmp.eq.s32.totalorder %s15, 1
    %p50 = por %p48, %p49
    %p52 = scmp.ne.s32.totalorder %s35, %s51
    %p53 = scmp.eq.s32.totalorder %s15, 0
    %p54 = por %p52, %p53
    %s55 = ssub.s32 %s17, %s24
    %p56 = scmp.eq.s32.totalorder %s55, 0
    %s58 = sadd.s32 %s57, 1
    %s59 = scalar_select %p56, %s57, %s58
    %p62 = pneg %p56
    %p63 = scmp.eq.s32.totalorder %s9, 1
    %p64 = por %p62, %p63
    %p65 = scmp.ne.s32.totalorder %s57, %s60
    %p66 = scmp.eq.s32.totalorder %s9, 0
    %p67 = por %p65, %p66
    %p68 = scmp.ne.s32.totalorder %s57, %s60
    %p69 = scmp.eq.s32.totalorder %s14, 1
    %p70 = por %p68, %p69
    %p71 = scmp.ne.s32.totalorder %s60, %s61
    %p72 = scmp.eq.s32.totalorder %s14, 0
    %p73 = por %p71, %p72
    %p74 = scmp.ne.s32.totalorder %s60, %s61
    %p75 = scmp.eq.s32.totalorder %s15, 1
    %p76 = por %p74, %p75
    %p78 = scmp.ne.s32.totalorder %s61, %s77
    %p79 = scmp.eq.s32.totalorder %s15, 0
    %p80 = por %p78, %p79
    %s81 = ssub.s32 %s17, %s24
    %p82 = scmp.eq.s32.totalorder %s81, 0
    %s84 = sadd.s32 %s83, 1
    %s85 = scalar_select %p82, %s83, %s84
    %p88 = pneg %p82
    %p89 = scmp.eq.s32.totalorder %s9, 1
    %p90 = por %p88, %p89
    %p91 = scmp.ne.s32.totalorder %s83, %s86
    %p92 = scmp.eq.s32.totalorder %s9, 0
    %p93 = por %p91, %p92
    %p94 = scmp.ne.s32.totalorder %s83, %s86
    %p95 = scmp.eq.s32.totalorder %s14, 1
    %p96 = por %p94, %p95
    %p97 = scmp.ne.s32.totalorder %s86, %s87
    %p98 = scmp.eq.s32.totalorder %s14, 0
    %p99 = por %p97, %p98
    %p100 = scmp.ne.s32.totalorder %s86, %s87
    %p101 = scmp.eq.s32.totalorder %s15, 1
    %p102 = por %p100, %p101
    %p104 = scmp.ne.s32.totalorder %s87, %s103
    %p105 = scmp.eq.s32.totalorder %s15, 0
    %p106 = por %p104, %p105
    %s107 = ssub.s32 %s16, %s28
    %s108 = ssub.s32 %s17, %s24
    %s109 = sor.u32 %s107, %s108
    %p110 = scmp.eq.s32.totalorder %s109, 0
    %s112 = sadd.s32 %s111, 1
    %s113 = scalar_select %p110, %s111, %s112
    %p116 = pneg %p110
    %p117 = scmp.eq.s32.totalorder %s9, 1
    %p118 = por %p116, %p117
    %p119 = scmp.ne.s32.totalorder %s111, %s114
    %p120 = scmp.eq.s32.totalorder %s9, 0
    %p121 = por %p119, %p120
    %p122 = scmp.ne.s32.totalorder %s111, %s114
    %p123 = scmp.eq.s32.totalorder %s14, 1
    %p124 = por %p122, %p123
    %p125 = scmp.ne.s32.totalorder %s114, %s115
    %p126 = scmp.eq.s32.totalorder %s14, 0
    %p127 = por %p125, %p126
    %p128 = scmp.ne.s32.totalorder %s114, %s115
    %p129 = scmp.eq.s32.totalorder %s15, 1
    %p130 = por %p128, %p129
    %p132 = scmp.ne.s32.totalorder %s115, %s131
    %p133 = scmp.eq.s32.totalorder %s15, 0
    %p134 = por %p132, %p133
    %p135 = scmp.le.s32.totalorder 1, %s9
    %p136 = scmp.lt.s32.totalorder %s9, 3
    %p137 = pnand %p135, %p136
    %p138 = pneg %p137
    // Predicated region
    $region9: #{basic_conv2d.1} parent=5 // pred_check
      _
    $region10: #{basic_conv2d.1} parent=5 // pred_check_branch
      %140 = sbr.rel (%p137) target = $region12
    $region11: #{basic_conv2d.1} parent=5 // pred_region
      %s141 = ssub.s32 %s9, 1
      // Predicated region
      $region13: #{basic_conv2d.1} parent=11 // pred_check
        %p142 = pneg %p73
      $region14: #{basic_conv2d.1} parent=11 // pred_check_branch
        %144 = sbr.rel (%p142) target = $region16
      $region15: #{basic_conv2d.1} parent=11 // pred_region
        %p145 = scmp.lt.s32.totalorder %s19, 0
        %s146 = scalar_select %p145, %s19, 0
        %s147 = smul.addr %s146, 8
        %s148 = scalar_lea.vmem %s1, %s147
      $region16: #{basic_conv2d.1} parent=11 // pred_fallthru
        _
      // Predicated region
      $region17: #{basic_conv2d.1} parent=11 // pred_check
        %p149 = pneg %p99
      $region18: #{basic_conv2d.1} parent=11 // pred_check_branch
        %151 = sbr.rel (%p149) target = $region20
      $region19: #{basic_conv2d.1} parent=11 // pred_region
        %p152 = scmp.lt.s32.totalorder %s19, 0
        %s153 = scalar_select %p152, %s19, 0
        %s154 = scalar_lea.vmem %s2, %s153
      $region20: #{basic_conv2d.1} parent=11 // pred_fallthru
        _
    $region12: #{basic_conv2d.1} parent=5 // pred_fallthru
      _
    %p155 = scmp.lt.s32.totalorder %s9, 2
    // Predicated region
    $region21: #{basic_conv2d.1} parent=5 // pred_check
      %p156 = pneg %p155
    $region22: #{basic_conv2d.1} parent=5 // pred_check_branch
      %158 = sbr.rel (%p156) target = $region24
    $region23: #{basic_conv2d.1} parent=5 // pred_region
      // Predicated region
      $region25: #{basic_conv2d.1} parent=23 // pred_check
        %p159 = pneg %p41
      $region26: #{basic_conv2d.1} parent=23 // pred_check_branch
        %161 = sbr.rel (%p159) target = $region28
      $region27: #{basic_conv2d.1} parent=23 // pred_region
        %p162 = scmp.lt.s32.totalorder %s16, 1
        %s163 = scalar_select %p162, %s16, 1
        %s164 = smul.addr %s163, 54
        %s165 = smul.addr %s164, 8
        %s166 = scalar_lea.vmem %s0, %s165
      $region28: #{basic_conv2d.1} parent=23 // pred_fallthru
        _
    $region24: #{basic_conv2d.1} parent=5 // pred_fallthru
      _
    %p167 = scmp.le.s32.totalorder 1, %s9
    %p168 = scmp.lt.s32.totalorder %s9, 3
    %p169 = pnand %p167, %p168
    %p170 = pneg %p169
    // Predicated region
    $region29: #{basic_conv2d.1} parent=5 // pred_check
      _
    $region30: #{basic_conv2d.1} parent=5 // pred_check_branch
      %172 = sbr.rel (%p169) target = $region32
    $region31: #{basic_conv2d.1} parent=5 // pred_region
      %s173 = ssub.s32 %s9, 1
      %p174 = scmp.lt.s32.totalorder %s18, 1
      %s175 = scalar_select %p174, %s18, 1
      %s176 = smul.addr %s175, 54
      %s177 = smul.addr %s176, 8
      %s178 = scalar_lea.vmem %s0, %s177
      %p179 = pneg %p47
      %p180 = pneg %p44
      %p181 = scmp.lt.s32.totalorder %s19, 0
      %s182 = scalar_select %p181, %s19, 0
      %s183 = smul.addr %s182, 8
      %s184 = scalar_lea.vmem %s1, %s183
      %p185 = pneg %p73
      %p186 = pneg %p70
      %p187 = scmp.lt.s32.totalorder %s19, 0
      %s188 = scalar_select %p187, %s19, 0
      %s189 = scalar_lea.vmem %s2, %s188
      %p190 = pneg %p99
      %p191 = pneg %p96
      %p192 = pneg %p127
      %p193 = pneg %p124
      %p194 = scmp.lt.s32.totalorder %s18, 1
      %s195 = scalar_select %p194, %s18, 1
      %p196 = scmp.lt.s32.totalorder %s19, 0
      %s197 = scalar_select %p196, %s19, 0
      %s198 = smul.addr %s195, 32
      %s199 = sadd.s32 %s197, %s198
      %s200 = smul.addr %s199, 8
      %s201 = scalar_lea.vmem %s3, %s200
      %p202 = scmp.lt.s32.totalorder %s18, 1
      %s203 = scalar_select %p202, %s18, 1
      %s204 = smul.addr %s203, 54
      %s205 = smul.addr %s204, 8
      %s206 = scalar_lea.vmem %s0, %s205
      %p207 = scmp.lt.s32.totalorder %s19, 0
      %s208 = scalar_select %p207, %s19, 0
      %s209 = smul.addr %s208, 8
      %s210 = scalar_lea.vmem %s1, %s209
      %p211 = scmp.lt.s32.totalorder %s19, 0
      %s212 = scalar_select %p211, %s19, 0
      %s213 = scalar_lea.vmem %s2, %s212
      %p214 = scmp.lt.s32.totalorder %s18, 1
      %s215 = scalar_select %p214, %s18, 1
      %p216 = scmp.lt.s32.totalorder %s19, 0
      %s217 = scalar_select %p216, %s19, 0
      %s218 = smul.addr %s215, 32
      %s219 = sadd.s32 %s217, %s218
      %s220 = smul.addr %s219, 8
      %s221 = scalar_lea.vmem %s3, %s220
      %v222 = vld [vmem:[%s206] sm:$0xff]
      %v223 = vld [vmem:[%s206 + $0x8] sm:$0xff]
      %v224 = vld [vmem:[%s206 + $0x10] sm:$0x3]
      %v225 = vld [vmem:[%s206 + $0x18] sm:$0xff]
      %v226 = vld [vmem:[%s206 + $0x20] sm:$0xff]
      %v227 = vld [vmem:[%s206 + $0x28] sm:$0x3]
      %v228 = vld [vmem:[%s206 + $0x30] sm:$0xff]
      %v229 = vld [vmem:[%s206 + $0x38] sm:$0xff]
      %v230 = vld [vmem:[%s206 + $0x40] sm:$0x3]
      %v231 = vld [vmem:[%s206 + $0x48] sm:$0xff]
      %v232 = vld [vmem:[%s206 + $0x50] sm:$0xff]
      %v233 = vld [vmem:[%s206 + $0x58] sm:$0x3]
      %v234 = vld [vmem:[%s206 + $0x60] sm:$0xff]
      %v235 = vld [vmem:[%s206 + $0x68] sm:$0xff]
      %v236 = vld [vmem:[%s206 + $0x70] sm:$0x3]
      %v237 = vld [vmem:[%s206 + $0x78] sm:$0xff]
      %v238 = vld [vmem:[%s206 + $0x80] sm:$0xff]
      %v239 = vld [vmem:[%s206 + $0x88] sm:$0x3]
      %v240 = vld [vmem:[%s206 + $0x90] sm:$0xff]
      %v241 = vld [vmem:[%s206 + $0x98] sm:$0xff]
      %v242 = vld [vmem:[%s206 + $0xa0] sm:$0x3]
      %v243 = vld [vmem:[%s206 + $0xa8] sm:$0xff]
      %v244 = vld [vmem:[%s206 + $0xb0] sm:$0xff]
      %v245 = vld [vmem:[%s206 + $0xb8] sm:$0x3]
      %v246 = vld [vmem:[%s206 + $0xc0] sm:$0xff]
      %v247 = vld [vmem:[%s206 + $0xc8] sm:$0xff]
      %v248 = vld [vmem:[%s206 + $0xd0] sm:$0x3]
      %v249 = vld [vmem:[%s206 + $0xd8] sm:$0xff]
      %v250 = vld [vmem:[%s206 + $0xe0] sm:$0xff]
      %v251 = vld [vmem:[%s206 + $0xe8] sm:$0x3]
      %v252 = vld [vmem:[%s206 + $0xf0] sm:$0xff]
      %v253 = vld [vmem:[%s206 + $0xf8] sm:$0xff]
      %v254 = vld [vmem:[%s206 + $0x100] sm:$0x3]
      %v255 = vld [vmem:[%s206 + $0x108] sm:$0xff]
      %v256 = vld [vmem:[%s206 + $0x110] sm:$0xff]
      %v257 = vld [vmem:[%s206 + $0x118] sm:$0x3]
      %v258 = vld [vmem:[%s206 + $0x120] sm:$0xff]
      %v259 = vld [vmem:[%s206 + $0x128] sm:$0xff]
      %v260 = vld [vmem:[%s206 + $0x130] sm:$0x3]
      %v261 = vld [vmem:[%s206 + $0x138] sm:$0xff]
      %v262 = vld [vmem:[%s206 + $0x140] sm:$0xff]
      %v263 = vld [vmem:[%s206 + $0x148] sm:$0x3]
      %v264 = vld [vmem:[%s206 + $0x150] sm:$0xff]
      %v265 = vld [vmem:[%s206 + $0x158] sm:$0xff]
      %v266 = vld [vmem:[%s206 + $0x160] sm:$0x3]
      %v267 = vld [vmem:[%s206 + $0x168] sm:$0xff]
      %v268 = vld [vmem:[%s206 + $0x170] sm:$0xff]
      %v269 = vld [vmem:[%s206 + $0x178] sm:$0x3]
      %v270 = vld [vmem:[%s206 + $0x180] sm:$0xff]
      %v271 = vld [vmem:[%s206 + $0x188] sm:$0xff]
      %v272 = vld [vmem:[%s206 + $0x190] sm:$0x3]
      %v273 = vld [vmem:[%s206 + $0x198] sm:$0xff]
      %v274 = vld [vmem:[%s206 + $0x1a0] sm:$0xff]
      %v275 = vld [vmem:[%s206 + $0x1a8] sm:$0x3]
      %v276 = vld [vmem:[%s210] sm:$0xff]
      %vm325 = vcmask 1046528
      %v326 = vrot.slane %v222, 1
      %v327 = vrot.slane %v223, 1
      %v328 = vsel %vm325, %v326, %v327
      %v329 = vrot.slane %v224, 1
      %v330 = vsel %vm325, %v327, %v329
      %v331 = vrot.slane %v225, 1
      %v332 = vrot.slane %v226, 1
      %v333 = vsel %vm325, %v331, %v332
      %v334 = vrot.slane %v227, 1
      %v335 = vsel %vm325, %v332, %v334
      %v336 = vrot.slane %v228, 1
      %v337 = vrot.slane %v229, 1
      %v338 = vsel %vm325, %v336, %v337
      %v339 = vrot.slane %v230, 1
      %v340 = vsel %vm325, %v337, %v339
      %v341 = vrot.slane %v231, 1
      %v342 = vrot.slane %v232, 1
      %v343 = vsel %vm325, %v341, %v342
      %v344 = vrot.slane %v233, 1
      %v345 = vsel %vm325, %v342, %v344
      %v346 = vrot.slane %v234, 1
      %v347 = vrot.slane %v235, 1
      %v348 = vsel %vm325, %v346, %v347
      %v349 = vrot.slane %v236, 1
      %v350 = vsel %vm325, %v347, %v349
      %v351 = vrot.slane %v237, 1
      %v352 = vrot.slane %v238, 1
      %v353 = vsel %vm325, %v351, %v352
      %v354 = vrot.slane %v239, 1
      %v355 = vsel %vm325, %v352, %v354
      %v356 = vrot.slane %v240, 1
      %v357 = vrot.slane %v241, 1
      %v358 = vsel %vm325, %v356, %v357
      %v359 = vrot.slane %v242, 1
      %v360 = vsel %vm325, %v357, %v359
      %v361 = vrot.slane %v243, 1
      %v362 = vrot.slane %v244, 1
      %v363 = vsel %vm325, %v361, %v362
      %v364 = vrot.slane %v245, 1
      %v365 = vsel %vm325, %v362, %v364
      %v366 = vrot.slane %v246, 1
      %v367 = vrot.slane %v247, 1
      %v368 = vsel %vm325, %v366, %v367
      %v369 = vrot.slane %v248, 1
      %v370 = vsel %vm325, %v367, %v369
      %v371 = vrot.slane %v249, 1
      %v372 = vrot.slane %v250, 1
      %v373 = vsel %vm325, %v371, %v372
      %v374 = vrot.slane %v251, 1
      %v375 = vsel %vm325, %v372, %v374
      %v376 = vrot.slane %v252, 1
      %v377 = vrot.slane %v253, 1
      %v378 = vsel %vm325, %v376, %v377
      %v379 = vrot.slane %v254, 1
      %v380 = vsel %vm325, %v377, %v379
      %v381 = vrot.slane %v255, 1
      %v382 = vrot.slane %v256, 1
      %v383 = vsel %vm325, %v381, %v382
      %v384 = vrot.slane %v257, 1
      %v385 = vsel %vm325, %v382, %v384
      %v386 = vrot.slane %v258, 1
      %v387 = vrot.slane %v259, 1
      %v388 = vsel %vm325, %v386, %v387
      %v389 = vrot.slane %v260, 1
      %v390 = vsel %vm325, %v387, %v389
      %v391 = vrot.slane %v261, 1
      %v392 = vrot.slane %v262, 1
      %v393 = vsel %vm325, %v391, %v392
      %v394 = vrot.slane %v263, 1
      %v395 = vsel %vm325, %v392, %v394
      %v396 = vrot.slane %v264, 1
      %v397 = vrot.slane %v265, 1
      %v398 = vsel %vm325, %v396, %v397
      %v399 = vrot.slane %v266, 1
      %v400 = vsel %vm325, %v397, %v399
      %v401 = vrot.slane %v267, 1
      %v402 = vrot.slane %v268, 1
      %v403 = vsel %vm325, %v401, %v402
      %v404 = vrot.slane %v269, 1
      %v405 = vsel %vm325, %v402, %v404
      %s406 = scalar_lea.vmem %s210, 8
      %v407 = vld [vmem:[%s406] sm:$0xff]
      %vm408 = vcmask 64512
      %v409 = vsel %vm408, %v328, 0
      %v411 = vsel %vm408, %v330, 0
      %v413 = vsel %vm408, %v333, 0
      %v415 = vsel %vm408, %v335, 0
      %v417 = vsel %vm408, %v338, 0
      %v419 = vsel %vm408, %v340, 0
      %v421 = vsel %vm408, %v343, 0
      %v423 = vsel %vm408, %v345, 0
      %v425 = vsel %vm408, %v348, 0
      %v427 = vsel %vm408, %v350, 0
      %v429 = vsel %vm408, %v353, 0
      %v431 = vsel %vm408, %v355, 0
      %v433 = vsel %vm408, %v358, 0
      %v435 = vsel %vm408, %v360, 0
      %v437 = vsel %vm408, %v363, 0
      %v439 = vsel %vm408, %v365, 0
      %v441 = vsel %vm408, %v368, 0
      %v443 = vsel %vm408, %v370, 0
      %v445 = vsel %vm408, %v373, 0
      %v447 = vsel %vm408, %v375, 0
      %v449 = vsel %vm408, %v378, 0
      %v451 = vsel %vm408, %v380, 0
      %v453 = vsel %vm408, %v383, 0
      %v455 = vsel %vm408, %v385, 0
      %v457 = vsel %vm408, %v388, 0
      %v459 = vsel %vm408, %v390, 0
      %v461 = vsel %vm408, %v393, 0
      %v463 = vsel %vm408, %v395, 0
      %v465 = vsel %vm408, %v398, 0
      %v467 = vsel %vm408, %v400, 0
      %v469 = vsel %vm408, %v403, 0
      %v471 = vsel %vm408, %v405, 0
      %473 = vmatprep.subr.mxu0 0.0
      %474 = vmatpush1.msra.mxu0 %v407
      %475 = vmatprep.subr.mxu0 0.0
      %476 = vmatpush1.msra.mxu0 0.0
      %477 = vmatprep.subr.mxu0 0.0
      %478 = vmatpush1.msra.mxu0 0.0
      %479 = vmatprep.subr.mxu0 0.0
      %480 = vmatpush1.msra.mxu0 0.0
      %481 = vmatprep.subr.mxu0 0.0
      %482 = vmatpush1.msra.mxu0 0.0
      %483 = vmatprep.subr.mxu0 0.0
      %484 = vmatpush1.msra.mxu0 0.0
      %485 = vmatprep.subr.mxu0 0.0
      %486 = vmatpush1.msra.mxu0 0.0
      %487 = vmatprep.subr.mxu0 0.0
      %488 = vmatpush1.msra.mxu0 0.0
      %489 = vmatprep.subr.mxu0 0.0
      %490 = vmatpush1.msra.mxu0 0.0
      %491 = vmatprep.subr.mxu0 0.0
      %492 = vmatpush1.msra.mxu0 0.0
      %493 = vmatprep.subr.mxu0 0.0
      %494 = vmatpush1.msra.mxu0 0.0
      %495 = vmatprep.subr.mxu0 0.0
      %496 = vmatpush1.msra.mxu0 0.0
      %497 = vmatprep.subr.mxu0 0.0
      %498 = vmatpush1.msra.mxu0 0.0
      %499 = vmatprep.subr.mxu0 0.0
      %500 = vmatpush1.msra.mxu0 0.0
      %501 = vmatprep.subr.mxu0 0.0
      %502 = vmatpush1.msra.mxu0 0.0
      %503 = vmatprep.subr.mxu0 0.0
      %504 = vmatpush1.msra.mxu0 0.0
      %505 = vmatprep.subr.mxu0 0.0
      %506 = vmatpush1.msra.mxu0 0.0
      %507 = vmatprep.subr.mxu0 0.0
      %508 = vmatpush1.msra.mxu0 0.0
      %509 = vmatprep.subr.mxu0 0.0
      %510 = vmatpush1.msra.mxu0 0.0
      %511 = vmatprep.subr.mxu0 0.0
      %512 = vmatpush1.msra.mxu0 0.0
      %513 = vmatprep.subr.mxu0 0.0
      %514 = vmatpush1.msra.mxu0 0.0
      %515 = vmatprep.subr.mxu0 0.0
      %516 = vmatpush1.msra.mxu0 0.0
      %517 = vmatprep.subr.mxu0 0.0
      %518 = vmatpush1.msra.mxu0 0.0
      %519 = vmatprep.subr.mxu0 0.0
      %520 = vmatpush1.msra.mxu0 0.0
      %521 = vmatprep.subr.mxu0 0.0
      %522 = vmatpush1.msra.mxu0 0.0
      %523 = vmatprep.subr.mxu0 0.0
      %524 = vmatpush1.msra.mxu0 0.0
      %525 = vmatprep.subr.mxu0 0.0
      %526 = vmatpush1.msra.mxu0 0.0
      %527 = vmatprep.subr.mxu0 0.0
      %528 = vmatpush1.msra.mxu0 0.0
      %529 = vmatprep.subr.mxu0 0.0
      %530 = vmatpush1.msra.mxu0 0.0
      %531 = vmatprep.subr.mxu0 0.0
      %532 = vmatpush1.msra.mxu0 0.0
      %533 = vmatprep.subr.mxu0 0.0
      %534 = vmatpush1.msra.mxu0 0.0
      %535 = vmatprep.subr.mxu0 0.0
      %536 = vmatpush1.msra.mxu0 0.0
      %537 = vmatprep.mubr.f32.mxu0 0.0
      %538 = vmatmul.mubr.f32.gmra.mrb[0].mxu0 %v409
      %v539 = vpop.f32.mrb[0].mxu0
      %v540 = vadd.f32 0.0, %v539
      %v541 = vpop.f32.mrb[0].mxu0
      %542 = vmatprep.mubr.f32.mxu0 0.0
      %543 = vmatmul.mubr.f32.gmra.mrb[0].mxu0 %v411
      %v544 = vpop.f32.mrb[0].mxu0
      %v545 = vadd.f32 0.0, %v544
      %v546 = vpop.f32.mrb[0].mxu0
      %547 = vmatprep.mubr.f32.mxu0 0.0
      %548 = vmatmul.mubr.f32.gmra.mrb[0].mxu0 %v413
      %v549 = vpop.f32.mrb[0].mxu0
      %v550 = vadd.f32 0.0, %v549
      %v551 = vpop.f32.mrb[0].mxu0
      %552 = vmatprep.mubr.f32.mxu0 0.0
      %553 = vmatmul.mubr.f32.gmra.mrb[0].mxu0 %v415
      %v554 = vpop.f32.mrb[0].mxu0
      %v555 = vadd.f32 0.0, %v554
      %v556 = vpop.f32.mrb[0].mxu0
      %557 = vmatprep.mubr.f32.mxu0 0.0
      %558 = vmatmul.mubr.f32.gmra.mrb[0].mxu0 %v417
      %v559 = vpop.f32.mrb[0].mxu0
      %v560 = vadd.f32 0.0, %v559
      %v561 = vpop.f32.mrb[0].mxu0
      %562 = vmatprep.mubr.f32.mxu0 0.0
      %563 = vmatmul.mubr.f32.gmra.mrb[0].mxu0 %v419
      %v564 = vpop.f32.mrb[0].mxu0
      %v565 = vadd.f32 0.0, %v564
      %v566 = vpop.f32.mrb[0].mxu0
      %567 = vmatprep.mubr.f32.mxu0 0.0
      %568 = vmatmul.mubr.f32.gmra.mrb[0].mxu0 %v421
      %v569 = vpop.f32.mrb[0].mxu0
      %v570 = vadd.f32 0.0, %v569
      %v571 = vpop.f32.mrb[0].mxu0
      %572 = vmatprep.mubr.f32.mxu0 0.0
      %573 = vmatmul.mubr.f32.gmra.mrb[0].mxu0 %v423
      %v574 = vpop.f32.mrb[0].mxu0
      %v575 = vadd.f32 0.0, %v574
      %v576 = vpop.f32.mrb[0].mxu0
      %577 = vmatprep.mubr.f32.mxu0 0.0
      %578 = vmatmul.mubr.f32.gmra.mrb[0].mxu0 %v425
      %v579 = vpop.f32.mrb[0].mxu0
      %v580 = vadd.f32 0.0, %v579
      %v581 = vpop.f32.mrb[0].mxu0
      %582 = vmatprep.mubr.f32.mxu0 0.0
      %583 = vmatmul.mubr.f32.gmra.mrb[0].mxu0 %v427
      %v584 = vpop.f32.mrb[0].mxu0
      %v585 = vadd.f32 0.0, %v584
      %v586 = vpop.f32.mrb[0].mxu0
      %587 = vmatprep.mubr.f32.mxu0 0.0
      %588 = vmatmul.mubr.f32.gmra.mrb[0].mxu0 %v429
      %v589 = vpop.f32.mrb[0].mxu0
      %v590 = vadd.f32 0.0, %v589
      %v591 = vpop.f32.mrb[0].mxu0
      %592 = vmatprep.mubr.f32.mxu0 0.0
      %593 = vmatmul.mubr.f32.gmra.mrb[0].mxu0 %v431
      %v594 = vpop.f32.mrb[0].mxu0
      %v595 = vadd.f32 0.0, %v594
      %v596 = vpop.f32.mrb[0].mxu0
      %597 = vmatprep.mubr.f32.mxu0 0.0
      %598 = vmatmul.mubr.f32.gmra.mrb[0].mxu0 %v433
      %v599 = vpop.f32.mrb[0].mxu0
      %v600 = vadd.f32 0.0, %v599
      %v601 = vpop.f32.mrb[0].mxu0
      %602 = vmatprep.mubr.f32.mxu0 0.0
      %603 = vmatmul.mubr.f32.gmra.mrb[0].mxu0 %v435
      %v604 = vpop.f32.mrb[0].mxu0
      %v605 = vadd.f32 0.0, %v604
      %v606 = vpop.f32.mrb[0].mxu0
      %607 = vmatprep.mubr.f32.mxu0 0.0
      %608 = vmatmul.mubr.f32.gmra.mrb[0].mxu0 %v437
      %v609 = vpop.f32.mrb[0].mxu0
      %v610 = vadd.f32 0.0, %v609
      %v611 = vpop.f32.mrb[0].mxu0
      %612 = vmatprep.mubr.f32.mxu0 0.0
      %613 = vmatmul.mubr.f32.gmra.mrb[0].mxu0 %v439
      %v614 = vpop.f32.mrb[0].mxu0
      %v615 = vadd.f32 0.0, %v614
      %v616 = vpop.f32.mrb[0].mxu0
      %617 = vmatprep.mubr.f32.mxu0 0.0
      %618 = vmatmul.mubr.f32.gmra.mrb[0].mxu0 %v441
      %v619 = vpop.f32.mrb[0].mxu0
      %v620 = vadd.f32 0.0, %v619
      %v621 = vpop.f32.mrb[0].mxu0
      %622 = vmatprep.mubr.f32.mxu0 0.0
      %623 = vmatmul.mubr.f32.gmra.mrb[0].mxu0 %v443
      %v624 = vpop.f32.mrb[0].mxu0
      %v625 = vadd.f32 0.0, %v624
      %v626 = vpop.f32.mrb[0].mxu0
      %627 = vmatprep.mubr.f32.mxu0 0.0
      %628 = vmatmul.mubr.f32.gmra.mrb[0].mxu0 %v445
      %v629 = vpop.f32.mrb[0].mxu0
      %v630 = vadd.f32 0.0, %v629
      %v631 = vpop.f32.mrb[0].mxu0
      %632 = vmatprep.mubr.f32.mxu0 0.0
      %633 = vmatmul.mubr.f32.gmra.mrb[0].mxu0 %v447
      %v634 = vpop.f32.mrb[0].mxu0
      %v635 = vadd.f32 0.0, %v634
      %v636 = vpop.f32.mrb[0].mxu0
      %637 = vmatprep.mubr.f32.mxu0 0.0
      %638 = vmatmul.mubr.f32.gmra.mrb[0].mxu0 %v449
      %v639 = vpop.f32.mrb[0].mxu0
      %v640 = vadd.f32 0.0, %v639
      %v641 = vpop.f32.mrb[0].mxu0
      %642 = vmatprep.mubr.f32.mxu0 0.0
      %643 = vmatmul.mubr.f32.gmra.mrb[0].mxu0 %v451
      %v644 = vpop.f32.mrb[0].mxu0
      %v645 = vadd.f32 0.0, %v644
      %v646 = vpop.f32.mrb[0].mxu0
      %647 = vmatprep.mubr.f32.mxu0 0.0
      %648 = vmatmul.mubr.f32.gmra.mrb[0].mxu0 %v453
      %v649 = vpop.f32.mrb[0].mxu0
      %v650 = vadd.f32 0.0, %v649
      %v651 = vpop.f32.mrb[0].mxu0
      %652 = vmatprep.mubr.f32.mxu0 0.0
      %653 = vmatmul.mubr.f32.gmra.mrb[0].mxu0 %v455
      %v654 = vpop.f32.mrb[0].mxu0
      %v655 = vadd.f32 0.0, %v654
      %v656 = vpop.f32.mrb[0].mxu0
      %657 = vmatprep.mubr.f32.mxu0 0.0
      %658 = vmatmul.mubr.f32.gmra.mrb[0].mxu0 %v457
      %v659 = vpop.f32.mrb[0].mxu0
      %v660 = vadd.f32 0.0, %v659
      %v661 = vpop.f32.mrb[0].mxu0
      %662 = vmatprep.mubr.f32.mxu0 0.0
      %663 = vmatmul.mubr.f32.gmra.mrb[0].mxu0 %v459
      %v664 = vpop.f32.mrb[0].mxu0
      %v665 = vadd.f32 0.0, %v664
      %v666 = vpop.f32.mrb[0].mxu0
      %667 = vmatprep.mubr.f32.mxu0 0.0
      %668 = vmatmul.mubr.f32.gmra.mrb[0].mxu0 %v461
      %v669 = vpop.f32.mrb[0].mxu0
      %v670 = vadd.f32 0.0, %v669
      %v671 = vpop.f32.mrb[0].mxu0
      %672 = vmatprep.mubr.f32.mxu0 0.0
      %673 = vmatmul.mubr.f32.gmra.mrb[0].mxu0 %v463
      %v674 = vpop.f32.mrb[0].mxu0
      %v675 = vadd.f32 0.0, %v674
      %v676 = vpop.f32.mrb[0].mxu0
      %677 = vmatprep.mubr.f32.mxu0 0.0
      %678 = vmatmul.mubr.f32.gmra.mrb[0].mxu0 %v465
      %v679 = vpop.f32.mrb[0].mxu0
      %v680 = vadd.f32 0.0, %v679
      %v681 = vpop.f32.mrb[0].mxu0
      %682 = vmatprep.mubr.f32.mxu0 0.0
      %683 = vmatmul.mubr.f32.gmra.mrb[0].mxu0 %v467
      %v684 = vpop.f32.mrb[0].mxu0
      %v685 = vadd.f32 0.0, %v684
      %v686 = vpop.f32.mrb[0].mxu0
      %687 = vmatprep.mubr.f32.mxu0 0.0
      %688 = vmatmul.mubr.f32.gmra.mrb[0].mxu0 %v469
      %v689 = vpop.f32.mrb[0].mxu0
      %v690 = vadd.f32 0.0, %v689
      %v691 = vpop.f32.mrb[0].mxu0
      %692 = vmatprep.mubr.f32.mxu0 0.0
      %693 = vmatmul.mubr.f32.gmra.mrb[0].mxu0 %v471
      %v694 = vpop.f32.mrb[0].mxu0
      %v695 = vadd.f32 0.0, %v694
      %v696 = vpop.f32.mrb[0].mxu0
      %697 = vdwg.mxu0
      %v698 = vsel %vm408, %v222, 0
      %v700 = vsel %vm408, %v223, 0
      %v702 = vsel %vm408, %v225, 0
      %v704 = vsel %vm408, %v226, 0
      %v706 = vsel %vm408, %v228, 0
      %v708 = vsel %vm408, %v229, 0
      %v710 = vsel %vm408, %v231, 0
      %v712 = vsel %vm408, %v232, 0
      %v714 = vsel %vm408, %v234, 0
      %v716 = vsel %vm408, %v235, 0
      %v718 = vsel %vm408, %v237, 0
      %v720 = vsel %vm408, %v238, 0
      %v722 = vsel %vm408, %v240, 0
      %v724 = vsel %vm408, %v241, 0
      %v726 = vsel %vm408, %v243, 0
      %v728 = vsel %vm408, %v244, 0
      %v730 = vsel %vm408, %v246, 0
      %v732 = vsel %vm408, %v247, 0
      %v734 = vsel %vm408, %v249, 0
      %v736 = vsel %vm408, %v250, 0
      %v738 = vsel %vm408, %v252, 0
      %v740 = vsel %vm408, %v253, 0
      %v742 = vsel %vm408, %v255, 0
      %v744 = vsel %vm408, %v256, 0
      %v746 = vsel %vm408, %v258, 0
      %v748 = vsel %vm408, %v259, 0
      %v750 = vsel %vm408, %v261, 0
      %v752 = vsel %vm408, %v262, 0
      %v754 = vsel %vm408, %v264, 0
      %v756 = vsel %vm408, %v265, 0
      %v758 = vsel %vm408, %v267, 0
      %v760 = vsel %vm408, %v268, 0
      %762 = vmatprep.subr.mxu0 0.0
      %763 = vmatpush1.msra.mxu0 %v276
      %764 = vmatprep.subr.mxu0 0.0
      %765 = vmatpush1.msra.mxu0 0.0
      %766 = vmatprep.subr.mxu0 0.0
      %767 = vmatpush1.msra.mxu0 0.0
      %768 = vmatprep.subr.mxu0 0.0
      %769 = vmatpush1.msra.mxu0 0.0
      %770 = vmatprep.subr.mxu0 0.0
      %771 = vmatpush1.msra.mxu0 0.0
      %772 = vmatprep.subr.mxu0 0.0
      %773 = vmatpush1.msra.mxu0 0.0
      %774 = vmatprep.subr.mxu0 0.0
      %775 = vmatpush1.msra.mxu0 0.0
      %776 = vmatprep.subr.mxu0 0.0
      %777 = vmatpush1.msra.mxu0 0.0
      %778 = vmatprep.subr.mxu0 0.0
      %779 = vmatpush1.msra.mxu0 0.0
      %780 = vmatprep.subr.mxu0 0.0
      %781 = vmatpush1.msra.mxu0 0.0
      %782 = vmatprep.subr.mxu0 0.0
      %783 = vmatpush1.msra.mxu0 0.0
      %784 = vmatprep.subr.mxu0 0.0
      %785 = vmatpush1.msra.mxu0 0.0
      %786 = vmatprep.subr.mxu0 0.0
      %787 = vmatpush1.msra.mxu0 0.0
      %788 = vmatprep.subr.mxu0 0.0
      %789 = vmatpush1.msra.mxu0 0.0
      %790 = vmatprep.subr.mxu0 0.0
      %791 = vmatpush1.msra.mxu0 0.0
      %792 = vmatprep.subr.mxu0 0.0
      %793 = vmatpush1.msra.mxu0 0.0
      %794 = vmatprep.subr.mxu0 0.0
      %795 = vmatpush1.msra.mxu0 0.0
      %796 = vmatprep.subr.mxu0 0.0
      %797 = vmatpush1.msra.mxu0 0.0
      %798 = vmatprep.subr.mxu0 0.0
      %799 = vmatpush1.msra.mxu0 0.0
      %800 = vmatprep.subr.mxu0 0.0
      %801 = vmatpush1.msra.mxu0 0.0
      %802 = vmatprep.subr.mxu0 0.0
      %803 = vmatpush1.msra.mxu0 0.0
      %804 = vmatprep.subr.mxu0 0.0
      %805 = vmatpush1.msra.mxu0 0.0
      %806 = vmatprep.subr.mxu0 0.0
      %807 = vmatpush1.msra.mxu0 0.0
      %808 = vmatprep.subr.mxu0 0.0
      %809 = vmatpush1.msra.mxu0 0.0
      %810 = vmatprep.subr.mxu0 0.0
      %811 = vmatpush1.msra.mxu0 0.0
      %812 = vmatprep.subr.mxu0 0.0
      %813 = vmatpush1.msra.mxu0 0.0
      %814 = vmatprep.subr.mxu0 0.0
      %815 = vmatpush1.msra.mxu0 0.0
      %816 = vmatprep.subr.mxu0 0.0
      %817 = vmatpush1.msra.mxu0 0.0
      %818 = vmatprep.subr.mxu0 0.0
      %819 = vmatpush1.msra.mxu0 0.0
      %820 = vmatprep.subr.mxu0 0.0
      %821 = vmatpush1.msra.mxu0 0.0
      %822 = vmatprep.subr.mxu0 0.0
      %823 = vmatpush1.msra.mxu0 0.0
      %824 = vmatprep.subr.mxu0 0.0
      %825 = vmatpush1.msra.mxu0 0.0
      %826 = vmatprep.mubr.f32.mxu0 0.0
      %827 = vmatmul.mubr.f32.gmra.mrb[0].mxu0 %v698
      %v828 = vpop.f32.mrb[0].mxu0
      %v829 = vadd.f32 %v540, %v828
      %v830 = vpop.f32.mrb[0].mxu0
      %831 = vmatprep.mubr.f32.mxu0 0.0
      %832 = vmatmul.mubr.f32.gmra.mrb[0].mxu0 %v700
      %v833 = vpop.f32.mrb[0].mxu0
      %v834 = vadd.f32 %v545, %v833
      %v835 = vpop.f32.mrb[0].mxu0
      %836 = vmatprep.mubr.f32.mxu0 0.0
      %837 = vmatmul.mubr.f32.gmra.mrb[0].mxu0 %v702
      %v838 = vpop.f32.mrb[0].mxu0
      %v839 = vadd.f32 %v550, %v838
      %v840 = vpop.f32.mrb[0].mxu0
      %841 = vmatprep.mubr.f32.mxu0 0.0
      %842 = vmatmul.mubr.f32.gmra.mrb[0].mxu0 %v704
      %v843 = vpop.f32.mrb[0].mxu0
      %v844 = vadd.f32 %v555, %v843
      %v845 = vpop.f32.mrb[0].mxu0
      %846 = vmatprep.mubr.f32.mxu0 0.0
      %847 = vmatmul.mubr.f32.gmra.mrb[0].mxu0 %v706
      %v848 = vpop.f32.mrb[0].mxu0
      %v849 = vadd.f32 %v560, %v848
      %v850 = vpop.f32.mrb[0].mxu0
      %851 = vmatprep.mubr.f32.mxu0 0.0
      %852 = vmatmul.mubr.f32.gmra.mrb[0].mxu0 %v708
      %v853 = vpop.f32.mrb[0].mxu0
      %v854 = vadd.f32 %v565, %v853
      %v855 = vpop.f32.mrb[0].mxu0
      %856 = vmatprep.mubr.f32.mxu0 0.0
      %857 = vmatmul.mubr.f32.gmra.mrb[0].mxu0 %v710
      %v858 = vpop.f32.mrb[0].mxu0
      %v859 = vadd.f32 %v570, %v858
      %v860 = vpop.f32.mrb[0].mxu0
      %861 = vmatprep.mubr.f32.mxu0 0.0
      %862 = vmatmul.mubr.f32.gmra.mrb[0].mxu0 %v712
      %v863 = vpop.f32.mrb[0].mxu0
      %v864 = vadd.f32 %v575, %v863
      %v865 = vpop.f32.mrb[0].mxu0
      %866 = vmatprep.mubr.f32.mxu0 0.0
      %867 = vmatmul.mubr.f32.gmra.mrb[0].mxu0 %v714
      %v868 = vpop.f32.mrb[0].mxu0
      %v869 = vadd.f32 %v580, %v868
      %v870 = vpop.f32.mrb[0].mxu0
      %871 = vmatprep.mubr.f32.mxu0 0.0
      %872 = vmatmul.mubr.f32.gmra.mrb[0].mxu0 %v716
      %v873 = vpop.f32.mrb[0].mxu0
      %v874 = vadd.f32 %v585, %v873
      %v875 = vpop.f32.mrb[0].mxu0
      %876 = vmatprep.mubr.f32.mxu0 0.0
      %877 = vmatmul.mubr.f32.gmra.mrb[0].mxu0 %v718
      %v878 = vpop.f32.mrb[0].mxu0
      %v879 = vadd.f32 %v590, %v878
      %v880 = vpop.f32.mrb[0].mxu0
      %881 = vmatprep.mubr.f32.mxu0 0.0
      %882 = vmatmul.mubr.f32.gmra.mrb[0].mxu0 %v720
      %v883 = vpop.f32.mrb[0].mxu0
      %v884 = vadd.f32 %v595, %v883
      %v885 = vpop.f32.mrb[0].mxu0
      %886 = vmatprep.mubr.f32.mxu0 0.0
      %887 = vmatmul.mubr.f32.gmra.mrb[0].mxu0 %v722
      %v888 = vpop.f32.mrb[0].mxu0
      %v889 = vadd.f32 %v600, %v888
      %v890 = vpop.f32.mrb[0].mxu0
      %891 = vmatprep.mubr.f32.mxu0 0.0
      %892 = vmatmul.mubr.f32.gmra.mrb[0].mxu0 %v724
      %v893 = vpop.f32.mrb[0].mxu0
      %v894 = vadd.f32 %v605, %v893
      %v895 = vpop.f32.mrb[0].mxu0
      %896 = vmatprep.mubr.f32.mxu0 0.0
      %897 = vmatmul.mubr.f32.gmra.mrb[0].mxu0 %v726
      %v898 = vpop.f32.mrb[0].mxu0
      %v899 = vadd.f32 %v610, %v898
      %v900 = vpop.f32.mrb[0].mxu0
      %901 = vmatprep.mubr.f32.mxu0 0.0
      %902 = vmatmul.mubr.f32.gmra.mrb[0].mxu0 %v728
      %v903 = vpop.f32.mrb[0].mxu0
      %v904 = vadd.f32 %v615, %v903
      %v905 = vpop.f32.mrb[0].mxu0
      %906 = vmatprep.mubr.f32.mxu0 0.0
      %907 = vmatmul.mubr.f32.gmra.mrb[0].mxu0 %v730
      %v908 = vpop.f32.mrb[0].mxu0
      %v909 = vadd.f32 %v620, %v908
      %v910 = vpop.f32.mrb[0].mxu0
      %911 = vmatprep.mubr.f32.mxu0 0.0
      %912 = vmatmul.mubr.f32.gmra.mrb[0].mxu0 %v732
      %v913 = vpop.f32.mrb[0].mxu0
      %v914 = vadd.f32 %v625, %v913
      %v915 = vpop.f32.mrb[0].mxu0
      %916 = vmatprep.mubr.f32.mxu0 0.0
      %917 = vmatmul.mubr.f32.gmra.mrb[0].mxu0 %v734
      %v918 = vpop.f32.mrb[0].mxu0
      %v919 = vadd.f32 %v630, %v918
      %v920 = vpop.f32.mrb[0].mxu0
      %921 = vmatprep.mubr.f32.mxu0 0.0
      %922 = vmatmul.mubr.f32.gmra.mrb[0].mxu0 %v736
      %v923 = vpop.f32.mrb[0].mxu0
      %v924 = vadd.f32 %v635, %v923
      %v925 = vpop.f32.mrb[0].mxu0
      %926 = vmatprep.mubr.f32.mxu0 0.0
      %927 = vmatmul.mubr.f32.gmra.mrb[0].mxu0 %v738
      %v928 = vpop.f32.mrb[0].mxu0
      %v929 = vadd.f32 %v640, %v928
      %v930 = vpop.f32.mrb[0].mxu0
      %931 = vmatprep.mubr.f32.mxu0 0.0
      %932 = vmatmul.mubr.f32.gmra.mrb[0].mxu0 %v740
      %v933 = vpop.f32.mrb[0].mxu0
      %v934 = vadd.f32 %v645, %v933
      %v935 = vpop.f32.mrb[0].mxu0
      %936 = vmatprep.mubr.f32.mxu0 0.0
      %937 = vmatmul.mubr.f32.gmra.mrb[0].mxu0 %v742
      %v938 = vpop.f32.mrb[0].mxu0
      %v939 = vadd.f32 %v650, %v938
      %v940 = vpop.f32.mrb[0].mxu0
      %941 = vmatprep.mubr.f32.mxu0 0.0
      %942 = vmatmul.mubr.f32.gmra.mrb[0].mxu0 %v744
      %v943 = vpop.f32.mrb[0].mxu0
      %v944 = vadd.f32 %v655, %v943
      %v945 = vpop.f32.mrb[0].mxu0
      %946 = vmatprep.mubr.f32.mxu0 0.0
      %947 = vmatmul.mubr.f32.gmra.mrb[0].mxu0 %v746
      %v948 = vpop.f32.mrb[0].mxu0
      %v949 = vadd.f32 %v660, %v948
      %v950 = vpop.f32.mrb[0].mxu0
      %951 = vmatprep.mubr.f32.mxu0 0.0
      %952 = vmatmul.mubr.f32.gmra.mrb[0].mxu0 %v748
      %v953 = vpop.f32.mrb[0].mxu0
      %v954 = vadd.f32 %v665, %v953
      %v955 = vpop.f32.mrb[0].mxu0
      %956 = vmatprep.mubr.f32.mxu0 0.0
      %957 = vmatmul.mubr.f32.gmra.mrb[0].mxu0 %v750
      %v958 = vpop.f32.mrb[0].mxu0
      %v959 = vadd.f32 %v670, %v958
      %v960 = vpop.f32.mrb[0].mxu0
      %961 = vmatprep.mubr.f32.mxu0 0.0
      %962 = vmatmul.mubr.f32.gmra.mrb[0].mxu0 %v752
      %v963 = vpop.f32.mrb[0].mxu0
      %v964 = vadd.f32 %v675, %v963
      %v965 = vpop.f32.mrb[0].mxu0
      %966 = vmatprep.mubr.f32.mxu0 0.0
      %967 = vmatmul.mubr.f32.gmra.mrb[0].mxu0 %v754
      %v968 = vpop.f32.mrb[0].mxu0
      %v969 = vadd.f32 %v680, %v968
      %v970 = vpop.f32.mrb[0].mxu0
      %971 = vmatprep.mubr.f32.mxu0 0.0
      %972 = vmatmul.mubr.f32.gmra.mrb[0].mxu0 %v756
      %v973 = vpop.f32.mrb[0].mxu0
      %v974 = vadd.f32 %v685, %v973
      %v975 = vpop.f32.mrb[0].mxu0
      %976 = vmatprep.mubr.f32.mxu0 0.0
      %977 = vmatmul.mubr.f32.gmra.mrb[0].mxu0 %v758
      %v978 = vpop.f32.mrb[0].mxu0
      %v979 = vadd.f32 %v690, %v978
      %v980 = vpop.f32.mrb[0].mxu0
      %981 = vmatprep.mubr.f32.mxu0 0.0
      %982 = vmatmul.mubr.f32.gmra.mrb[0].mxu0 %v760
      %v983 = vpop.f32.mrb[0].mxu0
      %v984 = vadd.f32 %v695, %v983
      %v985 = vpop.f32.mrb[0].mxu0
      %986 = vdwg.mxu0
      %vm987 = vcmask 1045504
      %v988 = vrot.slane %v222, 2
      %v989 = vrot.slane %v223, 2
      %v990 = vsel %vm987, %v988, %v989
      %v991 = vrot.slane %v224, 2
      %v992 = vsel %vm987, %v989, %v991
      %v993 = vrot.slane %v225, 2
      %v994 = vrot.slane %v226, 2
      %v995 = vsel %vm987, %v993, %v994
      %v996 = vrot.slane %v227, 2
      %v997 = vsel %vm987, %v994, %v996
      %v998 = vrot.slane %v228, 2
      %v999 = vrot.slane %v229, 2
      %v1000 = vsel %vm987, %v998, %v999
      %v1001 = vrot.slane %v230, 2
      %v1002 = vsel %vm987, %v999, %v1001
      %v1003 = vrot.slane %v231, 2
      %v1004 = vrot.slane %v232, 2
      %v1005 = vsel %vm987, %v1003, %v1004
      %v1006 = vrot.slane %v233, 2
      %v1007 = vsel %vm987, %v1004, %v1006
      %v1008 = vrot.slane %v234, 2
      %v1009 = vrot.slane %v235, 2
      %v1010 = vsel %vm987, %v1008, %v1009
      %v1011 = vrot.slane %v236, 2
      %v1012 = vsel %vm987, %v1009, %v1011
      %v1013 = vrot.slane %v237, 2
      %v1014 = vrot.slane %v238, 2
      %v1015 = vsel %vm987, %v1013, %v1014
      %v1016 = vrot.slane %v239, 2
      %v1017 = vsel %vm987, %v1014, %v1016
      %v1018 = vrot.slane %v240, 2
      %v1019 = vrot.slane %v241, 2
      %v1020 = vsel %vm987, %v1018, %v1019
      %v1021 = vrot.slane %v242, 2
      %v1022 = vsel %vm987, %v1019, %v1021
      %v1023 = vrot.slane %v243, 2
      %v1024 = vrot.slane %v244, 2
      %v1025 = vsel %vm987, %v1023, %v1024
      %v1026 = vrot.slane %v245, 2
      %v1027 = vsel %vm987, %v1024, %v1026
      %v1028 = vrot.slane %v246, 2
      %v1029 = vrot.slane %v247, 2
      %v1030 = vsel %vm987, %v1028, %v1029
      %v1031 = vrot.slane %v248, 2
      %v1032 = vsel %vm987, %v1029, %v1031
      %v1033 = vrot.slane %v249, 2
      %v1034 = vrot.slane %v250, 2
      %v1035 = vsel %vm987, %v1033, %v1034
      %v1036 = vrot.slane %v251, 2
      %v1037 = vsel %vm987, %v1034, %v1036
      %v1038 = vrot.slane %v252, 2
      %v1039 = vrot.slane %v253, 2
      %v1040 = vsel %vm987, %v1038, %v1039
      %v1041 = vrot.slane %v254, 2
      %v1042 = vsel %vm987, %v1039, %v1041
      %v1043 = vrot.slane %v255, 2
      %v1044 = vrot.slane %v256, 2
      %v1045 = vsel %vm987, %v1043, %v1044
      %v1046 = vrot.slane %v257, 2
      %v1047 = vsel %vm987, %v1044, %v1046
      %v1048 = vrot.slane %v258, 2
      %v1049 = vrot.slane %v259, 2
      %v1050 = vsel %vm987, %v1048, %v1049
      %v1051 = vrot.slane %v260, 2
      %v1052 = vsel %vm987, %v1049, %v1051
      %v1053 = vrot.slane %v261, 2
      %v1054 = vrot.slane %v262, 2
      %v1055 = vsel %vm987, %v1053, %v1054
      %v1056 = vrot.slane %v263, 2
      %v1057 = vsel %vm987, %v1054, %v1056
      %v1058 = vrot.slane %v264, 2
      %v1059 = vrot.slane %v265, 2
      %v1060 = vsel %vm987, %v1058, %v1059
      %v1061 = vrot.slane %v266, 2
      %v1062 = vsel %vm987, %v1059, %v1061
      %v1063 = vrot.slane %v267, 2
      %v1064 = vrot.slane %v268, 2
      %v1065 = vsel %vm987, %v1063, %v1064
      %v1066 = vrot.slane %v269, 2
      %v1067 = vsel %vm987, %v1064, %v1066
      %s1068 = scalar_lea.vmem %s210, 16
      %v1069 = vld [vmem:[%s1068] sm:$0xff]
      %v1070 = vsel %vm408, %v990, 0
      %v1072 = vsel %vm408, %v992, 0
      %v1074 = vsel %vm408, %v995, 0
      %v1076 = vsel %vm408, %v997, 0
      %v1078 = vsel %vm408, %v1000, 0
      %v1080 = vsel %vm408, %v1002, 0
      %v1082 = vsel %vm408, %v1005, 0
      %v1084 = vsel %vm408, %v1007, 0
      %v1086 = vsel %vm408, %v1010, 0
      %v1088 = vsel %vm408, %v1012, 0
      %v1090 = vsel %vm408, %v1015, 0
      %v1092 = vsel %vm408, %v1017, 0
      %v1094 = vsel %vm408, %v1020, 0
      %v1096 = vsel %vm408, %v1022, 0
      %v1098 = vsel %vm408, %v1025, 0
      %v1100 = vsel %vm408, %v1027, 0
      %v1102 = vsel %vm408, %v1030, 0
      %v1104 = vsel %vm408, %v1032, 0
      %v1106 = vsel %vm408, %v1035, 0
      %v1108 = vsel %vm408, %v1037, 0
      %v1110 = vsel %vm408, %v1040, 0
      %v1112 = vsel %vm408, %v1042, 0
      %v1114 = vsel %vm408, %v1045, 0
      %v1116 = vsel %vm408, %v1047, 0
      %v1118 = vsel %vm408, %v1050, 0
      %v1120 = vsel %vm408, %v1052, 0
      %v1122 = vsel %vm408, %v1055, 0
      %v1124 = vsel %vm408, %v1057, 0
      %v1126 = vsel %vm408, %v1060, 0
      %v1128 = vsel %vm408, %v1062, 0
      %v1130 = vsel %vm408, %v1065, 0
      %v1132 = vsel %vm408, %v1067, 0
      %1134 = vmatprep.subr.mxu0 0.0
      %1135 = vmatpush1.msra.mxu0 %v1069
      %1136 = vmatprep.subr.mxu0 0.0
      %1137 = vmatpush1.msra.mxu0 0.0
      %1138 = vmatprep.subr.mxu0 0.0
      %1139 = vmatpush1.msra.mxu0 0.0
      %1140 = vmatprep.subr.mxu0 0.0
      %1141 = vmatpush1.msra.mxu0 0.0
      %1142 = vmatprep.subr.mxu0 0.0
      %1143 = vmatpush1.msra.mxu0 0.0
      %1144 = vmatprep.subr.mxu0 0.0
      %1145 = vmatpush1.msra.mxu0 0.0
      %1146 = vmatprep.subr.mxu0 0.0
      %1147 = vmatpush1.msra.mxu0 0.0
      %1148 = vmatprep.subr.mxu0 0.0
      %1149 = vmatpush1.msra.mxu0 0.0
      %1150 = vmatprep.subr.mxu0 0.0
      %1151 = vmatpush1.msra.mxu0 0.0
      %1152 = vmatprep.subr.mxu0 0.0
      %1153 = vmatpush1.msra.mxu0 0.0
      %1154 = vmatprep.subr.mxu0 0.0
      %1155 = vmatpush1.msra.mxu0 0.0
      %1156 = vmatprep.subr.mxu0 0.0
      %1157 = vmatpush1.msra.mxu0 0.0
      %1158 = vmatprep.subr.mxu0 0.0
      %1159 = vmatpush1.msra.mxu0 0.0
      %1160 = vmatprep.subr.mxu0 0.0
      %1161 = vmatpush1.msra.mxu0 0.0
      %1162 = vmatprep.subr.mxu0 0.0
      %1163 = vmatpush1.msra.mxu0 0.0
      %1164 = vmatprep.subr.mxu0 0.0
      %1165 = vmatpush1.msra.mxu0 0.0
      %1166 = vmatprep.subr.mxu0 0.0
      %1167 = vmatpush1.msra.mxu0 0.0
      %1168 = vmatprep.subr.mxu0 0.0
      %1169 = vmatpush1.msra.mxu0 0.0
      %1170 = vmatprep.subr.mxu0 0.0
      %1171 = vmatpush1.msra.mxu0 0.0
      %1172 = vmatprep.subr.mxu0 0.0
      %1173 = vmatpush1.msra.mxu0 0.0
      %1174 = vmatprep.subr.mxu0 0.0
      %1175 = vmatpush1.msra.mxu0 0.0
      %1176 = vmatprep.subr.mxu0 0.0
      %1177 = vmatpush1.msra.mxu0 0.0
      %1178 = vmatprep.subr.mxu0 0.0
      %1179 = vmatpush1.msra.mxu0 0.0
      %1180 = vmatprep.subr.mxu0 0.0
      %1181 = vmatpush1.msra.mxu0 0.0
      %1182 = vmatprep.subr.mxu0 0.0
      %1183 = vmatpush1.msra.mxu0 0.0
      %1184 = vmatprep.subr.mxu0 0.0
      %1185 = vmatpush1.msra.mxu0 0.0
      %1186 = vmatprep.subr.mxu0 0.0
      %1187 = vmatpush1.msra.mxu0 0.0
      %1188 = vmatprep.subr.mxu0 0.0
      %1189 = vmatpush1.msra.mxu0 0.0
      %1190 = vmatprep.subr.mxu0 0.0
      %1191 = vmatpush1.msra.mxu0 0.0
      %1192 = vmatprep.subr.mxu0 0.0
      %1193 = vmatpush1.msra.mxu0 0.0
      %1194 = vmatprep.subr.mxu0 0.0
      %1195 = vmatpush1.msra.mxu0 0.0
      %1196 = vmatprep.subr.mxu0 0.0
      %1197 = vmatpush1.msra.mxu0 0.0
      %1198 = vmatprep.mubr.f32.mxu0 0.0
      %1199 = vmatmul.mubr.f32.gmra.mrb[0].mxu0 %v1070
      %v1200 = vpop.f32.mrb[0].mxu0
      %v1201 = vadd.f32 0.0, %v1200
      %v1202 = vpop.f32.mrb[0].mxu0
      %1203 = vmatprep.mubr.f32.mxu0 0.0
      %1204 = vmatmul.mubr.f32.gmra.mrb[0].mxu0 %v1072
      %v1205 = vpop.f32.mrb[0].mxu0
      %v1206 = vadd.f32 0.0, %v1205
      %v1207 = vpop.f32.mrb[0].mxu0
      %1208 = vmatprep.mubr.f32.mxu0 0.0
      %1209 = vmatmul.mubr.f32.gmra.mrb[0].mxu0 %v1074
      %v1210 = vpop.f32.mrb[0].mxu0
      %v1211 = vadd.f32 0.0, %v1210
      %v1212 = vpop.f32.mrb[0].mxu0
      %1213 = vmatprep.mubr.f32.mxu0 0.0
      %1214 = vmatmul.mubr.f32.gmra.mrb[0].mxu0 %v1076
      %v1215 = vpop.f32.mrb[0].mxu0
      %v1216 = vadd.f32 0.0, %v1215
      %v1217 = vpop.f32.mrb[0].mxu0
      %1218 = vmatprep.mubr.f32.mxu0 0.0
      %1219 = vmatmul.mubr.f32.gmra.mrb[0].mxu0 %v1078
      %v1220 = vpop.f32.mrb[0].mxu0
      %v1221 = vadd.f32 0.0, %v1220
      %v1222 = vpop.f32.mrb[0].mxu0
      %1223 = vmatprep.mubr.f32.mxu0 0.0
      %1224 = vmatmul.mubr.f32.gmra.mrb[0].mxu0 %v1080
      %v1225 = vpop.f32.mrb[0].mxu0
      %v1226 = vadd.f32 0.0, %v1225
      %v1227 = vpop.f32.mrb[0].mxu0
      %1228 = vmatprep.mubr.f32.mxu0 0.0
      %1229 = vmatmul.mubr.f32.gmra.mrb[0].mxu0 %v1082
      %v1230 = vpop.f32.mrb[0].mxu0
      %v1231 = vadd.f32 0.0, %v1230
      %v1232 = vpop.f32.mrb[0].mxu0
      %1233 = vmatprep.mubr.f32.mxu0 0.0
      %1234 = vmatmul.mubr.f32.gmra.mrb[0].mxu0 %v1084
      %v1235 = vpop.f32.mrb[0].mxu0
      %v1236 = vadd.f32 0.0, %v1235
      %v1237 = vpop.f32.mrb[0].mxu0
      %1238 = vmatprep.mubr.f32.mxu0 0.0
      %1239 = vmatmul.mubr.f32.gmra.mrb[0].mxu0 %v1086
      %v1240 = vpop.f32.mrb[0].mxu0
      %v1241 = vadd.f32 0.0, %v1240
      %v1242 = vpop.f32.mrb[0].mxu0
      %1243 = vmatprep.mubr.f32.mxu0 0.0
      %1244 = vmatmul.mubr.f32.gmra.mrb[0].mxu0 %v1088
      %v1245 = vpop.f32.mrb[0].mxu0
      %v1246 = vadd.f32 0.0, %v1245
      %v1247 = vpop.f32.mrb[0].mxu0
      %1248 = vmatprep.mubr.f32.mxu0 0.0
      %1249 = vmatmul.mubr.f32.gmra.mrb[0].mxu0 %v1090
      %v1250 = vpop.f32.mrb[0].mxu0
      %v1251 = vadd.f32 0.0, %v1250
      %v1252 = vpop.f32.mrb[0].mxu0
      %1253 = vmatprep.mubr.f32.mxu0 0.0
      %1254 = vmatmul.mubr.f32.gmra.mrb[0].mxu0 %v1092
      %v1255 = vpop.f32.mrb[0].mxu0
      %v1256 = vadd.f32 0.0, %v1255
      %v1257 = vpop.f32.mrb[0].mxu0
      %1258 = vmatprep.mubr.f32.mxu0 0.0
      %1259 = vmatmul.mubr.f32.gmra.mrb[0].mxu0 %v1094
      %v1260 = vpop.f32.mrb[0].mxu0
      %v1261 = vadd.f32 0.0, %v1260
      %v1262 = vpop.f32.mrb[0].mxu0
      %1263 = vmatprep.mubr.f32.mxu0 0.0
      %1264 = vmatmul.mubr.f32.gmra.mrb[0].mxu0 %v1096
      %v1265 = vpop.f32.mrb[0].mxu0
      %v1266 = vadd.f32 0.0, %v1265
      %v1267 = vpop.f32.mrb[0].mxu0
      %1268 = vmatprep.mubr.f32.mxu0 0.0
      %1269 = vmatmul.mubr.f32.gmra.mrb[0].mxu0 %v1098
      %v1270 = vpop.f32.mrb[0].mxu0
      %v1271 = vadd.f32 0.0, %v1270
      %v1272 = vpop.f32.mrb[0].mxu0
      %1273 = vmatprep.mubr.f32.mxu0 0.0
      %1274 = vmatmul.mubr.f32.gmra.mrb[0].mxu0 %v1100
      %v1275 = vpop.f32.mrb[0].mxu0
      %v1276 = vadd.f32 0.0, %v1275
      %v1277 = vpop.f32.mrb[0].mxu0
      %1278 = vmatprep.mubr.f32.mxu0 0.0
      %1279 = vmatmul.mubr.f32.gmra.mrb[0].mxu0 %v1102
      %v1280 = vpop.f32.mrb[0].mxu0
      %v1281 = vadd.f32 0.0, %v1280
      %v1282 = vpop.f32.mrb[0].mxu0
      %1283 = vmatprep.mubr.f32.mxu0 0.0
      %1284 = vmatmul.mubr.f32.gmra.mrb[0].mxu0 %v1104
      %v1285 = vpop.f32.mrb[0].mxu0
      %v1286 = vadd.f32 0.0, %v1285
      %v1287 = vpop.f32.mrb[0].mxu0
      %1288 = vmatprep.mubr.f32.mxu0 0.0
      %1289 = vmatmul.mubr.f32.gmra.mrb[0].mxu0 %v1106
      %v1290 = vpop.f32.mrb[0].mxu0
      %v1291 = vadd.f32 0.0, %v1290
      %v1292 = vpop.f32.mrb[0].mxu0
      %1293 = vmatprep.mubr.f32.mxu0 0.0
      %1294 = vmatmul.mubr.f32.gmra.mrb[0].mxu0 %v1108
      %v1295 = vpop.f32.mrb[0].mxu0
      %v1296 = vadd.f32 0.0, %v1295
      %v1297 = vpop.f32.mrb[0].mxu0
      %1298 = vmatprep.mubr.f32.mxu0 0.0
      %1299 = vmatmul.mubr.f32.gmra.mrb[0].mxu0 %v1110
      %v1300 = vpop.f32.mrb[0].mxu0
      %v1301 = vadd.f32 0.0, %v1300
      %v1302 = vpop.f32.mrb[0].mxu0
      %1303 = vmatprep.mubr.f32.mxu0 0.0
      %1304 = vmatmul.mubr.f32.gmra.mrb[0].mxu0 %v1112
      %v1305 = vpop.f32.mrb[0].mxu0
      %v1306 = vadd.f32 0.0, %v1305
      %v1307 = vpop.f32.mrb[0].mxu0
      %1308 = vmatprep.mubr.f32.mxu0 0.0
      %1309 = vmatmul.mubr.f32.gmra.mrb[0].mxu0 %v1114
      %v1310 = vpop.f32.mrb[0].mxu0
      %v1311 = vadd.f32 0.0, %v1310
      %v1312 = vpop.f32.mrb[0].mxu0
      %1313 = vmatprep.mubr.f32.mxu0 0.0
      %1314 = vmatmul.mubr.f32.gmra.mrb[0].mxu0 %v1116
      %v1315 = vpop.f32.mrb[0].mxu0
      %v1316 = vadd.f32 0.0, %v1315
      %v1317 = vpop.f32.mrb[0].mxu0
      %1318 = vmatprep.mubr.f32.mxu0 0.0
      %1319 = vmatmul.mubr.f32.gmra.mrb[0].mxu0 %v1118
      %v1320 = vpop.f32.mrb[0].mxu0
      %v1321 = vadd.f32 0.0, %v1320
      %v1322 = vpop.f32.mrb[0].mxu0
      %1323 = vmatprep.mubr.f32.mxu0 0.0
      %1324 = vmatmul.mubr.f32.gmra.mrb[0].mxu0 %v1120
      %v1325 = vpop.f32.mrb[0].mxu0
      %v1326 = vadd.f32 0.0, %v1325
      %v1327 = vpop.f32.mrb[0].mxu0
      %1328 = vmatprep.mubr.f32.mxu0 0.0
      %1329 = vmatmul.mubr.f32.gmra.mrb[0].mxu0 %v1122
      %v1330 = vpop.f32.mrb[0].mxu0
      %v1331 = vadd.f32 0.0, %v1330
      %v1332 = vpop.f32.mrb[0].mxu0
      %1333 = vmatprep.mubr.f32.mxu0 0.0
      %1334 = vmatmul.mubr.f32.gmra.mrb[0].mxu0 %v1124
      %v1335 = vpop.f32.mrb[0].mxu0
      %v1336 = vadd.f32 0.0, %v1335
      %v1337 = vpop.f32.mrb[0].mxu0
      %1338 = vmatprep.mubr.f32.mxu0 0.0
      %1339 = vmatmul.mubr.f32.gmra.mrb[0].mxu0 %v1126
      %v1340 = vpop.f32.mrb[0].mxu0
      %v1341 = vadd.f32 0.0, %v1340
      %v1342 = vpop.f32.mrb[0].mxu0
      %1343 = vmatprep.mubr.f32.mxu0 0.0
      %1344 = vmatmul.mubr.f32.gmra.mrb[0].mxu0 %v1128
      %v1345 = vpop.f32.mrb[0].mxu0
      %v1346 = vadd.f32 0.0, %v1345
      %v1347 = vpop.f32.mrb[0].mxu0
      %1348 = vmatprep.mubr.f32.mxu0 0.0
      %1349 = vmatmul.mubr.f32.gmra.mrb[0].mxu0 %v1130
      %v1350 = vpop.f32.mrb[0].mxu0
      %v1351 = vadd.f32 0.0, %v1350
      %v1352 = vpop.f32.mrb[0].mxu0
      %1353 = vmatprep.mubr.f32.mxu0 0.0
      %1354 = vmatmul.mubr.f32.gmra.mrb[0].mxu0 %v1132
      %v1355 = vpop.f32.mrb[0].mxu0
      %v1356 = vadd.f32 0.0, %v1355
      %v1357 = vpop.f32.mrb[0].mxu0
      %1358 = vdwg.mxu0
      %v1359 = vadd.f32 %v829, %v1201
      %v1360 = vadd.f32 %v834, %v1206
      %v1361 = vadd.f32 %v839, %v1211
      %v1362 = vadd.f32 %v844, %v1216
      %v1363 = vadd.f32 %v849, %v1221
      %v1364 = vadd.f32 %v854, %v1226
      %v1365 = vadd.f32 %v859, %v1231
      %v1366 = vadd.f32 %v864, %v1236
      %v1367 = vadd.f32 %v869, %v1241
      %v1368 = vadd.f32 %v874, %v1246
      %v1369 = vadd.f32 %v879, %v1251
      %v1370 = vadd.f32 %v884, %v1256
      %v1371 = vadd.f32 %v889, %v1261
      %v1372 = vadd.f32 %v894, %v1266
      %v1373 = vadd.f32 %v899, %v1271
      %v1374 = vadd.f32 %v904, %v1276
      %v1375 = vadd.f32 %v909, %v1281
      %v1376 = vadd.f32 %v914, %v1286
      %v1377 = vadd.f32 %v919, %v1291
      %v1378 = vadd.f32 %v924, %v1296
      %v1379 = vadd.f32 %v929, %v1301
      %v1380 = vadd.f32 %v934, %v1306
      %v1381 = vadd.f32 %v939, %v1311
      %v1382 = vadd.f32 %v944, %v1316
      %v1383 = vadd.f32 %v949, %v1321
      %v1384 = vadd.f32 %v954, %v1326
      %v1385 = vadd.f32 %v959, %v1331
      %v1386 = vadd.f32 %v964, %v1336
      %v1387 = vadd.f32 %v969, %v1341
      %v1388 = vadd.f32 %v974, %v1346
      %v1389 = vadd.f32 %v979, %v1351
      %v1390 = vadd.f32 %v984, %v1356
      %s1391 = scalar_lea.vmem %s210, 24
      %v1392 = vld [vmem:[%s1391] sm:$0xff]
      %v1394 = vsel %vm408, %v270, 0
      %v1397 = vsel %vm408, %v271, 0
      %1399 = vmatprep.subr.mxu0 0.0
      %1400 = vmatpush1.msra.mxu0 %v1392
      %1401 = vmatprep.subr.mxu0 0.0
      %1402 = vmatpush1.msra.mxu0 0.0
      %1403 = vmatprep.subr.mxu0 0.0
      %1404 = vmatpush1.msra.mxu0 0.0
      %1405 = vmatprep.subr.mxu0 0.0
      %1406 = vmatpush1.msra.mxu0 0.0
      %1407 = vmatprep.subr.mxu0 0.0
      %1408 = vmatpush1.msra.mxu0 0.0
      %1409 = vmatprep.subr.mxu0 0.0
      %1410 = vmatpush1.msra.mxu0 0.0
      %1411 = vmatprep.subr.mxu0 0.0
      %1412 = vmatpush1.msra.mxu0 0.0
      %1413 = vmatprep.subr.mxu0 0.0
      %1414 = vmatpush1.msra.mxu0 0.0
      %1415 = vmatprep.subr.mxu0 0.0
      %1416 = vmatpush1.msra.mxu0 0.0
      %1417 = vmatprep.subr.mxu0 0.0
      %1418 = vmatpush1.msra.mxu0 0.0
      %1419 = vmatprep.subr.mxu0 0.0
      %1420 = vmatpush1.msra.mxu0 0.0
      %1421 = vmatprep.subr.mxu0 0.0
      %1422 = vmatpush1.msra.mxu0 0.0
      %1423 = vmatprep.subr.mxu0 0.0
      %1424 = vmatpush1.msra.mxu0 0.0
      %1425 = vmatprep.subr.mxu0 0.0
      %1426 = vmatpush1.msra.mxu0 0.0
      %1427 = vmatprep.subr.mxu0 0.0
      %1428 = vmatpush1.msra.mxu0 0.0
      %1429 = vmatprep.subr.mxu0 0.0
      %1430 = vmatpush1.msra.mxu0 0.0
      %1431 = vmatprep.subr.mxu0 0.0
      %1432 = vmatpush1.msra.mxu0 0.0
      %1433 = vmatprep.subr.mxu0 0.0
      %1434 = vmatpush1.msra.mxu0 0.0
      %1435 = vmatprep.subr.mxu0 0.0
      %1436 = vmatpush1.msra.mxu0 0.0
      %1437 = vmatprep.subr.mxu0 0.0
      %1438 = vmatpush1.msra.mxu0 0.0
      %1439 = vmatprep.subr.mxu0 0.0
      %1440 = vmatpush1.msra.mxu0 0.0
      %1441 = vmatprep.subr.mxu0 0.0
      %1442 = vmatpush1.msra.mxu0 0.0
      %1443 = vmatprep.subr.mxu0 0.0
      %1444 = vmatpush1.msra.mxu0 0.0
      %1445 = vmatprep.subr.mxu0 0.0
      %1446 = vmatpush1.msra.mxu0 0.0
      %1447 = vmatprep.subr.mxu0 0.0
      %1448 = vmatpush1.msra.mxu0 0.0
      %1449 = vmatprep.subr.mxu0 0.0
      %1450 = vmatpush1.msra.mxu0 0.0
      %1451 = vmatprep.subr.mxu0 0.0
      %1452 = vmatpush1.msra.mxu0 0.0
      %1453 = vmatprep.subr.mxu0 0.0
      %1454 = vmatpush1.msra.mxu0 0.0
      %1455 = vmatprep.subr.mxu0 0.0
      %1456 = vmatpush1.msra.mxu0 0.0
      %1457 = vmatprep.subr.mxu0 0.0
      %1458 = vmatpush1.msra.mxu0 0.0
      %1459 = vmatprep.subr.mxu0 0.0
      %1460 = vmatpush1.msra.mxu0 0.0
      %1461 = vmatprep.subr.mxu0 0.0
      %1462 = vmatpush1.msra.mxu0 0.0
      %1463 = vmatprep.mubr.f32.mxu0 0.0
      %1464 = vmatmul.mubr.f32.gmra.mrb[0].mxu0 %v702
      %v1465 = vpop.f32.mrb[0].mxu0
      %v1466 = vadd.f32 0.0, %v1465
      %v1467 = vpop.f32.mrb[0].mxu0
      %1468 = vmatprep.mubr.f32.mxu0 0.0
      %1469 = vmatmul.mubr.f32.gmra.mrb[0].mxu0 %v704
      %v1470 = vpop.f32.mrb[0].mxu0
      %v1471 = vadd.f32 0.0, %v1470
      %v1472 = vpop.f32.mrb[0].mxu0
      %1473 = vmatprep.mubr.f32.mxu0 0.0
      %1474 = vmatmul.mubr.f32.gmra.mrb[0].mxu0 %v706
      %v1475 = vpop.f32.mrb[0].mxu0
      %v1476 = vadd.f32 0.0, %v1475
      %v1477 = vpop.f32.mrb[0].mxu0
      %1478 = vmatprep.mubr.f32.mxu0 0.0
      %1479 = vmatmul.mubr.f32.gmra.mrb[0].mxu0 %v708
      %v1480 = vpop.f32.mrb[0].mxu0
      %v1481 = vadd.f32 0.0, %v1480
      %v1482 = vpop.f32.mrb[0].mxu0
      %1483 = vmatprep.mubr.f32.mxu0 0.0
      %1484 = vmatmul.mubr.f32.gmra.mrb[0].mxu0 %v710
      %v1485 = vpop.f32.mrb[0].mxu0
      %v1486 = vadd.f32 0.0, %v1485
      %v1487 = vpop.f32.mrb[0].mxu0
      %1488 = vmatprep.mubr.f32.mxu0 0.0
      %1489 = vmatmul.mubr.f32.gmra.mrb[0].mxu0 %v712
      %v1490 = vpop.f32.mrb[0].mxu0
      %v1491 = vadd.f32 0.0, %v1490
      %v1492 = vpop.f32.mrb[0].mxu0
      %1493 = vmatprep.mubr.f32.mxu0 0.0
      %1494 = vmatmul.mubr.f32.gmra.mrb[0].mxu0 %v714
      %v1495 = vpop.f32.mrb[0].mxu0
      %v1496 = vadd.f32 0.0, %v1495
      %v1497 = vpop.f32.mrb[0].mxu0
      %1498 = vmatprep.mubr.f32.mxu0 0.0
      %1499 = vmatmul.mubr.f32.gmra.mrb[0].mxu0 %v716
      %v1500 = vpop.f32.mrb[0].mxu0
      %v1501 = vadd.f32 0.0, %v1500
      %v1502 = vpop.f32.mrb[0].mxu0
      %1503 = vmatprep.mubr.f32.mxu0 0.0
      %1504 = vmatmul.mubr.f32.gmra.mrb[0].mxu0 %v718
      %v1505 = vpop.f32.mrb[0].mxu0
      %v1506 = vadd.f32 0.0, %v1505
      %v1507 = vpop.f32.mrb[0].mxu0
      %1508 = vmatprep.mubr.f32.mxu0 0.0
      %1509 = vmatmul.mubr.f32.gmra.mrb[0].mxu0 %v720
      %v1510 = vpop.f32.mrb[0].mxu0
      %v1511 = vadd.f32 0.0, %v1510
      %v1512 = vpop.f32.mrb[0].mxu0
      %1513 = vmatprep.mubr.f32.mxu0 0.0
      %1514 = vmatmul.mubr.f32.gmra.mrb[0].mxu0 %v722
      %v1515 = vpop.f32.mrb[0].mxu0
      %v1516 = vadd.f32 0.0, %v1515
      %v1517 = vpop.f32.mrb[0].mxu0
      %1518 = vmatprep.mubr.f32.mxu0 0.0
      %1519 = vmatmul.mubr.f32.gmra.mrb[0].mxu0 %v724
      %v1520 = vpop.f32.mrb[0].mxu0
      %v1521 = vadd.f32 0.0, %v1520
      %v1522 = vpop.f32.mrb[0].mxu0
      %1523 = vmatprep.mubr.f32.mxu0 0.0
      %1524 = vmatmul.mubr.f32.gmra.mrb[0].mxu0 %v726
      %v1525 = vpop.f32.mrb[0].mxu0
      %v1526 = vadd.f32 0.0, %v1525
      %v1527 = vpop.f32.mrb[0].mxu0
      %1528 = vmatprep.mubr.f32.mxu0 0.0
      %1529 = vmatmul.mubr.f32.gmra.mrb[0].mxu0 %v728
      %v1530 = vpop.f32.mrb[0].mxu0
      %v1531 = vadd.f32 0.0, %v1530
      %v1532 = vpop.f32.mrb[0].mxu0
      %1533 = vmatprep.mubr.f32.mxu0 0.0
      %1534 = vmatmul.mubr.f32.gmra.mrb[0].mxu0 %v730
      %v1535 = vpop.f32.mrb[0].mxu0
      %v1536 = vadd.f32 0.0, %v1535
      %v1537 = vpop.f32.mrb[0].mxu0
      %1538 = vmatprep.mubr.f32.mxu0 0.0
      %1539 = vmatmul.mubr.f32.gmra.mrb[0].mxu0 %v732
      %v1540 = vpop.f32.mrb[0].mxu0
      %v1541 = vadd.f32 0.0, %v1540
      %v1542 = vpop.f32.mrb[0].mxu0
      %1543 = vmatprep.mubr.f32.mxu0 0.0
      %1544 = vmatmul.mubr.f32.gmra.mrb[0].mxu0 %v734
      %v1545 = vpop.f32.mrb[0].mxu0
      %v1546 = vadd.f32 0.0, %v1545
      %v1547 = vpop.f32.mrb[0].mxu0
      %1548 = vmatprep.mubr.f32.mxu0 0.0
      %1549 = vmatmul.mubr.f32.gmra.mrb[0].mxu0 %v736
      %v1550 = vpop.f32.mrb[0].mxu0
      %v1551 = vadd.f32 0.0, %v1550
      %v1552 = vpop.f32.mrb[0].mxu0
      %1553 = vmatprep.mubr.f32.mxu0 0.0
      %1554 = vmatmul.mubr.f32.gmra.mrb[0].mxu0 %v738
      %v1555 = vpop.f32.mrb[0].mxu0
      %v1556 = vadd.f32 0.0, %v1555
      %v1557 = vpop.f32.mrb[0].mxu0
      %1558 = vmatprep.mubr.f32.mxu0 0.0
      %1559 = vmatmul.mubr.f32.gmra.mrb[0].mxu0 %v740
      %v1560 = vpop.f32.mrb[0].mxu0
      %v1561 = vadd.f32 0.0, %v1560
      %v1562 = vpop.f32.mrb[0].mxu0
      %1563 = vmatprep.mubr.f32.mxu0 0.0
      %1564 = vmatmul.mubr.f32.gmra.mrb[0].mxu0 %v742
      %v1565 = vpop.f32.mrb[0].mxu0
      %v1566 = vadd.f32 0.0, %v1565
      %v1567 = vpop.f32.mrb[0].mxu0
      %1568 = vmatprep.mubr.f32.mxu0 0.0
      %1569 = vmatmul.mubr.f32.gmra.mrb[0].mxu0 %v744
      %v1570 = vpop.f32.mrb[0].mxu0
      %v1571 = vadd.f32 0.0, %v1570
      %v1572 = vpop.f32.mrb[0].mxu0
      %1573 = vmatprep.mubr.f32.mxu0 0.0
      %1574 = vmatmul.mubr.f32.gmra.mrb[0].mxu0 %v746
      %v1575 = vpop.f32.mrb[0].mxu0
      %v1576 = vadd.f32 0.0, %v1575
      %v1577 = vpop.f32.mrb[0].mxu0
      %1578 = vmatprep.mubr.f32.mxu0 0.0
      %1579 = vmatmul.mubr.f32.gmra.mrb[0].mxu0 %v748
      %v1580 = vpop.f32.mrb[0].mxu0
      %v1581 = vadd.f32 0.0, %v1580
      %v1582 = vpop.f32.mrb[0].mxu0
      %1583 = vmatprep.mubr.f32.mxu0 0.0
      %1584 = vmatmul.mubr.f32.gmra.mrb[0].mxu0 %v750
      %v1585 = vpop.f32.mrb[0].mxu0
      %v1586 = vadd.f32 0.0, %v1585
      %v1587 = vpop.f32.mrb[0].mxu0
      %1588 = vmatprep.mubr.f32.mxu0 0.0
      %1589 = vmatmul.mubr.f32.gmra.mrb[0].mxu0 %v752
      %v1590 = vpop.f32.mrb[0].mxu0
      %v1591 = vadd.f32 0.0, %v1590
      %v1592 = vpop.f32.mrb[0].mxu0
      %1593 = vmatprep.mubr.f32.mxu0 0.0
      %1594 = vmatmul.mubr.f32.gmra.mrb[0].mxu0 %v754
      %v1595 = vpop.f32.mrb[0].mxu0
      %v1596 = vadd.f32 0.0, %v1595
      %v1597 = vpop.f32.mrb[0].mxu0
      %1598 = vmatprep.mubr.f32.mxu0 0.0
      %1599 = vmatmul.mubr.f32.gmra.mrb[0].mxu0 %v756
      %v1600 = vpop.f32.mrb[0].mxu0
      %v1601 = vadd.f32 0.0, %v1600
      %v1602 = vpop.f32.mrb[0].mxu0
      %1603 = vmatprep.mubr.f32.mxu0 0.0
      %1604 = vmatmul.mubr.f32.gmra.mrb[0].mxu0 %v758
      %v1605 = vpop.f32.mrb[0].mxu0
      %v1606 = vadd.f32 0.0, %v1605
      %v1607 = vpop.f32.mrb[0].mxu0
      %1608 = vmatprep.mubr.f32.mxu0 0.0
      %1609 = vmatmul.mubr.f32.gmra.mrb[0].mxu0 %v760
      %v1610 = vpop.f32.mrb[0].mxu0
      %v1611 = vadd.f32 0.0, %v1610
      %v1612 = vpop.f32.mrb[0].mxu0
      %1613 = vmatprep.mubr.f32.mxu0 0.0
      %1614 = vmatmul.mubr.f32.gmra.mrb[0].mxu0 %v1394
      %v1615 = vpop.f32.mrb[0].mxu0
      %v1616 = vadd.f32 0.0, %v1615
      %v1617 = vpop.f32.mrb[0].mxu0
      %1618 = vmatprep.mubr.f32.mxu0 0.0
      %1619 = vmatmul.mubr.f32.gmra.mrb[0].mxu0 %v1397
      %v1620 = vpop.f32.mrb[0].mxu0
      %v1621 = vadd.f32 0.0, %v1620
      %v1622 = vpop.f32.mrb[0].mxu0
      %1623 = vdwg.mxu0
      %v1624 = vadd.f32 %v1359, %v1466
      %v1625 = vadd.f32 %v1360, %v1471
      %v1626 = vadd.f32 %v1361, %v1476
      %v1627 = vadd.f32 %v1362, %v1481
      %v1628 = vadd.f32 %v1363, %v1486
      %v1629 = vadd.f32 %v1364, %v1491
      %v1630 = vadd.f32 %v1365, %v1496
      %v1631 = vadd.f32 %v1366, %v1501
      %v1632 = vadd.f32 %v1367, %v1506
      %v1633 = vadd.f32 %v1368, %v1511
      %v1634 = vadd.f32 %v1369, %v1516
      %v1635 = vadd.f32 %v1370, %v1521
      %v1636 = vadd.f32 %v1371, %v1526
      %v1637 = vadd.f32 %v1372, %v1531
      %v1638 = vadd.f32 %v1373, %v1536
      %v1639 = vadd.f32 %v1374, %v1541
      %v1640 = vadd.f32 %v1375, %v1546
      %v1641 = vadd.f32 %v1376, %v1551
      %v1642 = vadd.f32 %v1377, %v1556
      %v1643 = vadd.f32 %v1378, %v1561
      %v1644 = vadd.f32 %v1379, %v1566
      %v1645 = vadd.f32 %v1380, %v1571
      %v1646 = vadd.f32 %v1381, %v1576
      %v1647 = vadd.f32 %v1382, %v1581
      %v1648 = vadd.f32 %v1383, %v1586
      %v1649 = vadd.f32 %v1384, %v1591
      %v1650 = vadd.f32 %v1385, %v1596
      %v1651 = vadd.f32 %v1386, %v1601
      %v1652 = vadd.f32 %v1387, %v1606
      %v1653 = vadd.f32 %v1388, %v1611
      %v1654 = vadd.f32 %v1389, %v1616
      %v1655 = vadd.f32 %v1390, %v1621
      %v1657 = vrot.slane %v270, 1
      %v1658 = vrot.slane %v271, 1
      %v1659 = vsel %vm325, %v1657, %v1658
      %v1660 = vrot.slane %v272, 1
      %v1661 = vsel %vm325, %v1658, %v1660
      %s1662 = scalar_lea.vmem %s210, 32
      %v1663 = vld [vmem:[%s1662] sm:$0xff]
      %v1664 = vsel %vm408, %v1659, 0
      %v1666 = vsel %vm408, %v1661, 0
      %1668 = vmatprep.subr.mxu0 0.0
      %1669 = vmatpush1.msra.mxu0 %v1663
      %1670 = vmatprep.subr.mxu0 0.0
      %1671 = vmatpush1.msra.mxu0 0.0
      %1672 = vmatprep.subr.mxu0 0.0
      %1673 = vmatpush1.msra.mxu0 0.0
      %1674 = vmatprep.subr.mxu0 0.0
      %1675 = vmatpush1.msra.mxu0 0.0
      %1676 = vmatprep.subr.mxu0 0.0
      %1677 = vmatpush1.msra.mxu0 0.0
      %1678 = vmatprep.subr.mxu0 0.0
      %1679 = vmatpush1.msra.mxu0 0.0
      %1680 = vmatprep.subr.mxu0 0.0
      %1681 = vmatpush1.msra.mxu0 0.0
      %1682 = vmatprep.subr.mxu0 0.0
      %1683 = vmatpush1.msra.mxu0 0.0
      %1684 = vmatprep.subr.mxu0 0.0
      %1685 = vmatpush1.msra.mxu0 0.0
      %1686 = vmatprep.subr.mxu0 0.0
      %1687 = vmatpush1.msra.mxu0 0.0
      %1688 = vmatprep.subr.mxu0 0.0
      %1689 = vmatpush1.msra.mxu0 0.0
      %1690 = vmatprep.subr.mxu0 0.0
      %1691 = vmatpush1.msra.mxu0 0.0
      %1692 = vmatprep.subr.mxu0 0.0
      %1693 = vmatpush1.msra.mxu0 0.0
      %1694 = vmatprep.subr.mxu0 0.0
      %1695 = vmatpush1.msra.mxu0 0.0
      %1696 = vmatprep.subr.mxu0 0.0
      %1697 = vmatpush1.msra.mxu0 0.0
      %1698 = vmatprep.subr.mxu0 0.0
      %1699 = vmatpush1.msra.mxu0 0.0
      %1700 = vmatprep.subr.mxu0 0.0
      %1701 = vmatpush1.msra.mxu0 0.0
      %1702 = vmatprep.subr.mxu0 0.0
      %1703 = vmatpush1.msra.mxu0 0.0
      %1704 = vmatprep.subr.mxu0 0.0
      %1705 = vmatpush1.msra.mxu0 0.0
      %1706 = vmatprep.subr.mxu0 0.0
      %1707 = vmatpush1.msra.mxu0 0.0
      %1708 = vmatprep.subr.mxu0 0.0
      %1709 = vmatpush1.msra.mxu0 0.0
      %1710 = vmatprep.subr.mxu0 0.0
      %1711 = vmatpush1.msra.mxu0 0.0
      %1712 = vmatprep.subr.mxu0 0.0
      %1713 = vmatpush1.msra.mxu0 0.0
      %1714 = vmatprep.subr.mxu0 0.0
      %1715 = vmatpush1.msra.mxu0 0.0
      %1716 = vmatprep.subr.mxu0 0.0
      %1717 = vmatpush1.msra.mxu0 0.0
      %1718 = vmatprep.subr.mxu0 0.0
      %1719 = vmatpush1.msra.mxu0 0.0
      %1720 = vmatprep.subr.mxu0 0.0
      %1721 = vmatpush1.msra.mxu0 0.0
      %1722 = vmatprep.subr.mxu0 0.0
      %1723 = vmatpush1.msra.mxu0 0.0
      %1724 = vmatprep.subr.mxu0 0.0
      %1725 = vmatpush1.msra.mxu0 0.0
      %1726 = vmatprep.subr.mxu0 0.0
      %1727 = vmatpush1.msra.mxu0 0.0
      %1728 = vmatprep.subr.mxu0 0.0
      %1729 = vmatpush1.msra.mxu0 0.0
      %1730 = vmatprep.subr.mxu0 0.0
      %1731 = vmatpush1.msra.mxu0 0.0
      %1732 = vmatprep.mubr.f32.mxu0 0.0
      %1733 = vmatmul.mubr.f32.gmra.mrb[0].mxu0 %v413
      %v1734 = vpop.f32.mrb[0].mxu0
      %v1735 = vadd.f32 0.0, %v1734
      %v1736 = vpop.f32.mrb[0].mxu0
      %1737 = vmatprep.mubr.f32.mxu0 0.0
      %1738 = vmatmul.mubr.f32.gmra.mrb[0].mxu0 %v415
      %v1739 = vpop.f32.mrb[0].mxu0
      %v1740 = vadd.f32 0.0, %v1739
      %v1741 = vpop.f32.mrb[0].mxu0
      %1742 = vmatprep.mubr.f32.mxu0 0.0
      %1743 = vmatmul.mubr.f32.gmra.mrb[0].mxu0 %v417
      %v1744 = vpop.f32.mrb[0].mxu0
      %v1745 = vadd.f32 0.0, %v1744
      %v1746 = vpop.f32.mrb[0].mxu0
      %1747 = vmatprep.mubr.f32.mxu0 0.0
      %1748 = vmatmul.mubr.f32.gmra.mrb[0].mxu0 %v419
      %v1749 = vpop.f32.mrb[0].mxu0
      %v1750 = vadd.f32 0.0, %v1749
      %v1751 = vpop.f32.mrb[0].mxu0
      %1752 = vmatprep.mubr.f32.mxu0 0.0
      %1753 = vmatmul.mubr.f32.gmra.mrb[0].mxu0 %v421
      %v1754 = vpop.f32.mrb[0].mxu0
      %v1755 = vadd.f32 0.0, %v1754
      %v1756 = vpop.f32.mrb[0].mxu0
      %1757 = vmatprep.mubr.f32.mxu0 0.0
      %1758 = vmatmul.mubr.f32.gmra.mrb[0].mxu0 %v423
      %v1759 = vpop.f32.mrb[0].mxu0
      %v1760 = vadd.f32 0.0, %v1759
      %v1761 = vpop.f32.mrb[0].mxu0
      %1762 = vmatprep.mubr.f32.mxu0 0.0
      %1763 = vmatmul.mubr.f32.gmra.mrb[0].mxu0 %v425
      %v1764 = vpop.f32.mrb[0].mxu0
      %v1765 = vadd.f32 0.0, %v1764
      %v1766 = vpop.f32.mrb[0].mxu0
      %1767 = vmatprep.mubr.f32.mxu0 0.0
      %1768 = vmatmul.mubr.f32.gmra.mrb[0].mxu0 %v427
      %v1769 = vpop.f32.mrb[0].mxu0
      %v1770 = vadd.f32 0.0, %v1769
      %v1771 = vpop.f32.mrb[0].mxu0
      %1772 = vmatprep.mubr.f32.mxu0 0.0
      %1773 = vmatmul.mubr.f32.gmra.mrb[0].mxu0 %v429
      %v1774 = vpop.f32.mrb[0].mxu0
      %v1775 = vadd.f32 0.0, %v1774
      %v1776 = vpop.f32.mrb[0].mxu0
      %1777 = vmatprep.mubr.f32.mxu0 0.0
      %1778 = vmatmul.mubr.f32.gmra.mrb[0].mxu0 %v431
      %v1779 = vpop.f32.mrb[0].mxu0
      %v1780 = vadd.f32 0.0, %v1779
      %v1781 = vpop.f32.mrb[0].mxu0
      %1782 = vmatprep.mubr.f32.mxu0 0.0
      %1783 = vmatmul.mubr.f32.gmra.mrb[0].mxu0 %v433
      %v1784 = vpop.f32.mrb[0].mxu0
      %v1785 = vadd.f32 0.0, %v1784
      %v1786 = vpop.f32.mrb[0].mxu0
      %1787 = vmatprep.mubr.f32.mxu0 0.0
      %1788 = vmatmul.mubr.f32.gmra.mrb[0].mxu0 %v435
      %v1789 = vpop.f32.mrb[0].mxu0
      %v1790 = vadd.f32 0.0, %v1789
      %v1791 = vpop.f32.mrb[0].mxu0
      %1792 = vmatprep.mubr.f32.mxu0 0.0
      %1793 = vmatmul.mubr.f32.gmra.mrb[0].mxu0 %v437
      %v1794 = vpop.f32.mrb[0].mxu0
      %v1795 = vadd.f32 0.0, %v1794
      %v1796 = vpop.f32.mrb[0].mxu0
      %1797 = vmatprep.mubr.f32.mxu0 0.0
      %1798 = vmatmul.mubr.f32.gmra.mrb[0].mxu0 %v439
      %v1799 = vpop.f32.mrb[0].mxu0
      %v1800 = vadd.f32 0.0, %v1799
      %v1801 = vpop.f32.mrb[0].mxu0
      %1802 = vmatprep.mubr.f32.mxu0 0.0
      %1803 = vmatmul.mubr.f32.gmra.mrb[0].mxu0 %v441
      %v1804 = vpop.f32.mrb[0].mxu0
      %v1805 = vadd.f32 0.0, %v1804
      %v1806 = vpop.f32.mrb[0].mxu0
      %1807 = vmatprep.mubr.f32.mxu0 0.0
      %1808 = vmatmul.mubr.f32.gmra.mrb[0].mxu0 %v443
      %v1809 = vpop.f32.mrb[0].mxu0
      %v1810 = vadd.f32 0.0, %v1809
      %v1811 = vpop.f32.mrb[0].mxu0
      %1812 = vmatprep.mubr.f32.mxu0 0.0
      %1813 = vmatmul.mubr.f32.gmra.mrb[0].mxu0 %v445
      %v1814 = vpop.f32.mrb[0].mxu0
      %v1815 = vadd.f32 0.0, %v1814
      %v1816 = vpop.f32.mrb[0].mxu0
      %1817 = vmatprep.mubr.f32.mxu0 0.0
      %1818 = vmatmul.mubr.f32.gmra.mrb[0].mxu0 %v447
      %v1819 = vpop.f32.mrb[0].mxu0
      %v1820 = vadd.f32 0.0, %v1819
      %v1821 = vpop.f32.mrb[0].mxu0
      %1822 = vmatprep.mubr.f32.mxu0 0.0
      %1823 = vmatmul.mubr.f32.gmra.mrb[0].mxu0 %v449
      %v1824 = vpop.f32.mrb[0].mxu0
      %v1825 = vadd.f32 0.0, %v1824
      %v1826 = vpop.f32.mrb[0].mxu0
      %1827 = vmatprep.mubr.f32.mxu0 0.0
      %1828 = vmatmul.mubr.f32.gmra.mrb[0].mxu0 %v451
      %v1829 = vpop.f32.mrb[0].mxu0
      %v1830 = vadd.f32 0.0, %v1829
      %v1831 = vpop.f32.mrb[0].mxu0
      %1832 = vmatprep.mubr.f32.mxu0 0.0
      %1833 = vmatmul.mubr.f32.gmra.mrb[0].mxu0 %v453
      %v1834 = vpop.f32.mrb[0].mxu0
      %v1835 = vadd.f32 0.0, %v1834
      %v1836 = vpop.f32.mrb[0].mxu0
      %1837 = vmatprep.mubr.f32.mxu0 0.0
      %1838 = vmatmul.mubr.f32.gmra.mrb[0].mxu0 %v455
      %v1839 = vpop.f32.mrb[0].mxu0
      %v1840 = vadd.f32 0.0, %v1839
      %v1841 = vpop.f32.mrb[0].mxu0
      %1842 = vmatprep.mubr.f32.mxu0 0.0
      %1843 = vmatmul.mubr.f32.gmra.mrb[0].mxu0 %v457
      %v1844 = vpop.f32.mrb[0].mxu0
      %v1845 = vadd.f32 0.0, %v1844
      %v1846 = vpop.f32.mrb[0].mxu0
      %1847 = vmatprep.mubr.f32.mxu0 0.0
      %1848 = vmatmul.mubr.f32.gmra.mrb[0].mxu0 %v459
      %v1849 = vpop.f32.mrb[0].mxu0
      %v1850 = vadd.f32 0.0, %v1849
      %v1851 = vpop.f32.mrb[0].mxu0
      %1852 = vmatprep.mubr.f32.mxu0 0.0
      %1853 = vmatmul.mubr.f32.gmra.mrb[0].mxu0 %v461
      %v1854 = vpop.f32.mrb[0].mxu0
      %v1855 = vadd.f32 0.0, %v1854
      %v1856 = vpop.f32.mrb[0].mxu0
      %1857 = vmatprep.mubr.f32.mxu0 0.0
      %1858 = vmatmul.mubr.f32.gmra.mrb[0].mxu0 %v463
      %v1859 = vpop.f32.mrb[0].mxu0
      %v1860 = vadd.f32 0.0, %v1859
      %v1861 = vpop.f32.mrb[0].mxu0
      %1862 = vmatprep.mubr.f32.mxu0 0.0
      %1863 = vmatmul.mubr.f32.gmra.mrb[0].mxu0 %v465
      %v1864 = vpop.f32.mrb[0].mxu0
      %v1865 = vadd.f32 0.0, %v1864
      %v1866 = vpop.f32.mrb[0].mxu0
      %1867 = vmatprep.mubr.f32.mxu0 0.0
      %1868 = vmatmul.mubr.f32.gmra.mrb[0].mxu0 %v467
      %v1869 = vpop.f32.mrb[0].mxu0
      %v1870 = vadd.f32 0.0, %v1869
      %v1871 = vpop.f32.mrb[0].mxu0
      %1872 = vmatprep.mubr.f32.mxu0 0.0
      %1873 = vmatmul.mubr.f32.gmra.mrb[0].mxu0 %v469
      %v1874 = vpop.f32.mrb[0].mxu0
      %v1875 = vadd.f32 0.0, %v1874
      %v1876 = vpop.f32.mrb[0].mxu0
      %1877 = vmatprep.mubr.f32.mxu0 0.0
      %1878 = vmatmul.mubr.f32.gmra.mrb[0].mxu0 %v471
      %v1879 = vpop.f32.mrb[0].mxu0
      %v1880 = vadd.f32 0.0, %v1879
      %v1881 = vpop.f32.mrb[0].mxu0
      %1882 = vmatprep.mubr.f32.mxu0 0.0
      %1883 = vmatmul.mubr.f32.gmra.mrb[0].mxu0 %v1664
      %v1884 = vpop.f32.mrb[0].mxu0
      %v1885 = vadd.f32 0.0, %v1884
      %v1886 = vpop.f32.mrb[0].mxu0
      %1887 = vmatprep.mubr.f32.mxu0 0.0
      %1888 = vmatmul.mubr.f32.gmra.mrb[0].mxu0 %v1666
      %v1889 = vpop.f32.mrb[0].mxu0
      %v1890 = vadd.f32 0.0, %v1889
      %v1891 = vpop.f32.mrb[0].mxu0
      %1892 = vdwg.mxu0
      %v1893 = vadd.f32 %v1624, %v1735
      %v1894 = vadd.f32 %v1625, %v1740
      %v1895 = vadd.f32 %v1626, %v1745
      %v1896 = vadd.f32 %v1627, %v1750
      %v1897 = vadd.f32 %v1628, %v1755
      %v1898 = vadd.f32 %v1629, %v1760
      %v1899 = vadd.f32 %v1630, %v1765
      %v1900 = vadd.f32 %v1631, %v1770
      %v1901 = vadd.f32 %v1632, %v1775
      %v1902 = vadd.f32 %v1633, %v1780
      %v1903 = vadd.f32 %v1634, %v1785
      %v1904 = vadd.f32 %v1635, %v1790
      %v1905 = vadd.f32 %v1636, %v1795
      %v1906 = vadd.f32 %v1637, %v1800
      %v1907 = vadd.f32 %v1638, %v1805
      %v1908 = vadd.f32 %v1639, %v1810
      %v1909 = vadd.f32 %v1640, %v1815
      %v1910 = vadd.f32 %v1641, %v1820
      %v1911 = vadd.f32 %v1642, %v1825
      %v1912 = vadd.f32 %v1643, %v1830
      %v1913 = vadd.f32 %v1644, %v1835
      %v1914 = vadd.f32 %v1645, %v1840
      %v1915 = vadd.f32 %v1646, %v1845
      %v1916 = vadd.f32 %v1647, %v1850
      %v1917 = vadd.f32 %v1648, %v1855
      %v1918 = vadd.f32 %v1649, %v1860
      %v1919 = vadd.f32 %v1650, %v1865
      %v1920 = vadd.f32 %v1651, %v1870
      %v1921 = vadd.f32 %v1652, %v1875
      %v1922 = vadd.f32 %v1653, %v1880
      %v1923 = vadd.f32 %v1654, %v1885
      %v1924 = vadd.f32 %v1655, %v1890
      %v1925 = vrot.slane %v270, 2
      %v1926 = vrot.slane %v271, 2
      %v1927 = vsel %vm987, %v1925, %v1926
      %v1928 = vrot.slane %v272, 2
      %v1929 = vsel %vm987, %v1926, %v1928
      %s1930 = scalar_lea.vmem %s210, 40
      %v1931 = vld [vmem:[%s1930] sm:$0xff]
      %v1932 = vsel %vm408, %v1927, 0
      %v1934 = vsel %vm408, %v1929, 0
      %1936 = vmatprep.subr.mxu0 0.0
      %1937 = vmatpush1.msra.mxu0 %v1931
      %1938 = vmatprep.subr.mxu0 0.0
      %1939 = vmatpush1.msra.mxu0 0.0
      %1940 = vmatprep.subr.mxu0 0.0
      %1941 = vmatpush1.msra.mxu0 0.0
      %1942 = vmatprep.subr.mxu0 0.0
      %1943 = vmatpush1.msra.mxu0 0.0
      %1944 = vmatprep.subr.mxu0 0.0
      %1945 = vmatpush1.msra.mxu0 0.0
      %1946 = vmatprep.subr.mxu0 0.0
      %1947 = vmatpush1.msra.mxu0 0.0
      %1948 = vmatprep.subr.mxu0 0.0
      %1949 = vmatpush1.msra.mxu0 0.0
      %1950 = vmatprep.subr.mxu0 0.0
      %1951 = vmatpush1.msra.mxu0 0.0
      %1952 = vmatprep.subr.mxu0 0.0
      %1953 = vmatpush1.msra.mxu0 0.0
      %1954 = vmatprep.subr.mxu0 0.0
      %1955 = vmatpush1.msra.mxu0 0.0
      %1956 = vmatprep.subr.mxu0 0.0
      %1957 = vmatpush1.msra.mxu0 0.0
      %1958 = vmatprep.subr.mxu0 0.0
      %1959 = vmatpush1.msra.mxu0 0.0
      %1960 = vmatprep.subr.mxu0 0.0
      %1961 = vmatpush1.msra.mxu0 0.0
      %1962 = vmatprep.subr.mxu0 0.0
      %1963 = vmatpush1.msra.mxu0 0.0
      %1964 = vmatprep.subr.mxu0 0.0
      %1965 = vmatpush1.msra.mxu0 0.0
      %1966 = vmatprep.subr.mxu0 0.0
      %1967 = vmatpush1.msra.mxu0 0.0
      %1968 = vmatprep.subr.mxu0 0.0
      %1969 = vmatpush1.msra.mxu0 0.0
      %1970 = vmatprep.subr.mxu0 0.0
      %1971 = vmatpush1.msra.mxu0 0.0
      %1972 = vmatprep.subr.mxu0 0.0
      %1973 = vmatpush1.msra.mxu0 0.0
      %1974 = vmatprep.subr.mxu0 0.0
      %1975 = vmatpush1.msra.mxu0 0.0
      %1976 = vmatprep.subr.mxu0 0.0
      %1977 = vmatpush1.msra.mxu0 0.0
      %1978 = vmatprep.subr.mxu0 0.0
      %1979 = vmatpush1.msra.mxu0 0.0
      %1980 = vmatprep.subr.mxu0 0.0
      %1981 = vmatpush1.msra.mxu0 0.0
      %1982 = vmatprep.subr.mxu0 0.0
      %1983 = vmatpush1.msra.mxu0 0.0
      %1984 = vmatprep.subr.mxu0 0.0
      %1985 = vmatpush1.msra.mxu0 0.0
      %1986 = vmatprep.subr.mxu0 0.0
      %1987 = vmatpush1.msra.mxu0 0.0
      %1988 = vmatprep.subr.mxu0 0.0
      %1989 = vmatpush1.msra.mxu0 0.0
      %1990 = vmatprep.subr.mxu0 0.0
      %1991 = vmatpush1.msra.mxu0 0.0
      %1992 = vmatprep.subr.mxu0 0.0
      %1993 = vmatpush1.msra.mxu0 0.0
      %1994 = vmatprep.subr.mxu0 0.0
      %1995 = vmatpush1.msra.mxu0 0.0
      %1996 = vmatprep.subr.mxu0 0.0
      %1997 = vmatpush1.msra.mxu0 0.0
      %1998 = vmatprep.subr.mxu0 0.0
      %1999 = vmatpush1.msra.mxu0 0.0
      %2000 = vmatprep.mubr.f32.mxu0 0.0
      %2001 = vmatmul.mubr.f32.gmra.mrb[0].mxu0 %v1074
      %v2002 = vpop.f32.mrb[0].mxu0
      %v2003 = vadd.f32 0.0, %v2002
      %v2004 = vpop.f32.mrb[0].mxu0
      %2005 = vmatprep.mubr.f32.mxu0 0.0
      %2006 = vmatmul.mubr.f32.gmra.mrb[0].mxu0 %v1076
      %v2007 = vpop.f32.mrb[0].mxu0
      %v2008 = vadd.f32 0.0, %v2007
      %v2009 = vpop.f32.mrb[0].mxu0
      %2010 = vmatprep.mubr.f32.mxu0 0.0
      %2011 = vmatmul.mubr.f32.gmra.mrb[0].mxu0 %v1078
      %v2012 = vpop.f32.mrb[0].mxu0
      %v2013 = vadd.f32 0.0, %v2012
      %v2014 = vpop.f32.mrb[0].mxu0
      %2015 = vmatprep.mubr.f32.mxu0 0.0
      %2016 = vmatmul.mubr.f32.gmra.mrb[0].mxu0 %v1080
      %v2017 = vpop.f32.mrb[0].mxu0
      %v2018 = vadd.f32 0.0, %v2017
      %v2019 = vpop.f32.mrb[0].mxu0
      %2020 = vmatprep.mubr.f32.mxu0 0.0
      %2021 = vmatmul.mubr.f32.gmra.mrb[0].mxu0 %v1082
      %v2022 = vpop.f32.mrb[0].mxu0
      %v2023 = vadd.f32 0.0, %v2022
      %v2024 = vpop.f32.mrb[0].mxu0
      %2025 = vmatprep.mubr.f32.mxu0 0.0
      %2026 = vmatmul.mubr.f32.gmra.mrb[0].mxu0 %v1084
      %v2027 = vpop.f32.mrb[0].mxu0
      %v2028 = vadd.f32 0.0, %v2027
      %v2029 = vpop.f32.mrb[0].mxu0
      %2030 = vmatprep.mubr.f32.mxu0 0.0
      %2031 = vmatmul.mubr.f32.gmra.mrb[0].mxu0 %v1086
      %v2032 = vpop.f32.mrb[0].mxu0
      %v2033 = vadd.f32 0.0, %v2032
      %v2034 = vpop.f32.mrb[0].mxu0
      %2035 = vmatprep.mubr.f32.mxu0 0.0
      %2036 = vmatmul.mubr.f32.gmra.mrb[0].mxu0 %v1088
      %v2037 = vpop.f32.mrb[0].mxu0
      %v2038 = vadd.f32 0.0, %v2037
      %v2039 = vpop.f32.mrb[0].mxu0
      %2040 = vmatprep.mubr.f32.mxu0 0.0
      %2041 = vmatmul.mubr.f32.gmra.mrb[0].mxu0 %v1090
      %v2042 = vpop.f32.mrb[0].mxu0
      %v2043 = vadd.f32 0.0, %v2042
      %v2044 = vpop.f32.mrb[0].mxu0
      %2045 = vmatprep.mubr.f32.mxu0 0.0
      %2046 = vmatmul.mubr.f32.gmra.mrb[0].mxu0 %v1092
      %v2047 = vpop.f32.mrb[0].mxu0
      %v2048 = vadd.f32 0.0, %v2047
      %v2049 = vpop.f32.mrb[0].mxu0
      %2050 = vmatprep.mubr.f32.mxu0 0.0
      %2051 = vmatmul.mubr.f32.gmra.mrb[0].mxu0 %v1094
      %v2052 = vpop.f32.mrb[0].mxu0
      %v2053 = vadd.f32 0.0, %v2052
      %v2054 = vpop.f32.mrb[0].mxu0
      %2055 = vmatprep.mubr.f32.mxu0 0.0
      %2056 = vmatmul.mubr.f32.gmra.mrb[0].mxu0 %v1096
      %v2057 = vpop.f32.mrb[0].mxu0
      %v2058 = vadd.f32 0.0, %v2057
      %v2059 = vpop.f32.mrb[0].mxu0
      %2060 = vmatprep.mubr.f32.mxu0 0.0
      %2061 = vmatmul.mubr.f32.gmra.mrb[0].mxu0 %v1098
      %v2062 = vpop.f32.mrb[0].mxu0
      %v2063 = vadd.f32 0.0, %v2062
      %v2064 = vpop.f32.mrb[0].mxu0
      %2065 = vmatprep.mubr.f32.mxu0 0.0
      %2066 = vmatmul.mubr.f32.gmra.mrb[0].mxu0 %v1100
      %v2067 = vpop.f32.mrb[0].mxu0
      %v2068 = vadd.f32 0.0, %v2067
      %v2069 = vpop.f32.mrb[0].mxu0
      %2070 = vmatprep.mubr.f32.mxu0 0.0
      %2071 = vmatmul.mubr.f32.gmra.mrb[0].mxu0 %v1102
      %v2072 = vpop.f32.mrb[0].mxu0
      %v2073 = vadd.f32 0.0, %v2072
      %v2074 = vpop.f32.mrb[0].mxu0
      %2075 = vmatprep.mubr.f32.mxu0 0.0
      %2076 = vmatmul.mubr.f32.gmra.mrb[0].mxu0 %v1104
      %v2077 = vpop.f32.mrb[0].mxu0
      %v2078 = vadd.f32 0.0, %v2077
      %v2079 = vpop.f32.mrb[0].mxu0
      %2080 = vmatprep.mubr.f32.mxu0 0.0
      %2081 = vmatmul.mubr.f32.gmra.mrb[0].mxu0 %v1106
      %v2082 = vpop.f32.mrb[0].mxu0
      %v2083 = vadd.f32 0.0, %v2082
      %v2084 = vpop.f32.mrb[0].mxu0
      %2085 = vmatprep.mubr.f32.mxu0 0.0
      %2086 = vmatmul.mubr.f32.gmra.mrb[0].mxu0 %v1108
      %v2087 = vpop.f32.mrb[0].mxu0
      %v2088 = vadd.f32 0.0, %v2087
      %v2089 = vpop.f32.mrb[0].mxu0
      %2090 = vmatprep.mubr.f32.mxu0 0.0
      %2091 = vmatmul.mubr.f32.gmra.mrb[0].mxu0 %v1110
      %v2092 = vpop.f32.mrb[0].mxu0
      %v2093 = vadd.f32 0.0, %v2092
      %v2094 = vpop.f32.mrb[0].mxu0
      %2095 = vmatprep.mubr.f32.mxu0 0.0
      %2096 = vmatmul.mubr.f32.gmra.mrb[0].mxu0 %v1112
      %v2097 = vpop.f32.mrb[0].mxu0
      %v2098 = vadd.f32 0.0, %v2097
      %v2099 = vpop.f32.mrb[0].mxu0
      %2100 = vmatprep.mubr.f32.mxu0 0.0
      %2101 = vmatmul.mubr.f32.gmra.mrb[0].mxu0 %v1114
      %v2102 = vpop.f32.mrb[0].mxu0
      %v2103 = vadd.f32 0.0, %v2102
      %v2104 = vpop.f32.mrb[0].mxu0
      %2105 = vmatprep.mubr.f32.mxu0 0.0
      %2106 = vmatmul.mubr.f32.gmra.mrb[0].mxu0 %v1116
      %v2107 = vpop.f32.mrb[0].mxu0
      %v2108 = vadd.f32 0.0, %v2107
      %v2109 = vpop.f32.mrb[0].mxu0
      %2110 = vmatprep.mubr.f32.mxu0 0.0
      %2111 = vmatmul.mubr.f32.gmra.mrb[0].mxu0 %v1118
      %v2112 = vpop.f32.mrb[0].mxu0
      %v2113 = vadd.f32 0.0, %v2112
      %v2114 = vpop.f32.mrb[0].mxu0
      %2115 = vmatprep.mubr.f32.mxu0 0.0
      %2116 = vmatmul.mubr.f32.gmra.mrb[0].mxu0 %v1120
      %v2117 = vpop.f32.mrb[0].mxu0
      %v2118 = vadd.f32 0.0, %v2117
      %v2119 = vpop.f32.mrb[0].mxu0
      %2120 = vmatprep.mubr.f32.mxu0 0.0
      %2121 = vmatmul.mubr.f32.gmra.mrb[0].mxu0 %v1122
      %v2122 = vpop.f32.mrb[0].mxu0
      %v2123 = vadd.f32 0.0, %v2122
      %v2124 = vpop.f32.mrb[0].mxu0
      %2125 = vmatprep.mubr.f32.mxu0 0.0
      %2126 = vmatmul.mubr.f32.gmra.mrb[0].mxu0 %v1124
      %v2127 = vpop.f32.mrb[0].mxu0
      %v2128 = vadd.f32 0.0, %v2127
      %v2129 = vpop.f32.mrb[0].mxu0
      %2130 = vmatprep.mubr.f32.mxu0 0.0
      %2131 = vmatmul.mubr.f32.gmra.mrb[0].mxu0 %v1126
      %v2132 = vpop.f32.mrb[0].mxu0
      %v2133 = vadd.f32 0.0, %v2132
      %v2134 = vpop.f32.mrb[0].mxu0
      %2135 = vmatprep.mubr.f32.mxu0 0.0
      %2136 = vmatmul.mubr.f32.gmra.mrb[0].mxu0 %v1128
      %v2137 = vpop.f32.mrb[0].mxu0
      %v2138 = vadd.f32 0.0, %v2137
      %v2139 = vpop.f32.mrb[0].mxu0
      %2140 = vmatprep.mubr.f32.mxu0 0.0
      %2141 = vmatmul.mubr.f32.gmra.mrb[0].mxu0 %v1130
      %v2142 = vpop.f32.mrb[0].mxu0
      %v2143 = vadd.f32 0.0, %v2142
      %v2144 = vpop.f32.mrb[0].mxu0
      %2145 = vmatprep.mubr.f32.mxu0 0.0
      %2146 = vmatmul.mubr.f32.gmra.mrb[0].mxu0 %v1132
      %v2147 = vpop.f32.mrb[0].mxu0
      %v2148 = vadd.f32 0.0, %v2147
      %v2149 = vpop.f32.mrb[0].mxu0
      %2150 = vmatprep.mubr.f32.mxu0 0.0
      %2151 = vmatmul.mubr.f32.gmra.mrb[0].mxu0 %v1932
      %v2152 = vpop.f32.mrb[0].mxu0
      %v2153 = vadd.f32 0.0, %v2152
      %v2154 = vpop.f32.mrb[0].mxu0
      %2155 = vmatprep.mubr.f32.mxu0 0.0
      %2156 = vmatmul.mubr.f32.gmra.mrb[0].mxu0 %v1934
      %v2157 = vpop.f32.mrb[0].mxu0
      %v2158 = vadd.f32 0.0, %v2157
      %v2159 = vpop.f32.mrb[0].mxu0
      %2160 = vdwg.mxu0
      %v2161 = vadd.f32 %v1893, %v2003
      %v2162 = vadd.f32 %v1894, %v2008
      %v2163 = vadd.f32 %v1895, %v2013
      %v2164 = vadd.f32 %v1896, %v2018
      %v2165 = vadd.f32 %v1897, %v2023
      %v2166 = vadd.f32 %v1898, %v2028
      %v2167 = vadd.f32 %v1899, %v2033
      %v2168 = vadd.f32 %v1900, %v2038
      %v2169 = vadd.f32 %v1901, %v2043
      %v2170 = vadd.f32 %v1902, %v2048
      %v2171 = vadd.f32 %v1903, %v2053
      %v2172 = vadd.f32 %v1904, %v2058
      %v2173 = vadd.f32 %v1905, %v2063
      %v2174 = vadd.f32 %v1906, %v2068
      %v2175 = vadd.f32 %v1907, %v2073
      %v2176 = vadd.f32 %v1908, %v2078
      %v2177 = vadd.f32 %v1909, %v2083
      %v2178 = vadd.f32 %v1910, %v2088
      %v2179 = vadd.f32 %v1911, %v2093
      %v2180 = vadd.f32 %v1912, %v2098
      %v2181 = vadd.f32 %v1913, %v2103
      %v2182 = vadd.f32 %v1914, %v2108
      %v2183 = vadd.f32 %v1915, %v2113
      %v2184 = vadd.f32 %v1916, %v2118
      %v2185 = vadd.f32 %v1917, %v2123
      %v2186 = vadd.f32 %v1918, %v2128
      %v2187 = vadd.f32 %v1919, %v2133
      %v2188 = vadd.f32 %v1920, %v2138
      %v2189 = vadd.f32 %v1921, %v2143
      %v2190 = vadd.f32 %v1922, %v2148
      %v2191 = vadd.f32 %v1923, %v2153
      %v2192 = vadd.f32 %v1924, %v2158
      %s2193 = scalar_lea.vmem %s210, 48
      %v2194 = vld [vmem:[%s2193] sm:$0xff]
      %v2196 = vsel %vm408, %v273, 0
      %v2199 = vsel %vm408, %v274, 0
      %2201 = vmatprep.subr.mxu0 0.0
      %2202 = vmatpush1.msra.mxu0 %v2194
      %2203 = vmatprep.subr.mxu0 0.0
      %2204 = vmatpush1.msra.mxu0 0.0
      %2205 = vmatprep.subr.mxu0 0.0
      %2206 = vmatpush1.msra.mxu0 0.0
      %2207 = vmatprep.subr.mxu0 0.0
      %2208 = vmatpush1.msra.mxu0 0.0
      %2209 = vmatprep.subr.mxu0 0.0
      %2210 = vmatpush1.msra.mxu0 0.0
      %2211 = vmatprep.subr.mxu0 0.0
      %2212 = vmatpush1.msra.mxu0 0.0
      %2213 = vmatprep.subr.mxu0 0.0
      %2214 = vmatpush1.msra.mxu0 0.0
      %2215 = vmatprep.subr.mxu0 0.0
      %2216 = vmatpush1.msra.mxu0 0.0
      %2217 = vmatprep.subr.mxu0 0.0
      %2218 = vmatpush1.msra.mxu0 0.0
      %2219 = vmatprep.subr.mxu0 0.0
      %2220 = vmatpush1.msra.mxu0 0.0
      %2221 = vmatprep.subr.mxu0 0.0
      %2222 = vmatpush1.msra.mxu0 0.0
      %2223 = vmatprep.subr.mxu0 0.0
      %2224 = vmatpush1.msra.mxu0 0.0
      %2225 = vmatprep.subr.mxu0 0.0
      %2226 = vmatpush1.msra.mxu0 0.0
      %2227 = vmatprep.subr.mxu0 0.0
      %2228 = vmatpush1.msra.mxu0 0.0
      %2229 = vmatprep.subr.mxu0 0.0
      %2230 = vmatpush1.msra.mxu0 0.0
      %2231 = vmatprep.subr.mxu0 0.0
      %2232 = vmatpush1.msra.mxu0 0.0
      %2233 = vmatprep.subr.mxu0 0.0
      %2234 = vmatpush1.msra.mxu0 0.0
      %2235 = vmatprep.subr.mxu0 0.0
      %2236 = vmatpush1.msra.mxu0 0.0
      %2237 = vmatprep.subr.mxu0 0.0
      %2238 = vmatpush1.msra.mxu0 0.0
      %2239 = vmatprep.subr.mxu0 0.0
      %2240 = vmatpush1.msra.mxu0 0.0
      %2241 = vmatprep.subr.mxu0 0.0
      %2242 = vmatpush1.msra.mxu0 0.0
      %2243 = vmatprep.subr.mxu0 0.0
      %2244 = vmatpush1.msra.mxu0 0.0
      %2245 = vmatprep.subr.mxu0 0.0
      %2246 = vmatpush1.msra.mxu0 0.0
      %2247 = vmatprep.subr.mxu0 0.0
      %2248 = vmatpush1.msra.mxu0 0.0
      %2249 = vmatprep.subr.mxu0 0.0
      %2250 = vmatpush1.msra.mxu0 0.0
      %2251 = vmatprep.subr.mxu0 0.0
      %2252 = vmatpush1.msra.mxu0 0.0
      %2253 = vmatprep.subr.mxu0 0.0
      %2254 = vmatpush1.msra.mxu0 0.0
      %2255 = vmatprep.subr.mxu0 0.0
      %2256 = vmatpush1.msra.mxu0 0.0
      %2257 = vmatprep.subr.mxu0 0.0
      %2258 = vmatpush1.msra.mxu0 0.0
      %2259 = vmatprep.subr.mxu0 0.0
      %2260 = vmatpush1.msra.mxu0 0.0
      %2261 = vmatprep.subr.mxu0 0.0
      %2262 = vmatpush1.msra.mxu0 0.0
      %2263 = vmatprep.subr.mxu0 0.0
      %2264 = vmatpush1.msra.mxu0 0.0
      %2265 = vmatprep.mubr.f32.mxu0 0.0
      %2266 = vmatmul.mubr.f32.gmra.mrb[0].mxu0 %v706
      %v2267 = vpop.f32.mrb[0].mxu0
      %v2268 = vadd.f32 0.0, %v2267
      %v2269 = vpop.f32.mrb[0].mxu0
      %2270 = vmatprep.mubr.f32.mxu0 0.0
      %2271 = vmatmul.mubr.f32.gmra.mrb[0].mxu0 %v708
      %v2272 = vpop.f32.mrb[0].mxu0
      %v2273 = vadd.f32 0.0, %v2272
      %v2274 = vpop.f32.mrb[0].mxu0
      %2275 = vmatprep.mubr.f32.mxu0 0.0
      %2276 = vmatmul.mubr.f32.gmra.mrb[0].mxu0 %v710
      %v2277 = vpop.f32.mrb[0].mxu0
      %v2278 = vadd.f32 0.0, %v2277
      %v2279 = vpop.f32.mrb[0].mxu0
      %2280 = vmatprep.mubr.f32.mxu0 0.0
      %2281 = vmatmul.mubr.f32.gmra.mrb[0].mxu0 %v712
      %v2282 = vpop.f32.mrb[0].mxu0
      %v2283 = vadd.f32 0.0, %v2282
      %v2284 = vpop.f32.mrb[0].mxu0
      %2285 = vmatprep.mubr.f32.mxu0 0.0
      %2286 = vmatmul.mubr.f32.gmra.mrb[0].mxu0 %v714
      %v2287 = vpop.f32.mrb[0].mxu0
      %v2288 = vadd.f32 0.0, %v2287
      %v2289 = vpop.f32.mrb[0].mxu0
      %2290 = vmatprep.mubr.f32.mxu0 0.0
      %2291 = vmatmul.mubr.f32.gmra.mrb[0].mxu0 %v716
      %v2292 = vpop.f32.mrb[0].mxu0
      %v2293 = vadd.f32 0.0, %v2292
      %v2294 = vpop.f32.mrb[0].mxu0
      %2295 = vmatprep.mubr.f32.mxu0 0.0
      %2296 = vmatmul.mubr.f32.gmra.mrb[0].mxu0 %v718
      %v2297 = vpop.f32.mrb[0].mxu0
      %v2298 = vadd.f32 0.0, %v2297
      %v2299 = vpop.f32.mrb[0].mxu0
      %2300 = vmatprep.mubr.f32.mxu0 0.0
      %2301 = vmatmul.mubr.f32.gmra.mrb[0].mxu0 %v720
      %v2302 = vpop.f32.mrb[0].mxu0
      %v2303 = vadd.f32 0.0, %v2302
      %v2304 = vpop.f32.mrb[0].mxu0
      %2305 = vmatprep.mubr.f32.mxu0 0.0
      %2306 = vmatmul.mubr.f32.gmra.mrb[0].mxu0 %v722
      %v2307 = vpop.f32.mrb[0].mxu0
      %v2308 = vadd.f32 0.0, %v2307
      %v2309 = vpop.f32.mrb[0].mxu0
      %2310 = vmatprep.mubr.f32.mxu0 0.0
      %2311 = vmatmul.mubr.f32.gmra.mrb[0].mxu0 %v724
      %v2312 = vpop.f32.mrb[0].mxu0
      %v2313 = vadd.f32 0.0, %v2312
      %v2314 = vpop.f32.mrb[0].mxu0
      %2315 = vmatprep.mubr.f32.mxu0 0.0
      %2316 = vmatmul.mubr.f32.gmra.mrb[0].mxu0 %v726
      %v2317 = vpop.f32.mrb[0].mxu0
      %v2318 = vadd.f32 0.0, %v2317
      %v2319 = vpop.f32.mrb[0].mxu0
      %2320 = vmatprep.mubr.f32.mxu0 0.0
      %2321 = vmatmul.mubr.f32.gmra.mrb[0].mxu0 %v728
      %v2322 = vpop.f32.mrb[0].mxu0
      %v2323 = vadd.f32 0.0, %v2322
      %v2324 = vpop.f32.mrb[0].mxu0
      %2325 = vmatprep.mubr.f32.mxu0 0.0
      %2326 = vmatmul.mubr.f32.gmra.mrb[0].mxu0 %v730
      %v2327 = vpop.f32.mrb[0].mxu0
      %v2328 = vadd.f32 0.0, %v2327
      %v2329 = vpop.f32.mrb[0].mxu0
      %2330 = vmatprep.mubr.f32.mxu0 0.0
      %2331 = vmatmul.mubr.f32.gmra.mrb[0].mxu0 %v732
      %v2332 = vpop.f32.mrb[0].mxu0
      %v2333 = vadd.f32 0.0, %v2332
      %v2334 = vpop.f32.mrb[0].mxu0
      %2335 = vmatprep.mubr.f32.mxu0 0.0
      %2336 = vmatmul.mubr.f32.gmra.mrb[0].mxu0 %v734
      %v2337 = vpop.f32.mrb[0].mxu0
      %v2338 = vadd.f32 0.0, %v2337
      %v2339 = vpop.f32.mrb[0].mxu0
      %2340 = vmatprep.mubr.f32.mxu0 0.0
      %2341 = vmatmul.mubr.f32.gmra.mrb[0].mxu0 %v736
      %v2342 = vpop.f32.mrb[0].mxu0
      %v2343 = vadd.f32 0.0, %v2342
      %v2344 = vpop.f32.mrb[0].mxu0
      %2345 = vmatprep.mubr.f32.mxu0 0.0
      %2346 = vmatmul.mubr.f32.gmra.mrb[0].mxu0 %v738
      %v2347 = vpop.f32.mrb[0].mxu0
      %v2348 = vadd.f32 0.0, %v2347
      %v2349 = vpop.f32.mrb[0].mxu0
      %2350 = vmatprep.mubr.f32.mxu0 0.0
      %2351 = vmatmul.mubr.f32.gmra.mrb[0].mxu0 %v740
      %v2352 = vpop.f32.mrb[0].mxu0
      %v2353 = vadd.f32 0.0, %v2352
      %v2354 = vpop.f32.mrb[0].mxu0
      %2355 = vmatprep.mubr.f32.mxu0 0.0
      %2356 = vmatmul.mubr.f32.gmra.mrb[0].mxu0 %v742
      %v2357 = vpop.f32.mrb[0].mxu0
      %v2358 = vadd.f32 0.0, %v2357
      %v2359 = vpop.f32.mrb[0].mxu0
      %2360 = vmatprep.mubr.f32.mxu0 0.0
      %2361 = vmatmul.mubr.f32.gmra.mrb[0].mxu0 %v744
      %v2362 = vpop.f32.mrb[0].mxu0
      %v2363 = vadd.f32 0.0, %v2362
      %v2364 = vpop.f32.mrb[0].mxu0
      %2365 = vmatprep.mubr.f32.mxu0 0.0
      %2366 = vmatmul.mubr.f32.gmra.mrb[0].mxu0 %v746
      %v2367 = vpop.f32.mrb[0].mxu0
      %v2368 = vadd.f32 0.0, %v2367
      %v2369 = vpop.f32.mrb[0].mxu0
      %2370 = vmatprep.mubr.f32.mxu0 0.0
      %2371 = vmatmul.mubr.f32.gmra.mrb[0].mxu0 %v748
      %v2372 = vpop.f32.mrb[0].mxu0
      %v2373 = vadd.f32 0.0, %v2372
      %v2374 = vpop.f32.mrb[0].mxu0
      %2375 = vmatprep.mubr.f32.mxu0 0.0
      %2376 = vmatmul.mubr.f32.gmra.mrb[0].mxu0 %v750
      %v2377 = vpop.f32.mrb[0].mxu0
      %v2378 = vadd.f32 0.0, %v2377
      %v2379 = vpop.f32.mrb[0].mxu0
      %2380 = vmatprep.mubr.f32.mxu0 0.0
      %2381 = vmatmul.mubr.f32.gmra.mrb[0].mxu0 %v752
      %v2382 = vpop.f32.mrb[0].mxu0
      %v2383 = vadd.f32 0.0, %v2382
      %v2384 = vpop.f32.mrb[0].mxu0
      %2385 = vmatprep.mubr.f32.mxu0 0.0
      %2386 = vmatmul.mubr.f32.gmra.mrb[0].mxu0 %v754
      %v2387 = vpop.f32.mrb[0].mxu0
      %v2388 = vadd.f32 0.0, %v2387
      %v2389 = vpop.f32.mrb[0].mxu0
      %2390 = vmatprep.mubr.f32.mxu0 0.0
      %2391 = vmatmul.mubr.f32.gmra.mrb[0].mxu0 %v756
      %v2392 = vpop.f32.mrb[0].mxu0
      %v2393 = vadd.f32 0.0, %v2392
      %v2394 = vpop.f32.mrb[0].mxu0
      %2395 = vmatprep.mubr.f32.mxu0 0.0
      %2396 = vmatmul.mubr.f32.gmra.mrb[0].mxu0 %v758
      %v2397 = vpop.f32.mrb[0].mxu0
      %v2398 = vadd.f32 0.0, %v2397
      %v2399 = vpop.f32.mrb[0].mxu0
      %2400 = vmatprep.mubr.f32.mxu0 0.0
      %2401 = vmatmul.mubr.f32.gmra.mrb[0].mxu0 %v760
      %v2402 = vpop.f32.mrb[0].mxu0
      %v2403 = vadd.f32 0.0, %v2402
      %v2404 = vpop.f32.mrb[0].mxu0
      %2405 = vmatprep.mubr.f32.mxu0 0.0
      %2406 = vmatmul.mubr.f32.gmra.mrb[0].mxu0 %v1394
      %v2407 = vpop.f32.mrb[0].mxu0
      %v2408 = vadd.f32 0.0, %v2407
      %v2409 = vpop.f32.mrb[0].mxu0
      %2410 = vmatprep.mubr.f32.mxu0 0.0
      %2411 = vmatmul.mubr.f32.gmra.mrb[0].mxu0 %v1397
      %v2412 = vpop.f32.mrb[0].mxu0
      %v2413 = vadd.f32 0.0, %v2412
      %v2414 = vpop.f32.mrb[0].mxu0
      %2415 = vmatprep.mubr.f32.mxu0 0.0
      %2416 = vmatmul.mubr.f32.gmra.mrb[0].mxu0 %v2196
      %v2417 = vpop.f32.mrb[0].mxu0
      %v2418 = vadd.f32 0.0, %v2417
      %v2419 = vpop.f32.mrb[0].mxu0
      %2420 = vmatprep.mubr.f32.mxu0 0.0
      %2421 = vmatmul.mubr.f32.gmra.mrb[0].mxu0 %v2199
      %v2422 = vpop.f32.mrb[0].mxu0
      %v2423 = vadd.f32 0.0, %v2422
      %v2424 = vpop.f32.mrb[0].mxu0
      %2425 = vdwg.mxu0
      %v2426 = vadd.f32 %v2161, %v2268
      %v2427 = vadd.f32 %v2162, %v2273
      %v2428 = vadd.f32 %v2163, %v2278
      %v2429 = vadd.f32 %v2164, %v2283
      %v2430 = vadd.f32 %v2165, %v2288
      %v2431 = vadd.f32 %v2166, %v2293
      %v2432 = vadd.f32 %v2167, %v2298
      %v2433 = vadd.f32 %v2168, %v2303
      %v2434 = vadd.f32 %v2169, %v2308
      %v2435 = vadd.f32 %v2170, %v2313
      %v2436 = vadd.f32 %v2171, %v2318
      %v2437 = vadd.f32 %v2172, %v2323
      %v2438 = vadd.f32 %v2173, %v2328
      %v2439 = vadd.f32 %v2174, %v2333
      %v2440 = vadd.f32 %v2175, %v2338
      %v2441 = vadd.f32 %v2176, %v2343
      %v2442 = vadd.f32 %v2177, %v2348
      %v2443 = vadd.f32 %v2178, %v2353
      %v2444 = vadd.f32 %v2179, %v2358
      %v2445 = vadd.f32 %v2180, %v2363
      %v2446 = vadd.f32 %v2181, %v2368
      %v2447 = vadd.f32 %v2182, %v2373
      %v2448 = vadd.f32 %v2183, %v2378
      %v2449 = vadd.f32 %v2184, %v2383
      %v2450 = vadd.f32 %v2185, %v2388
      %v2451 = vadd.f32 %v2186, %v2393
      %v2452 = vadd.f32 %v2187, %v2398
      %v2453 = vadd.f32 %v2188, %v2403
      %v2454 = vadd.f32 %v2189, %v2408
      %v2455 = vadd.f32 %v2190, %v2413
      %v2456 = vadd.f32 %v2191, %v2418
      %v2457 = vadd.f32 %v2192, %v2423
      %v2459 = vrot.slane %v273, 1
      %v2460 = vrot.slane %v274, 1
      %v2461 = vsel %vm325, %v2459, %v2460
      %v2462 = vrot.slane %v275, 1
      %v2463 = vsel %vm325, %v2460, %v2462
      %s2464 = scalar_lea.vmem %s210, 56
      %v2465 = vld [vmem:[%s2464] sm:$0xff]
      %v2466 = vsel %vm408, %v2461, 0
      %v2468 = vsel %vm408, %v2463, 0
      %2470 = vmatprep.subr.mxu0 0.0
      %2471 = vmatpush1.msra.mxu0 %v2465
      %2472 = vmatprep.subr.mxu0 0.0
      %2473 = vmatpush1.msra.mxu0 0.0
      %2474 = vmatprep.subr.mxu0 0.0
      %2475 = vmatpush1.msra.mxu0 0.0
      %2476 = vmatprep.subr.mxu0 0.0
      %2477 = vmatpush1.msra.mxu0 0.0
      %2478 = vmatprep.subr.mxu0 0.0
      %2479 = vmatpush1.msra.mxu0 0.0
      %2480 = vmatprep.subr.mxu0 0.0
      %2481 = vmatpush1.msra.mxu0 0.0
      %2482 = vmatprep.subr.mxu0 0.0
      %2483 = vmatpush1.msra.mxu0 0.0
      %2484 = vmatprep.subr.mxu0 0.0
      %2485 = vmatpush1.msra.mxu0 0.0
      %2486 = vmatprep.subr.mxu0 0.0
      %2487 = vmatpush1.msra.mxu0 0.0
      %2488 = vmatprep.subr.mxu0 0.0
      %2489 = vmatpush1.msra.mxu0 0.0
      %2490 = vmatprep.subr.mxu0 0.0
      %2491 = vmatpush1.msra.mxu0 0.0
      %2492 = vmatprep.subr.mxu0 0.0
      %2493 = vmatpush1.msra.mxu0 0.0
      %2494 = vmatprep.subr.mxu0 0.0
      %2495 = vmatpush1.msra.mxu0 0.0
      %2496 = vmatprep.subr.mxu0 0.0
      %2497 = vmatpush1.msra.mxu0 0.0
      %2498 = vmatprep.subr.mxu0 0.0
      %2499 = vmatpush1.msra.mxu0 0.0
      %2500 = vmatprep.subr.mxu0 0.0
      %2501 = vmatpush1.msra.mxu0 0.0
      %2502 = vmatprep.subr.mxu0 0.0
      %2503 = vmatpush1.msra.mxu0 0.0
      %2504 = vmatprep.subr.mxu0 0.0
      %2505 = vmatpush1.msra.mxu0 0.0
      %2506 = vmatprep.subr.mxu0 0.0
      %2507 = vmatpush1.msra.mxu0 0.0
      %2508 = vmatprep.subr.mxu0 0.0
      %2509 = vmatpush1.msra.mxu0 0.0
      %2510 = vmatprep.subr.mxu0 0.0
      %2511 = vmatpush1.msra.mxu0 0.0
      %2512 = vmatprep.subr.mxu0 0.0
      %2513 = vmatpush1.msra.mxu0 0.0
      %2514 = vmatprep.subr.mxu0 0.0
      %2515 = vmatpush1.msra.mxu0 0.0
      %2516 = vmatprep.subr.mxu0 0.0
      %2517 = vmatpush1.msra.mxu0 0.0
      %2518 = vmatprep.subr.mxu0 0.0
      %2519 = vmatpush1.msra.mxu0 0.0
      %2520 = vmatprep.subr.mxu0 0.0
      %2521 = vmatpush1.msra.mxu0 0.0
      %2522 = vmatprep.subr.mxu0 0.0
      %2523 = vmatpush1.msra.mxu0 0.0
      %2524 = vmatprep.subr.mxu0 0.0
      %2525 = vmatpush1.msra.mxu0 0.0
      %2526 = vmatprep.subr.mxu0 0.0
      %2527 = vmatpush1.msra.mxu0 0.0
      %2528 = vmatprep.subr.mxu0 0.0
      %2529 = vmatpush1.msra.mxu0 0.0
      %2530 = vmatprep.subr.mxu0 0.0
      %2531 = vmatpush1.msra.mxu0 0.0
      %2532 = vmatprep.subr.mxu0 0.0
      %2533 = vmatpush1.msra.mxu0 0.0
      %2534 = vmatprep.mubr.f32.mxu0 0.0
      %2535 = vmatmul.mubr.f32.gmra.mrb[0].mxu0 %v417
      %v2536 = vpop.f32.mrb[0].mxu0
      %v2537 = vadd.f32 0.0, %v2536
      %v2538 = vpop.f32.mrb[0].mxu0
      %2539 = vmatprep.mubr.f32.mxu0 0.0
      %2540 = vmatmul.mubr.f32.gmra.mrb[0].mxu0 %v419
      %v2541 = vpop.f32.mrb[0].mxu0
      %v2542 = vadd.f32 0.0, %v2541
      %v2543 = vpop.f32.mrb[0].mxu0
      %2544 = vmatprep.mubr.f32.mxu0 0.0
      %2545 = vmatmul.mubr.f32.gmra.mrb[0].mxu0 %v421
      %v2546 = vpop.f32.mrb[0].mxu0
      %v2547 = vadd.f32 0.0, %v2546
      %v2548 = vpop.f32.mrb[0].mxu0
      %2549 = vmatprep.mubr.f32.mxu0 0.0
      %2550 = vmatmul.mubr.f32.gmra.mrb[0].mxu0 %v423
      %v2551 = vpop.f32.mrb[0].mxu0
      %v2552 = vadd.f32 0.0, %v2551
      %v2553 = vpop.f32.mrb[0].mxu0
      %2554 = vmatprep.mubr.f32.mxu0 0.0
      %2555 = vmatmul.mubr.f32.gmra.mrb[0].mxu0 %v425
      %v2556 = vpop.f32.mrb[0].mxu0
      %v2557 = vadd.f32 0.0, %v2556
      %v2558 = vpop.f32.mrb[0].mxu0
      %2559 = vmatprep.mubr.f32.mxu0 0.0
      %2560 = vmatmul.mubr.f32.gmra.mrb[0].mxu0 %v427
      %v2561 = vpop.f32.mrb[0].mxu0
      %v2562 = vadd.f32 0.0, %v2561
      %v2563 = vpop.f32.mrb[0].mxu0
      %2564 = vmatprep.mubr.f32.mxu0 0.0
      %2565 = vmatmul.mubr.f32.gmra.mrb[0].mxu0 %v429
      %v2566 = vpop.f32.mrb[0].mxu0
      %v2567 = vadd.f32 0.0, %v2566
      %v2568 = vpop.f32.mrb[0].mxu0
      %2569 = vmatprep.mubr.f32.mxu0 0.0
      %2570 = vmatmul.mubr.f32.gmra.mrb[0].mxu0 %v431
      %v2571 = vpop.f32.mrb[0].mxu0
      %v2572 = vadd.f32 0.0, %v2571
      %v2573 = vpop.f32.mrb[0].mxu0
      %2574 = vmatprep.mubr.f32.mxu0 0.0
      %2575 = vmatmul.mubr.f32.gmra.mrb[0].mxu0 %v433
      %v2576 = vpop.f32.mrb[0].mxu0
      %v2577 = vadd.f32 0.0, %v2576
      %v2578 = vpop.f32.mrb[0].mxu0
      %2579 = vmatprep.mubr.f32.mxu0 0.0
      %2580 = vmatmul.mubr.f32.gmra.mrb[0].mxu0 %v435
      %v2581 = vpop.f32.mrb[0].mxu0
      %v2582 = vadd.f32 0.0, %v2581
      %v2583 = vpop.f32.mrb[0].mxu0
      %2584 = vmatprep.mubr.f32.mxu0 0.0
      %2585 = vmatmul.mubr.f32.gmra.mrb[0].mxu0 %v437
      %v2586 = vpop.f32.mrb[0].mxu0
      %v2587 = vadd.f32 0.0, %v2586
      %v2588 = vpop.f32.mrb[0].mxu0
      %2589 = vmatprep.mubr.f32.mxu0 0.0
      %2590 = vmatmul.mubr.f32.gmra.mrb[0].mxu0 %v439
      %v2591 = vpop.f32.mrb[0].mxu0
      %v2592 = vadd.f32 0.0, %v2591
      %v2593 = vpop.f32.mrb[0].mxu0
      %2594 = vmatprep.mubr.f32.mxu0 0.0
      %2595 = vmatmul.mubr.f32.gmra.mrb[0].mxu0 %v441
      %v2596 = vpop.f32.mrb[0].mxu0
      %v2597 = vadd.f32 0.0, %v2596
      %v2598 = vpop.f32.mrb[0].mxu0
      %2599 = vmatprep.mubr.f32.mxu0 0.0
      %2600 = vmatmul.mubr.f32.gmra.mrb[0].mxu0 %v443
      %v2601 = vpop.f32.mrb[0].mxu0
      %v2602 = vadd.f32 0.0, %v2601
      %v2603 = vpop.f32.mrb[0].mxu0
      %2604 = vmatprep.mubr.f32.mxu0 0.0
      %2605 = vmatmul.mubr.f32.gmra.mrb[0].mxu0 %v445
      %v2606 = vpop.f32.mrb[0].mxu0
      %v2607 = vadd.f32 0.0, %v2606
      %v2608 = vpop.f32.mrb[0].mxu0
      %2609 = vmatprep.mubr.f32.mxu0 0.0
      %2610 = vmatmul.mubr.f32.gmra.mrb[0].mxu0 %v447
      %v2611 = vpop.f32.mrb[0].mxu0
      %v2612 = vadd.f32 0.0, %v2611
      %v2613 = vpop.f32.mrb[0].mxu0
      %2614 = vmatprep.mubr.f32.mxu0 0.0
      %2615 = vmatmul.mubr.f32.gmra.mrb[0].mxu0 %v449
      %v2616 = vpop.f32.mrb[0].mxu0
      %v2617 = vadd.f32 0.0, %v2616
      %v2618 = vpop.f32.mrb[0].mxu0
      %2619 = vmatprep.mubr.f32.mxu0 0.0
      %2620 = vmatmul.mubr.f32.gmra.mrb[0].mxu0 %v451
      %v2621 = vpop.f32.mrb[0].mxu0
      %v2622 = vadd.f32 0.0, %v2621
      %v2623 = vpop.f32.mrb[0].mxu0
      %2624 = vmatprep.mubr.f32.mxu0 0.0
      %2625 = vmatmul.mubr.f32.gmra.mrb[0].mxu0 %v453
      %v2626 = vpop.f32.mrb[0].mxu0
      %v2627 = vadd.f32 0.0, %v2626
      %v2628 = vpop.f32.mrb[0].mxu0
      %2629 = vmatprep.mubr.f32.mxu0 0.0
      %2630 = vmatmul.mubr.f32.gmra.mrb[0].mxu0 %v455
      %v2631 = vpop.f32.mrb[0].mxu0
      %v2632 = vadd.f32 0.0, %v2631
      %v2633 = vpop.f32.mrb[0].mxu0
      %2634 = vmatprep.mubr.f32.mxu0 0.0
      %2635 = vmatmul.mubr.f32.gmra.mrb[0].mxu0 %v457
      %v2636 = vpop.f32.mrb[0].mxu0
      %v2637 = vadd.f32 0.0, %v2636
      %v2638 = vpop.f32.mrb[0].mxu0
      %2639 = vmatprep.mubr.f32.mxu0 0.0
      %2640 = vmatmul.mubr.f32.gmra.mrb[0].mxu0 %v459
      %v2641 = vpop.f32.mrb[0].mxu0
      %v2642 = vadd.f32 0.0, %v2641
      %v2643 = vpop.f32.mrb[0].mxu0
      %2644 = vmatprep.mubr.f32.mxu0 0.0
      %2645 = vmatmul.mubr.f32.gmra.mrb[0].mxu0 %v461
      %v2646 = vpop.f32.mrb[0].mxu0
      %v2647 = vadd.f32 0.0, %v2646
      %v2648 = vpop.f32.mrb[0].mxu0
      %2649 = vmatprep.mubr.f32.mxu0 0.0
      %2650 = vmatmul.mubr.f32.gmra.mrb[0].mxu0 %v463
      %v2651 = vpop.f32.mrb[0].mxu0
      %v2652 = vadd.f32 0.0, %v2651
      %v2653 = vpop.f32.mrb[0].mxu0
      %2654 = vmatprep.mubr.f32.mxu0 0.0
      %2655 = vmatmul.mubr.f32.gmra.mrb[0].mxu0 %v465
      %v2656 = vpop.f32.mrb[0].mxu0
      %v2657 = vadd.f32 0.0, %v2656
      %v2658 = vpop.f32.mrb[0].mxu0
      %2659 = vmatprep.mubr.f32.mxu0 0.0
      %2660 = vmatmul.mubr.f32.gmra.mrb[0].mxu0 %v467
      %v2661 = vpop.f32.mrb[0].mxu0
      %v2662 = vadd.f32 0.0, %v2661
      %v2663 = vpop.f32.mrb[0].mxu0
      %2664 = vmatprep.mubr.f32.mxu0 0.0
      %2665 = vmatmul.mubr.f32.gmra.mrb[0].mxu0 %v469
      %v2666 = vpop.f32.mrb[0].mxu0
      %v2667 = vadd.f32 0.0, %v2666
      %v2668 = vpop.f32.mrb[0].mxu0
      %2669 = vmatprep.mubr.f32.mxu0 0.0
      %2670 = vmatmul.mubr.f32.gmra.mrb[0].mxu0 %v471
      %v2671 = vpop.f32.mrb[0].mxu0
      %v2672 = vadd.f32 0.0, %v2671
      %v2673 = vpop.f32.mrb[0].mxu0
      %2674 = vmatprep.mubr.f32.mxu0 0.0
      %2675 = vmatmul.mubr.f32.gmra.mrb[0].mxu0 %v1664
      %v2676 = vpop.f32.mrb[0].mxu0
      %v2677 = vadd.f32 0.0, %v2676
      %v2678 = vpop.f32.mrb[0].mxu0
      %2679 = vmatprep.mubr.f32.mxu0 0.0
      %2680 = vmatmul.mubr.f32.gmra.mrb[0].mxu0 %v1666
      %v2681 = vpop.f32.mrb[0].mxu0
      %v2682 = vadd.f32 0.0, %v2681
      %v2683 = vpop.f32.mrb[0].mxu0
      %2684 = vmatprep.mubr.f32.mxu0 0.0
      %2685 = vmatmul.mubr.f32.gmra.mrb[0].mxu0 %v2466
      %v2686 = vpop.f32.mrb[0].mxu0
      %v2687 = vadd.f32 0.0, %v2686
      %v2688 = vpop.f32.mrb[0].mxu0
      %2689 = vmatprep.mubr.f32.mxu0 0.0
      %2690 = vmatmul.mubr.f32.gmra.mrb[0].mxu0 %v2468
      %v2691 = vpop.f32.mrb[0].mxu0
      %v2692 = vadd.f32 0.0, %v2691
      %v2693 = vpop.f32.mrb[0].mxu0
      %2694 = vdwg.mxu0
      %v2695 = vadd.f32 %v2426, %v2537
      %v2696 = vadd.f32 %v2427, %v2542
      %v2697 = vadd.f32 %v2428, %v2547
      %v2698 = vadd.f32 %v2429, %v2552
      %v2699 = vadd.f32 %v2430, %v2557
      %v2700 = vadd.f32 %v2431, %v2562
      %v2701 = vadd.f32 %v2432, %v2567
      %v2702 = vadd.f32 %v2433, %v2572
      %v2703 = vadd.f32 %v2434, %v2577
      %v2704 = vadd.f32 %v2435, %v2582
      %v2705 = vadd.f32 %v2436, %v2587
      %v2706 = vadd.f32 %v2437, %v2592
      %v2707 = vadd.f32 %v2438, %v2597
      %v2708 = vadd.f32 %v2439, %v2602
      %v2709 = vadd.f32 %v2440, %v2607
      %v2710 = vadd.f32 %v2441, %v2612
      %v2711 = vadd.f32 %v2442, %v2617
      %v2712 = vadd.f32 %v2443, %v2622
      %v2713 = vadd.f32 %v2444, %v2627
      %v2714 = vadd.f32 %v2445, %v2632
      %v2715 = vadd.f32 %v2446, %v2637
      %v2716 = vadd.f32 %v2447, %v2642
      %v2717 = vadd.f32 %v2448, %v2647
      %v2718 = vadd.f32 %v2449, %v2652
      %v2719 = vadd.f32 %v2450, %v2657
      %v2720 = vadd.f32 %v2451, %v2662
      %v2721 = vadd.f32 %v2452, %v2667
      %v2722 = vadd.f32 %v2453, %v2672
      %v2723 = vadd.f32 %v2454, %v2677
      %v2724 = vadd.f32 %v2455, %v2682
      %v2725 = vadd.f32 %v2456, %v2687
      %v2726 = vadd.f32 %v2457, %v2692
      %v2727 = vrot.slane %v273, 2
      %v2728 = vrot.slane %v274, 2
      %v2729 = vsel %vm987, %v2727, %v2728
      %v2730 = vrot.slane %v275, 2
      %v2731 = vsel %vm987, %v2728, %v2730
      %s2732 = scalar_lea.vmem %s210, 64
      %v2733 = vld [vmem:[%s2732] sm:$0xff]
      %v2734 = vsel %vm408, %v2729, 0
      %v2736 = vsel %vm408, %v2731, 0
      %2738 = vmatprep.subr.mxu0 0.0
      %2739 = vmatpush1.msra.mxu0 %v2733
      %2740 = vmatprep.subr.mxu0 0.0
      %2741 = vmatpush1.msra.mxu0 0.0
      %2742 = vmatprep.subr.mxu0 0.0
      %2743 = vmatpush1.msra.mxu0 0.0
      %2744 = vmatprep.subr.mxu0 0.0
      %2745 = vmatpush1.msra.mxu0 0.0
      %2746 = vmatprep.subr.mxu0 0.0
      %2747 = vmatpush1.msra.mxu0 0.0
      %2748 = vmatprep.subr.mxu0 0.0
      %2749 = vmatpush1.msra.mxu0 0.0
      %2750 = vmatprep.subr.mxu0 0.0
      %2751 = vmatpush1.msra.mxu0 0.0
      %2752 = vmatprep.subr.mxu0 0.0
      %2753 = vmatpush1.msra.mxu0 0.0
      %2754 = vmatprep.subr.mxu0 0.0
      %2755 = vmatpush1.msra.mxu0 0.0
      %2756 = vmatprep.subr.mxu0 0.0
      %2757 = vmatpush1.msra.mxu0 0.0
      %2758 = vmatprep.subr.mxu0 0.0
      %2759 = vmatpush1.msra.mxu0 0.0
      %2760 = vmatprep.subr.mxu0 0.0
      %2761 = vmatpush1.msra.mxu0 0.0
      %2762 = vmatprep.subr.mxu0 0.0
      %2763 = vmatpush1.msra.mxu0 0.0
      %2764 = vmatprep.subr.mxu0 0.0
      %2765 = vmatpush1.msra.mxu0 0.0
      %2766 = vmatprep.subr.mxu0 0.0
      %2767 = vmatpush1.msra.mxu0 0.0
      %2768 = vmatprep.subr.mxu0 0.0
      %2769 = vmatpush1.msra.mxu0 0.0
      %2770 = vmatprep.subr.mxu0 0.0
      %2771 = vmatpush1.msra.mxu0 0.0
      %2772 = vmatprep.subr.mxu0 0.0
      %2773 = vmatpush1.msra.mxu0 0.0
      %2774 = vmatprep.subr.mxu0 0.0
      %2775 = vmatpush1.msra.mxu0 0.0
      %2776 = vmatprep.subr.mxu0 0.0
      %2777 = vmatpush1.msra.mxu0 0.0
      %2778 = vmatprep.subr.mxu0 0.0
      %2779 = vmatpush1.msra.mxu0 0.0
      %2780 = vmatprep.subr.mxu0 0.0
      %2781 = vmatpush1.msra.mxu0 0.0
      %2782 = vmatprep.subr.mxu0 0.0
      %2783 = vmatpush1.msra.mxu0 0.0
      %2784 = vmatprep.subr.mxu0 0.0
      %2785 = vmatpush1.msra.mxu0 0.0
      %2786 = vmatprep.subr.mxu0 0.0
      %2787 = vmatpush1.msra.mxu0 0.0
      %2788 = vmatprep.subr.mxu0 0.0
      %2789 = vmatpush1.msra.mxu0 0.0
      %2790 = vmatprep.subr.mxu0 0.0
      %2791 = vmatpush1.msra.mxu0 0.0
      %2792 = vmatprep.subr.mxu0 0.0
      %2793 = vmatpush1.msra.mxu0 0.0
      %2794 = vmatprep.subr.mxu0 0.0
      %2795 = vmatpush1.msra.mxu0 0.0
      %2796 = vmatprep.subr.mxu0 0.0
      %2797 = vmatpush1.msra.mxu0 0.0
      %2798 = vmatprep.subr.mxu0 0.0
      %2799 = vmatpush1.msra.mxu0 0.0
      %2800 = vmatprep.subr.mxu0 0.0
      %2801 = vmatpush1.msra.mxu0 0.0
      %2802 = vmatprep.mubr.f32.mxu0 0.0
      %2803 = vmatmul.mubr.f32.gmra.mrb[0].mxu0 %v1078
      %v2804 = vpop.f32.mrb[0].mxu0
      %v2805 = vadd.f32 0.0, %v2804
      %v2806 = vpop.f32.mrb[0].mxu0
      %2807 = vmatprep.mubr.f32.mxu0 0.0
      %2808 = vmatmul.mubr.f32.gmra.mrb[0].mxu0 %v1080
      %v2809 = vpop.f32.mrb[0].mxu0
      %v2810 = vadd.f32 0.0, %v2809
      %v2811 = vpop.f32.mrb[0].mxu0
      %2812 = vmatprep.mubr.f32.mxu0 0.0
      %2813 = vmatmul.mubr.f32.gmra.mrb[0].mxu0 %v1082
      %v2814 = vpop.f32.mrb[0].mxu0
      %v2815 = vadd.f32 0.0, %v2814
      %v2816 = vpop.f32.mrb[0].mxu0
      %2817 = vmatprep.mubr.f32.mxu0 0.0
      %2818 = vmatmul.mubr.f32.gmra.mrb[0].mxu0 %v1084
      %v2819 = vpop.f32.mrb[0].mxu0
      %v2820 = vadd.f32 0.0, %v2819
      %v2821 = vpop.f32.mrb[0].mxu0
      %2822 = vmatprep.mubr.f32.mxu0 0.0
      %2823 = vmatmul.mubr.f32.gmra.mrb[0].mxu0 %v1086
      %v2824 = vpop.f32.mrb[0].mxu0
      %v2825 = vadd.f32 0.0, %v2824
      %v2826 = vpop.f32.mrb[0].mxu0
      %2827 = vmatprep.mubr.f32.mxu0 0.0
      %2828 = vmatmul.mubr.f32.gmra.mrb[0].mxu0 %v1088
      %v2829 = vpop.f32.mrb[0].mxu0
      %v2830 = vadd.f32 0.0, %v2829
      %v2831 = vpop.f32.mrb[0].mxu0
      %2832 = vmatprep.mubr.f32.mxu0 0.0
      %2833 = vmatmul.mubr.f32.gmra.mrb[0].mxu0 %v1090
      %v2834 = vpop.f32.mrb[0].mxu0
      %v2835 = vadd.f32 0.0, %v2834
      %v2836 = vpop.f32.mrb[0].mxu0
      %2837 = vmatprep.mubr.f32.mxu0 0.0
      %2838 = vmatmul.mubr.f32.gmra.mrb[0].mxu0 %v1092
      %v2839 = vpop.f32.mrb[0].mxu0
      %v2840 = vadd.f32 0.0, %v2839
      %v2841 = vpop.f32.mrb[0].mxu0
      %2842 = vmatprep.mubr.f32.mxu0 0.0
      %2843 = vmatmul.mubr.f32.gmra.mrb[0].mxu0 %v1094
      %v2844 = vpop.f32.mrb[0].mxu0
      %v2845 = vadd.f32 0.0, %v2844
      %v2846 = vpop.f32.mrb[0].mxu0
      %2847 = vmatprep.mubr.f32.mxu0 0.0
      %2848 = vmatmul.mubr.f32.gmra.mrb[0].mxu0 %v1096
      %v2849 = vpop.f32.mrb[0].mxu0
      %v2850 = vadd.f32 0.0, %v2849
      %v2851 = vpop.f32.mrb[0].mxu0
      %2852 = vmatprep.mubr.f32.mxu0 0.0
      %2853 = vmatmul.mubr.f32.gmra.mrb[0].mxu0 %v1098
      %v2854 = vpop.f32.mrb[0].mxu0
      %v2855 = vadd.f32 0.0, %v2854
      %v2856 = vpop.f32.mrb[0].mxu0
      %2857 = vmatprep.mubr.f32.mxu0 0.0
      %2858 = vmatmul.mubr.f32.gmra.mrb[0].mxu0 %v1100
      %v2859 = vpop.f32.mrb[0].mxu0
      %v2860 = vadd.f32 0.0, %v2859
      %v2861 = vpop.f32.mrb[0].mxu0
      %2862 = vmatprep.mubr.f32.mxu0 0.0
      %2863 = vmatmul.mubr.f32.gmra.mrb[0].mxu0 %v1102
      %v2864 = vpop.f32.mrb[0].mxu0
      %v2865 = vadd.f32 0.0, %v2864
      %v2866 = vpop.f32.mrb[0].mxu0
      %2867 = vmatprep.mubr.f32.mxu0 0.0
      %2868 = vmatmul.mubr.f32.gmra.mrb[0].mxu0 %v1104
      %v2869 = vpop.f32.mrb[0].mxu0
      %v2870 = vadd.f32 0.0, %v2869
      %v2871 = vpop.f32.mrb[0].mxu0
      %2872 = vmatprep.mubr.f32.mxu0 0.0
      %2873 = vmatmul.mubr.f32.gmra.mrb[0].mxu0 %v1106
      %v2874 = vpop.f32.mrb[0].mxu0
      %v2875 = vadd.f32 0.0, %v2874
      %v2876 = vpop.f32.mrb[0].mxu0
      %2877 = vmatprep.mubr.f32.mxu0 0.0
      %2878 = vmatmul.mubr.f32.gmra.mrb[0].mxu0 %v1108
      %v2879 = vpop.f32.mrb[0].mxu0
      %v2880 = vadd.f32 0.0, %v2879
      %v2881 = vpop.f32.mrb[0].mxu0
      %2882 = vmatprep.mubr.f32.mxu0 0.0
      %2883 = vmatmul.mubr.f32.gmra.mrb[0].mxu0 %v1110
      %v2884 = vpop.f32.mrb[0].mxu0
      %v2885 = vadd.f32 0.0, %v2884
      %v2886 = vpop.f32.mrb[0].mxu0
      %2887 = vmatprep.mubr.f32.mxu0 0.0
      %2888 = vmatmul.mubr.f32.gmra.mrb[0].mxu0 %v1112
      %v2889 = vpop.f32.mrb[0].mxu0
      %v2890 = vadd.f32 0.0, %v2889
      %v2891 = vpop.f32.mrb[0].mxu0
      %2892 = vmatprep.mubr.f32.mxu0 0.0
      %2893 = vmatmul.mubr.f32.gmra.mrb[0].mxu0 %v1114
      %v2894 = vpop.f32.mrb[0].mxu0
      %v2895 = vadd.f32 0.0, %v2894
      %v2896 = vpop.f32.mrb[0].mxu0
      %2897 = vmatprep.mubr.f32.mxu0 0.0
      %2898 = vmatmul.mubr.f32.gmra.mrb[0].mxu0 %v1116
      %v2899 = vpop.f32.mrb[0].mxu0
      %v2900 = vadd.f32 0.0, %v2899
      %v2901 = vpop.f32.mrb[0].mxu0
      %2902 = vmatprep.mubr.f32.mxu0 0.0
      %2903 = vmatmul.mubr.f32.gmra.mrb[0].mxu0 %v1118
      %v2904 = vpop.f32.mrb[0].mxu0
      %v2905 = vadd.f32 0.0, %v2904
      %v2906 = vpop.f32.mrb[0].mxu0
      %2907 = vmatprep.mubr.f32.mxu0 0.0
      %2908 = vmatmul.mubr.f32.gmra.mrb[0].mxu0 %v1120
      %v2909 = vpop.f32.mrb[0].mxu0
      %v2910 = vadd.f32 0.0, %v2909
      %v2911 = vpop.f32.mrb[0].mxu0
      %2912 = vmatprep.mubr.f32.mxu0 0.0
      %2913 = vmatmul.mubr.f32.gmra.mrb[0].mxu0 %v1122
      %v2914 = vpop.f32.mrb[0].mxu0
      %v2915 = vadd.f32 0.0, %v2914
      %v2916 = vpop.f32.mrb[0].mxu0
      %2917 = vmatprep.mubr.f32.mxu0 0.0
      %2918 = vmatmul.mubr.f32.gmra.mrb[0].mxu0 %v1124
      %v2919 = vpop.f32.mrb[0].mxu0
      %v2920 = vadd.f32 0.0, %v2919
      %v2921 = vpop.f32.mrb[0].mxu0
      %2922 = vmatprep.mubr.f32.mxu0 0.0
      %2923 = vmatmul.mubr.f32.gmra.mrb[0].mxu0 %v1126
      %v2924 = vpop.f32.mrb[0].mxu0
      %v2925 = vadd.f32 0.0, %v2924
      %v2926 = vpop.f32.mrb[0].mxu0
      %2927 = vmatprep.mubr.f32.mxu0 0.0
      %2928 = vmatmul.mubr.f32.gmra.mrb[0].mxu0 %v1128
      %v2929 = vpop.f32.mrb[0].mxu0
      %v2930 = vadd.f32 0.0, %v2929
      %v2931 = vpop.f32.mrb[0].mxu0
      %2932 = vmatprep.mubr.f32.mxu0 0.0
      %2933 = vmatmul.mubr.f32.gmra.mrb[0].mxu0 %v1130
      %v2934 = vpop.f32.mrb[0].mxu0
      %v2935 = vadd.f32 0.0, %v2934
      %v2936 = vpop.f32.mrb[0].mxu0
      %2937 = vmatprep.mubr.f32.mxu0 0.0
      %2938 = vmatmul.mubr.f32.gmra.mrb[0].mxu0 %v1132
      %v2939 = vpop.f32.mrb[0].mxu0
      %v2940 = vadd.f32 0.0, %v2939
      %v2941 = vpop.f32.mrb[0].mxu0
      %2942 = vmatprep.mubr.f32.mxu0 0.0
      %2943 = vmatmul.mubr.f32.gmra.mrb[0].mxu0 %v1932
      %v2944 = vpop.f32.mrb[0].mxu0
      %v2945 = vadd.f32 0.0, %v2944
      %v2946 = vpop.f32.mrb[0].mxu0
      %2947 = vmatprep.mubr.f32.mxu0 0.0
      %2948 = vmatmul.mubr.f32.gmra.mrb[0].mxu0 %v1934
      %v2949 = vpop.f32.mrb[0].mxu0
      %v2950 = vadd.f32 0.0, %v2949
      %v2951 = vpop.f32.mrb[0].mxu0
      %2952 = vmatprep.mubr.f32.mxu0 0.0
      %2953 = vmatmul.mubr.f32.gmra.mrb[0].mxu0 %v2734
      %v2954 = vpop.f32.mrb[0].mxu0
      %v2955 = vadd.f32 0.0, %v2954
      %v2956 = vpop.f32.mrb[0].mxu0
      %2957 = vmatprep.mubr.f32.mxu0 0.0
      %2958 = vmatmul.mubr.f32.gmra.mrb[0].mxu0 %v2736
      %v2959 = vpop.f32.mrb[0].mxu0
      %v2960 = vadd.f32 0.0, %v2959
      %v2961 = vpop.f32.mrb[0].mxu0
      %2962 = vdwg.mxu0
      %v2963 = vadd.f32 %v2695, %v2805
      %v2964 = vadd.f32 %v2696, %v2810
      %v2965 = vadd.f32 %v2697, %v2815
      %v2966 = vadd.f32 %v2698, %v2820
      %v2967 = vadd.f32 %v2699, %v2825
      %v2968 = vadd.f32 %v2700, %v2830
      %v2969 = vadd.f32 %v2701, %v2835
      %v2970 = vadd.f32 %v2702, %v2840
      %v2971 = vadd.f32 %v2703, %v2845
      %v2972 = vadd.f32 %v2704, %v2850
      %v2973 = vadd.f32 %v2705, %v2855
      %v2974 = vadd.f32 %v2706, %v2860
      %v2975 = vadd.f32 %v2707, %v2865
      %v2976 = vadd.f32 %v2708, %v2870
      %v2977 = vadd.f32 %v2709, %v2875
      %v2978 = vadd.f32 %v2710, %v2880
      %v2979 = vadd.f32 %v2711, %v2885
      %v2980 = vadd.f32 %v2712, %v2890
      %v2981 = vadd.f32 %v2713, %v2895
      %v2982 = vadd.f32 %v2714, %v2900
      %v2983 = vadd.f32 %v2715, %v2905
      %v2984 = vadd.f32 %v2716, %v2910
      %v2985 = vadd.f32 %v2717, %v2915
      %v2986 = vadd.f32 %v2718, %v2920
      %v2987 = vadd.f32 %v2719, %v2925
      %v2988 = vadd.f32 %v2720, %v2930
      %v2989 = vadd.f32 %v2721, %v2935
      %v2990 = vadd.f32 %v2722, %v2940
      %v2991 = vadd.f32 %v2723, %v2945
      %v2992 = vadd.f32 %v2724, %v2950
      %v2993 = vadd.f32 %v2725, %v2955
      %v2994 = vadd.f32 %v2726, %v2960
      %v2995 = vld [vmem:[%s213] sm:$0x1]
      %v2997 = vlaneseq
      %v2998 = vshrl.u32 %v2997, 7
      %v2999 = vsub.s32 0, %v2998
      %v3000 = vrot.slane %v2995, %v2999
      %v3002 = vadd.f32 %v2963, %v3000
      %v3003 = vadd.f32 %v2964, %v3000
      %v3004 = vadd.f32 %v2965, %v3000
      %v3005 = vadd.f32 %v2966, %v3000
      %v3006 = vadd.f32 %v2967, %v3000
      %v3007 = vadd.f32 %v2968, %v3000
      %v3008 = vadd.f32 %v2969, %v3000
      %v3009 = vadd.f32 %v2970, %v3000
      %v3010 = vadd.f32 %v2971, %v3000
      %v3011 = vadd.f32 %v2972, %v3000
      %v3012 = vadd.f32 %v2973, %v3000
      %v3013 = vadd.f32 %v2974, %v3000
      %v3014 = vadd.f32 %v2975, %v3000
      %v3015 = vadd.f32 %v2976, %v3000
      %v3016 = vadd.f32 %v2977, %v3000
      %v3017 = vadd.f32 %v2978, %v3000
      %v3018 = vadd.f32 %v2979, %v3000
      %v3019 = vadd.f32 %v2980, %v3000
      %v3020 = vadd.f32 %v2981, %v3000
      %v3021 = vadd.f32 %v2982, %v3000
      %v3022 = vadd.f32 %v2983, %v3000
      %v3023 = vadd.f32 %v2984, %v3000
      %v3024 = vadd.f32 %v2985, %v3000
      %v3025 = vadd.f32 %v2986, %v3000
      %v3026 = vadd.f32 %v2987, %v3000
      %v3027 = vadd.f32 %v2988, %v3000
      %v3028 = vadd.f32 %v2989, %v3000
      %v3029 = vadd.f32 %v2990, %v3000
      %v3030 = vadd.f32 %v2991, %v3000
      %v3031 = vadd.f32 %v2992, %v3000
      %v3032 = vadd.f32 %v2993, %v3000
      %v3033 = vadd.f32 %v2994, %v3000
      %v3034 = vmax.f32 %v3002, 0.0
      %v3035 = vmax.f32 %v3003, 0.0
      %v3036 = vmax.f32 %v3004, 0.0
      %v3037 = vmax.f32 %v3005, 0.0
      %v3038 = vmax.f32 %v3006, 0.0
      %v3039 = vmax.f32 %v3007, 0.0
      %v3040 = vmax.f32 %v3008, 0.0
      %v3041 = vmax.f32 %v3009, 0.0
      %v3042 = vmax.f32 %v3010, 0.0
      %v3043 = vmax.f32 %v3011, 0.0
      %v3044 = vmax.f32 %v3012, 0.0
      %v3045 = vmax.f32 %v3013, 0.0
      %v3046 = vmax.f32 %v3014, 0.0
      %v3047 = vmax.f32 %v3015, 0.0
      %v3048 = vmax.f32 %v3016, 0.0
      %v3049 = vmax.f32 %v3017, 0.0
      %v3050 = vmax.f32 %v3018, 0.0
      %v3051 = vmax.f32 %v3019, 0.0
      %v3052 = vmax.f32 %v3020, 0.0
      %v3053 = vmax.f32 %v3021, 0.0
      %v3054 = vmax.f32 %v3022, 0.0
      %v3055 = vmax.f32 %v3023, 0.0
      %v3056 = vmax.f32 %v3024, 0.0
      %v3057 = vmax.f32 %v3025, 0.0
      %v3058 = vmax.f32 %v3026, 0.0
      %v3059 = vmax.f32 %v3027, 0.0
      %v3060 = vmax.f32 %v3028, 0.0
      %v3061 = vmax.f32 %v3029, 0.0
      %v3062 = vmax.f32 %v3030, 0.0
      %v3063 = vmax.f32 %v3031, 0.0
      %v3064 = vmax.f32 %v3032, 0.0
      %v3065 = vmax.f32 %v3033, 0.0
      %3066 = vst.msk [vmem:[%s221] sm:$0xff] %vm408, %v3034
      %3067 = vst.msk [vmem:[%s221 + $0x8] sm:$0xff] %vm408, %v3035
      %3068 = vst.msk [vmem:[%s221 + $0x10] sm:$0xff] %vm408, %v3036
      %3069 = vst.msk [vmem:[%s221 + $0x18] sm:$0xff] %vm408, %v3037
      %3070 = vst.msk [vmem:[%s221 + $0x20] sm:$0xff] %vm408, %v3038
      %3071 = vst.msk [vmem:[%s221 + $0x28] sm:$0xff] %vm408, %v3039
      %3072 = vst.msk [vmem:[%s221 + $0x30] sm:$0xff] %vm408, %v3040
      %3073 = vst.msk [vmem:[%s221 + $0x38] sm:$0xff] %vm408, %v3041
      %3074 = vst.msk [vmem:[%s221 + $0x40] sm:$0xff] %vm408, %v3042
      %3075 = vst.msk [vmem:[%s221 + $0x48] sm:$0xff] %vm408, %v3043
      %3076 = vst.msk [vmem:[%s221 + $0x50] sm:$0xff] %vm408, %v3044
      %3077 = vst.msk [vmem:[%s221 + $0x58] sm:$0xff] %vm408, %v3045
      %3078 = vst.msk [vmem:[%s221 + $0x60] sm:$0xff] %vm408, %v3046
      %3079 = vst.msk [vmem:[%s221 + $0x68] sm:$0xff] %vm408, %v3047
      %3080 = vst.msk [vmem:[%s221 + $0x70] sm:$0xff] %vm408, %v3048
      %3081 = vst.msk [vmem:[%s221 + $0x78] sm:$0xff] %vm408, %v3049
      %3082 = vst.msk [vmem:[%s221 + $0x80] sm:$0xff] %vm408, %v3050
      %3083 = vst.msk [vmem:[%s221 + $0x88] sm:$0xff] %vm408, %v3051
      %3084 = vst.msk [vmem:[%s221 + $0x90] sm:$0xff] %vm408, %v3052
      %3085 = vst.msk [vmem:[%s221 + $0x98] sm:$0xff] %vm408, %v3053
      %3086 = vst.msk [vmem:[%s221 + $0xa0] sm:$0xff] %vm408, %v3054
      %3087 = vst.msk [vmem:[%s221 + $0xa8] sm:$0xff] %vm408, %v3055
      %3088 = vst.msk [vmem:[%s221 + $0xb0] sm:$0xff] %vm408, %v3056
      %3089 = vst.msk [vmem:[%s221 + $0xb8] sm:$0xff] %vm408, %v3057
      %3090 = vst.msk [vmem:[%s221 + $0xc0] sm:$0xff] %vm408, %v3058
      %3091 = vst.msk [vmem:[%s221 + $0xc8] sm:$0xff] %vm408, %v3059
      %3092 = vst.msk [vmem:[%s221 + $0xd0] sm:$0xff] %vm408, %v3060
      %3093 = vst.msk [vmem:[%s221 + $0xd8] sm:$0xff] %vm408, %v3061
      %3094 = vst.msk [vmem:[%s221 + $0xe0] sm:$0xff] %vm408, %v3062
      %3095 = vst.msk [vmem:[%s221 + $0xe8] sm:$0xff] %vm408, %v3063
      %3096 = vst.msk [vmem:[%s221 + $0xf0] sm:$0xff] %vm408, %v3064
      %3097 = vst.msk [vmem:[%s221 + $0xf8] sm:$0xff] %vm408, %v3065
      %p3098 = scmp.lt.s32.totalorder %s18, 1
      %s3099 = scalar_select %p3098, %s18, 1
      %p3100 = scmp.lt.s32.totalorder %s19, 0
      %s3101 = scalar_select %p3100, %s19, 0
      %s3102 = smul.addr %s3099, 32
      %s3103 = sadd.s32 %s3101, %s3102
      %s3104 = smul.addr %s3103, 8
      %s3105 = scalar_lea.vmem %s3, %s3104
      // Predicated region
      $region33: #{basic_conv2d.1} parent=31 // pred_check
        %p3106 = pneg %p124
      $region34: #{basic_conv2d.1} parent=31 // pred_check_branch
        %3108 = sbr.rel (%p3106) target = $region36
      $region35: #{basic_conv2d.1} parent=31 // pred_region
        _
      $region36: #{basic_conv2d.1} parent=31 // pred_fallthru
        _
    $region32: #{basic_conv2d.1} parent=5 // pred_fallthru
      _
    %p3109 = scmp.le.s32.totalorder 2, %s9
    // Predicated region
    $region37: #{basic_conv2d.1} parent=5 // pred_check
      %p3110 = pneg %p3109
    $region38: #{basic_conv2d.1} parent=5 // pred_check_branch
      %3112 = sbr.rel (%p3110) target = $region40
    $region39: #{basic_conv2d.1} parent=5 // pred_region
      %s3113 = ssub.s32 %s9, 2
      // Predicated region
      $region41: #{basic_conv2d.1} parent=39 // pred_check
        %p3114 = pneg %p130
      $region42: #{basic_conv2d.1} parent=39 // pred_check_branch
        %3116 = sbr.rel (%p3114) target = $region44
      $region43: #{basic_conv2d.1} parent=39 // pred_region
        %p3117 = scmp.lt.s32.totalorder %s20, 1
        %s3118 = scalar_select %p3117, %s20, 1
        %p3119 = scmp.lt.s32.totalorder %s21, 0
        %s3120 = scalar_select %p3119, %s21, 0
        %s3121 = smul.addr %s3118, 32
        %s3122 = sadd.s32 %s3120, %s3121
        %s3123 = smul.addr %s3122, 8
        %s3124 = scalar_lea.vmem %s3, %s3123
      $region44: #{basic_conv2d.1} parent=39 // pred_fallthru
        _
    $region40: #{basic_conv2d.1} parent=5 // pred_fallthru
      _
  $region6: #{basic_conv2d.1} parent=0 // loop_footer
    %s13 = sadd.s32 1, %s9
  $region7: #{basic_conv2d.1} parent=0 // loop_footer_branch
    %8 = sbr.rel target = $region3
  $region8: #{basic_conv2d.1} parent=0 // loop_exit
    _

</llo_original>
